<compile_context>
chip_gen: v5e
topology: v5e:2x2
jax: 0.10.0
libtpu: 0.0.40
codegen_flags: <defaults>
</compile_context>

<pallas_src>
import functools

import jax
import jax.numpy as jnp
from jax.experimental import pallas as pl
from jax.experimental.pallas import tpu as pltpu


def _round_up(n, m):
    return ((n + m - 1) // m) * m


def _pick_batch_tile(B, D):
    """Batch tile: big enough to amortize per-grid-step overhead, small enough
    that 2 double-buffered bf16 x tiles (+ <0.5 MiB resident weights) stay far
    below the v7x scoped-VMEM budget.  Always a multiple of 256 (MXU feed) and
    of 16 (bf16 sublane pack)."""
    tb = 1024
    while tb > 256 and 2 * tb * D * 2 > 4 * 1024 * 1024:  # 2 bufs * tb * D * bf16
        tb //= 2
    # Don't pick a tile (much) larger than the padded batch itself.
    return min(tb, max(256, _round_up(B, 256)))


def _affinity_mlp_kernel(x_ref, w1_ref, b1_ref, w2_ref, b2_ref, w3_ref, b3_ref,
                         o_ref):
    # Layer 1: [tb, D](bf16) @ [D, 256](bf16) on the MXU, f32 accumulation.
    h1 = jnp.dot(x_ref[...], w1_ref[...], preferred_element_type=jnp.float32)
    h1 = jnp.maximum(h1 + b1_ref[...], 0.0)
    # Layer 2: [tb, 256](bf16) @ [256, 64](bf16) on the MXU, f32 accumulation.
    h2 = jnp.dot(h1.astype(jnp.bfloat16), w2_ref[...],
                 preferred_element_type=jnp.float32)
    h2 = jnp.maximum(h2 + b2_ref[...], 0.0)
    # Layer 3 (out_features == 1): an N=1 MXU matmul wastes almost all output
    # lanes, so do it as a VPU broadcast-multiply + XLU lane reduction (f32).
    logits = jnp.sum(h2 * w3_ref[...], axis=-1, keepdims=True) + b3_ref[...]
    o_ref[...] = jax.nn.sigmoid(logits).astype(o_ref.dtype)


@functools.partial(jax.jit, static_argnames=("batch_tile",))
def affinity_mlp(x, w1, b1, w2, b2, w3, b3, *, batch_tile=None):
    B, D = x.shape
    H1 = w1.shape[1]   # 256
    H2 = w2.shape[1]   # 64

    tb = batch_tile if batch_tile is not None else _pick_batch_tile(B, D)
    # (8,128)/bf16-pack constraint on the x tile's sublane dim.
    assert tb % 16 == 0, "batch tile must be a multiple of 16 (bf16 sublanes)"

    # Pad batch to a tile multiple (padded rows are sliced off at the end).
    B_pad = pl.cdiv(B, tb) * tb
    if B_pad != B:
        x = jnp.pad(x, ((0, B_pad - B), (0, 0)))

    # bf16 MXU inputs, f32 everywhere else.
    x_bf = x.astype(jnp.bfloat16)
    w1_bf = w1.astype(jnp.bfloat16)
    w2_bf = w2.astype(jnp.bfloat16)
    b1_f = b1.astype(jnp.float32)
    b2_f = b2.astype(jnp.float32)
    w3_row = w3.reshape(1, H2).astype(jnp.float32)   # (64,1) -> (1,64) for VPU
    b3_f = b3.astype(jnp.float32)                    # (1,1)

    grid = (B_pad // tb,)
    out = pl.pallas_call(
        _affinity_mlp_kernel,
        out_shape=jax.ShapeDtypeStruct((B_pad, 1), jnp.float32),
        grid_spec=pltpu.PrefetchScalarGridSpec(
            num_scalar_prefetch=0,
            grid=grid,
            in_specs=[
                pl.BlockSpec((tb, D), lambda i: (i, 0)),     # x tile (streamed)
                pl.BlockSpec((D, H1), lambda i: (0, 0)),     # W1 (resident)
                pl.BlockSpec((1, H1), lambda i: (0, 0)),     # b1
                pl.BlockSpec((H1, H2), lambda i: (0, 0)),    # W2
                pl.BlockSpec((1, H2), lambda i: (0, 0)),     # b2
                pl.BlockSpec((1, H2), lambda i: (0, 0)),     # w3 as a row
                pl.BlockSpec((1, 1), lambda i: (0, 0)),      # b3
            ],
            out_specs=pl.BlockSpec((tb, 1), lambda i: (i, 0)),
        ),
        compiler_params=pltpu.CompilerParams(
            dimension_semantics=("parallel",),
            vmem_limit_bytes=32 * 1024 * 1024,
        ),
    )(x_bf, w1_bf, b1_f, w2_bf, b2_f, w3_row, b3_f)
    return out[:B]


def init_params(key, input_dim):
    """Deterministic synthetic init matching PyTorch Linear shapes.
    Weights are stored transposed: (in, out)."""
    d_in = input_dim * 4
    dims = [(d_in, 256), (256, 64), (64, 1)]
    params = []
    for fi, fo in dims:
        key, kw, kb = jax.random.split(key, 3)
        bound = 1.0 / jnp.sqrt(fi)
        w = jax.random.uniform(kw, (fi, fo), jnp.float32, -bound, bound)
        b = jax.random.uniform(kb, (1, fo), jnp.float32, -bound, bound)
        params += [w, b]
    return params


def reference(x, w1, b1, w2, b2, w3, b3):
    h1 = jnp.maximum(x @ w1 + b1, 0.0)
    h2 = jnp.maximum(h1 @ w2 + b2, 0.0)
    return jax.nn.sigmoid(h2 @ w3 + b3)


if __name__ == "__main__":
    key = jax.random.PRNGKey(0)
    input_dim = 32                      # feature dim = 4 * 32 = 128
    batch = 2000                        # not a tile multiple -> exercises padding

    key, kx = jax.random.split(key)
    x = jax.random.normal(kx, (batch, input_dim * 4), jnp.float32)
    w1, b1, w2, b2, w3, b3 = init_params(key, input_dim)

    out = affinity_mlp(x, w1, b1, w2, b2, w3, b3)
    out = jax.block_until_ready(out)

    ref = reference(x, w1, b1, w2, b2, w3, b3)
    assert out.shape == (batch, 1)
    # bf16 matmul inputs (f32 accumulation) -> relaxed tolerance vs f32 ref.
    assert jnp.allclose(out, ref, atol=2e-2, rtol=2e-2), float(
        jnp.max(jnp.abs(out - ref)))
    print("KERNEL_OK")
</pallas_src>

<mosaic_0001>
module attributes {stable_mosaic.version = 11 : i64} {
  func.func @_affinity_mlp_kernel(%arg0: i32, %arg1: memref<1024x128xbf16, #tpu.memory_space<vmem>>, %arg2: memref<128x256xbf16, #tpu.memory_space<vmem>>, %arg3: memref<1x256xf32, #tpu.memory_space<vmem>>, %arg4: memref<256x64xbf16, #tpu.memory_space<vmem>>, %arg5: memref<1x64xf32, #tpu.memory_space<vmem>>, %arg6: memref<1x64xf32, #tpu.memory_space<vmem>>, %arg7: memref<1x1xf32, #tpu.memory_space<vmem>>, %arg8: memref<1024x1xf32, #tpu.memory_space<vmem>>) attributes {dimension_semantics = [#tpu.dimension_semantics<parallel>], iteration_bounds = array<i64: 2>, scalar_prefetch = 0 : i64, scratch_operands = 0 : i64, tpu.core_type = #tpu.core_type<tc>, window_params = [{transform_indices = @transform_0, window_bounds = array<i64: 1024, 128>}, {pipeline_mode = #tpu.pipeline_mode<synchronous>, transform_indices = @transform_1, window_bounds = array<i64: 128, 256>}, {pipeline_mode = #tpu.pipeline_mode<synchronous>, transform_indices = @transform_2, window_bounds = array<i64: 1, 256>}, {pipeline_mode = #tpu.pipeline_mode<synchronous>, transform_indices = @transform_3, window_bounds = array<i64: 256, 64>}, {pipeline_mode = #tpu.pipeline_mode<synchronous>, transform_indices = @transform_4, window_bounds = array<i64: 1, 64>}, {pipeline_mode = #tpu.pipeline_mode<synchronous>, transform_indices = @transform_5, window_bounds = array<i64: 1, 64>}, {pipeline_mode = #tpu.pipeline_mode<synchronous>, transform_indices = @transform_6, window_bounds = array<i64: 1, 1>}, {transform_indices = @transform_7, window_bounds = array<i64: 1024, 1>}]} {
    %c0 = arith.constant 0 : index
    %c0_0 = arith.constant 0 : index
    %0 = vector.load %arg1[%c0, %c0_0] : memref<1024x128xbf16, #tpu.memory_space<vmem>>, vector<1024x128xbf16>
    %c0_1 = arith.constant 0 : index
    %c0_2 = arith.constant 0 : index
    %1 = vector.load %arg2[%c0_1, %c0_2] : memref<128x256xbf16, #tpu.memory_space<vmem>>, vector<128x256xbf16>
    %cst = arith.constant dense<0.000000e+00> : vector<1024x256xf32>
    %2 = tpu.matmul %0, %1, %cst {dimension_numbers = #tpu.dot_dimension_numbers<[1], [0], [0], [1], [0, 0, 1, 1], [], []>} : vector<1024x128xbf16>, vector<128x256xbf16>, vector<1024x256xf32> -> vector<1024x256xf32>
    %c0_3 = arith.constant 0 : index
    %c0_4 = arith.constant 0 : index
    %3 = vector.load %arg3[%c0_3, %c0_4] : memref<1x256xf32, #tpu.memory_space<vmem>>, vector<1x256xf32>
    %4 = vector.broadcast %3 : vector<1x256xf32> to vector<1024x256xf32>
    %5 = arith.addf %2, %4 : vector<1024x256xf32>
    %cst_5 = arith.constant 0.000000e+00 : f32
    %6 = vector.broadcast %cst_5 : f32 to vector<1024x256xf32>
    %7 = arith.maximumf %5, %6 : vector<1024x256xf32>
    %8 = arith.truncf %7 : vector<1024x256xf32> to vector<1024x256xbf16>
    %c0_6 = arith.constant 0 : index
    %c0_7 = arith.constant 0 : index
    %9 = vector.load %arg4[%c0_6, %c0_7] : memref<256x64xbf16, #tpu.memory_space<vmem>>, vector<256x64xbf16>
    %cst_8 = arith.constant dense<0.000000e+00> : vector<1024x64xf32>
    %10 = tpu.matmul %8, %9, %cst_8 {dimension_numbers = #tpu.dot_dimension_numbers<[1], [0], [0], [1], [0, 0, 1, 1], [], []>} : vector<1024x256xbf16>, vector<256x64xbf16>, vector<1024x64xf32> -> vector<1024x64xf32>
    %c0_9 = arith.constant 0 : index
    %c0_10 = arith.constant 0 : index
    %11 = vector.load %arg5[%c0_9, %c0_10] : memref<1x64xf32, #tpu.memory_space<vmem>>, vector<1x64xf32>
    %12 = vector.broadcast %11 : vector<1x64xf32> to vector<1024x64xf32>
    %13 = arith.addf %10, %12 : vector<1024x64xf32>
    %cst_11 = arith.constant 0.000000e+00 : f32
    %14 = vector.broadcast %cst_11 : f32 to vector<1024x64xf32>
    %15 = arith.maximumf %13, %14 : vector<1024x64xf32>
    %c0_12 = arith.constant 0 : index
    %c0_13 = arith.constant 0 : index
    %16 = vector.load %arg6[%c0_12, %c0_13] : memref<1x64xf32, #tpu.memory_space<vmem>>, vector<1x64xf32>
    %17 = vector.broadcast %16 : vector<1x64xf32> to vector<1024x64xf32>
    %18 = arith.mulf %15, %17 : vector<1024x64xf32>
    %cst_14 = arith.constant dense<0.000000e+00> : vector<1024xf32>
    %19 = vector.multi_reduction <add>, %18, %cst_14 [1] : vector<1024x64xf32> to vector<1024xf32>
    %20 = vector.shape_cast %19 : vector<1024xf32> to vector<1024x1xf32>
    %c0_15 = arith.constant 0 : index
    %c0_16 = arith.constant 0 : index
    %21 = vector.load %arg7[%c0_15, %c0_16] : memref<1x1xf32, #tpu.memory_space<vmem>>, vector<1x1xf32>
    %22 = vector.broadcast %21 : vector<1x1xf32> to vector<1024x1xf32>
    %23 = arith.addf %20, %22 : vector<1024x1xf32>
    %24 = arith.negf %23 : vector<1024x1xf32>
    %25 = math.exp %24 : vector<1024x1xf32>
    %cst_17 = arith.constant 1.000000e+00 : f32
    %26 = vector.broadcast %cst_17 : f32 to vector<1024x1xf32>
    %27 = arith.addf %26, %25 : vector<1024x1xf32>
    %28 = arith.divf %26, %27 : vector<1024x1xf32>
    %c0_18 = arith.constant 0 : index
    %c0_19 = arith.constant 0 : index
    %29 = vector.load %arg8[%c0_18, %c0_19] : memref<1024x1xf32, #tpu.memory_space<vmem>>, vector<1024x1xf32>
    tpu.vector_store %arg8[%c0_18, %c0_19], %28 {strides = array<i32>} : memref<1024x1xf32, #tpu.memory_space<vmem>>, vector<1024x1xf32>,
    return
  }
  func.func @transform_0(%arg0: i32) -> (i32, i32) {
    %c0_i32 = arith.constant 0 : i32
    %c0_i32_0 = arith.constant 0 : i32
    return %arg0, %c0_i32 : i32, i32
  }
  func.func @transform_1(%arg0: i32) -> (i32, i32) {
    %c0_i32 = arith.constant 0 : i32
    %c0_i32_0 = arith.constant 0 : i32
    %c0_i32_1 = arith.constant 0 : i32
    return %c0_i32, %c0_i32_0 : i32, i32
  }
  func.func @transform_2(%arg0: i32) -> (i32, i32) {
    %c0_i32 = arith.constant 0 : i32
    %c0_i32_0 = arith.constant 0 : i32
    %c0_i32_1 = arith.constant 0 : i32
    return %c0_i32, %c0_i32_0 : i32, i32
  }
  func.func @transform_3(%arg0: i32) -> (i32, i32) {
    %c0_i32 = arith.constant 0 : i32
    %c0_i32_0 = arith.constant 0 : i32
    %c0_i32_1 = arith.constant 0 : i32
    return %c0_i32, %c0_i32_0 : i32, i32
  }
  func.func @transform_4(%arg0: i32) -> (i32, i32) {
    %c0_i32 = arith.constant 0 : i32
    %c0_i32_0 = arith.constant 0 : i32
    %c0_i32_1 = arith.constant 0 : i32
    return %c0_i32, %c0_i32_0 : i32, i32
  }
  func.func @transform_5(%arg0: i32) -> (i32, i32) {
    %c0_i32 = arith.constant 0 : i32
    %c0_i32_0 = arith.constant 0 : i32
    %c0_i32_1 = arith.constant 0 : i32
    return %c0_i32, %c0_i32_0 : i32, i32
  }
  func.func @transform_6(%arg0: i32) -> (i32, i32) {
    %c0_i32 = arith.constant 0 : i32
    %c0_i32_0 = arith.constant 0 : i32
    %c0_i32_1 = arith.constant 0 : i32
    return %c0_i32, %c0_i32_0 : i32, i32
  }
  func.func @transform_7(%arg0: i32) -> (i32, i32) {
    %c0_i32 = arith.constant 0 : i32
    %c0_i32_0 = arith.constant 0 : i32
    return %arg0, %c0_i32 : i32, i32
  }
}

</mosaic_0001>

<llo_original>
// kernel: affinity_mlp.1
$region0: #{affinity_mlp.1}
  #allocation0 [shape = 'u32[]', space=smem, size = 0x4, offset = 0x4, fixed_abs, tag = 'smem constant byte address 0x4 - core index']
  #allocation1 [shape = 'u32[72,128]{1,0:T(1,128)}', space=vmem, size = 0x9000, scoped, tag = 'internal scratch']
  #allocation2 [shape = 'f32[1,1]{1,0:T(1,128)S(1)}', space=vmem, size = 0x200, scoped, tag = 'scoped memory for affinity_mlp.1']
  %s0 = inlined_call_operand.vmem [shape: bf16[2048,128], index: 0, kind: input, shape index: {}]
  %s1 = inlined_call_operand.vmem [shape: bf16[128,256], index: 1, kind: input, shape index: {}]
  %s2 = inlined_call_operand.vmem [shape: f32[1,256], index: 2, kind: input, shape index: {}]
  %s3 = inlined_call_operand.vmem [shape: bf16[256,64], index: 3, kind: input, shape index: {}]
  %s4 = inlined_call_operand.vmem [shape: f32[1,64], index: 4, kind: input, shape index: {}]
  %s5 = inlined_call_operand.vmem [shape: f32[1,64], index: 5, kind: input, shape index: {}]
  %s6 = inlined_call_operand.<no memory space> [shape: f32[1,1], index: 6, kind: input, shape index: {}]
  %s7 = inlined_call_operand.vmem [shape: f32[2048,1], index: 7, kind: output, shape index: {}]
  %s8 = sld [smem:[#allocation0]]
  $region61: #{affinity_mlp.1} parent=0
    _
  %s10 = ssub.s32 1, %s8
  %s11 = scalar_select 0, %s10, %s8
  %v12 = vstv %s6
  %13 = vst [vmem:[#allocation2] sm:$0x1] %v12
  loop: start=0, step=1, limit=4
  $region2: #{affinity_mlp.1} parent=0 // loop_pre_header
    _
  $region3: #{affinity_mlp.1} parent=0 // loop_header
    %s15 = sphi 0, %s19
    %p16 = scmp.ge.s32.totalorder %s15, 4
    %s25 = sphi 0, %s27
    %s28 = sphi 0, %s25
    %s29 = sphi 0, %s28
    %s45 = sphi 0, %s29
    %s49 = sphi 0, %s49
    %s51 = sphi 0, %s49
    %s52 = sphi 0, %s51
    %s66 = sphi 0, %s52
    %s70 = sphi 0, %s70
    %s72 = sphi 0, %s70
    %s73 = sphi 0, %s72
    %s87 = sphi 0, %s73
    %s91 = sphi 0, %s91
    %s93 = sphi 0, %s91
    %s94 = sphi 0, %s93
    %s108 = sphi 0, %s94
    %s112 = sphi 0, %s112
    %s114 = sphi 0, %s112
    %s115 = sphi 0, %s114
    %s129 = sphi 0, %s115
    %s133 = sphi 0, %s133
    %s135 = sphi 0, %s133
    %s136 = sphi 0, %s135
    %s150 = sphi 0, %s136
    %s154 = sphi 0, %s154
    %s156 = sphi 0, %s154
    %s157 = sphi 0, %s156
    %s171 = sphi 0, %s157
    %s177 = sphi 0, %s179
    %s180 = sphi 0, %s177
    %s181 = sphi 0, %s180
    %s197 = sphi 0, %s181
  $region4: #{affinity_mlp.1} parent=0 // loop_header_branch
    %18 = sbr.rel (%p16) target = $region8
  $region5: #{affinity_mlp.1} parent=0 // loop_body
    %s20 = ssub.s32 %s15, 1
    %s21 = ssub.s32 %s15, 2
    %s22 = sadd.s32 %s15, 1
    %s23 = ssub.s32 %s15, %s22
    %p24 = scmp.eq.s32.totalorder %s23, 0
    %s26 = sadd.s32 %s25, 1
    %s27 = scalar_select %p24, %s25, %s26
    %p30 = pneg %p24
    %p31 = scmp.eq.s32.totalorder %s15, 1
    %p32 = por %p30, %p31
    %p33 = scmp.ne.s32.totalorder %s25, %s28
    %p34 = scmp.eq.s32.totalorder %s15, 0
    %p35 = por %p33, %p34
    %p36 = scmp.ne.s32.totalorder %s25, %s28
    %p37 = scmp.eq.s32.totalorder %s20, 1
    %p38 = por %p36, %p37
    %p39 = scmp.ne.s32.totalorder %s28, %s29
    %p40 = scmp.eq.s32.totalorder %s20, 0
    %p41 = por %p39, %p40
    %p42 = scmp.ne.s32.totalorder %s28, %s29
    %p43 = scmp.eq.s32.totalorder %s21, 1
    %p44 = por %p42, %p43
    %p46 = scmp.ne.s32.totalorder %s29, %s45
    %p47 = scmp.eq.s32.totalorder %s21, 0
    %p48 = por %p46, %p47
    %s50 = sadd.s32 %s49, 1
    %p53 = scmp.eq.s32.totalorder %s15, 1
    %p54 = scmp.ne.s32.totalorder %s49, %s51
    %p55 = scmp.eq.s32.totalorder %s15, 0
    %p56 = por %p54, %p55
    %p57 = scmp.ne.s32.totalorder %s49, %s51
    %p58 = scmp.eq.s32.totalorder %s20, 1
    %p59 = por %p57, %p58
    %p60 = scmp.ne.s32.totalorder %s51, %s52
    %p61 = scmp.eq.s32.totalorder %s20, 0
    %p62 = por %p60, %p61
    %p63 = scmp.ne.s32.totalorder %s51, %s52
    %p64 = scmp.eq.s32.totalorder %s21, 1
    %p65 = por %p63, %p64
    %p67 = scmp.ne.s32.totalorder %s52, %s66
    %p68 = scmp.eq.s32.totalorder %s21, 0
    %p69 = por %p67, %p68
    %s71 = sadd.s32 %s70, 1
    %p74 = scmp.eq.s32.totalorder %s15, 1
    %p75 = scmp.ne.s32.totalorder %s70, %s72
    %p76 = scmp.eq.s32.totalorder %s15, 0
    %p77 = por %p75, %p76
    %p78 = scmp.ne.s32.totalorder %s70, %s72
    %p79 = scmp.eq.s32.totalorder %s20, 1
    %p80 = por %p78, %p79
    %p81 = scmp.ne.s32.totalorder %s72, %s73
    %p82 = scmp.eq.s32.totalorder %s20, 0
    %p83 = por %p81, %p82
    %p84 = scmp.ne.s32.totalorder %s72, %s73
    %p85 = scmp.eq.s32.totalorder %s21, 1
    %p86 = por %p84, %p85
    %p88 = scmp.ne.s32.totalorder %s73, %s87
    %p89 = scmp.eq.s32.totalorder %s21, 0
    %p90 = por %p88, %p89
    %s92 = sadd.s32 %s91, 1
    %p95 = scmp.eq.s32.totalorder %s15, 1
    %p96 = scmp.ne.s32.totalorder %s91, %s93
    %p97 = scmp.eq.s32.totalorder %s15, 0
    %p98 = por %p96, %p97
    %p99 = scmp.ne.s32.totalorder %s91, %s93
    %p100 = scmp.eq.s32.totalorder %s20, 1
    %p101 = por %p99, %p100
    %p102 = scmp.ne.s32.totalorder %s93, %s94
    %p103 = scmp.eq.s32.totalorder %s20, 0
    %p104 = por %p102, %p103
    %p105 = scmp.ne.s32.totalorder %s93, %s94
    %p106 = scmp.eq.s32.totalorder %s21, 1
    %p107 = por %p105, %p106
    %p109 = scmp.ne.s32.totalorder %s94, %s108
    %p110 = scmp.eq.s32.totalorder %s21, 0
    %p111 = por %p109, %p110
    %s113 = sadd.s32 %s112, 1
    %p116 = scmp.eq.s32.totalorder %s15, 1
    %p117 = scmp.ne.s32.totalorder %s112, %s114
    %p118 = scmp.eq.s32.totalorder %s15, 0
    %p119 = por %p117, %p118
    %p120 = scmp.ne.s32.totalorder %s112, %s114
    %p121 = scmp.eq.s32.totalorder %s20, 1
    %p122 = por %p120, %p121
    %p123 = scmp.ne.s32.totalorder %s114, %s115
    %p124 = scmp.eq.s32.totalorder %s20, 0
    %p125 = por %p123, %p124
    %p126 = scmp.ne.s32.totalorder %s114, %s115
    %p127 = scmp.eq.s32.totalorder %s21, 1
    %p128 = por %p126, %p127
    %p130 = scmp.ne.s32.totalorder %s115, %s129
    %p131 = scmp.eq.s32.totalorder %s21, 0
    %p132 = por %p130, %p131
    %s134 = sadd.s32 %s133, 1
    %p137 = scmp.eq.s32.totalorder %s15, 1
    %p138 = scmp.ne.s32.totalorder %s133, %s135
    %p139 = scmp.eq.s32.totalorder %s15, 0
    %p140 = por %p138, %p139
    %p141 = scmp.ne.s32.totalorder %s133, %s135
    %p142 = scmp.eq.s32.totalorder %s20, 1
    %p143 = por %p141, %p142
    %p144 = scmp.ne.s32.totalorder %s135, %s136
    %p145 = scmp.eq.s32.totalorder %s20, 0
    %p146 = por %p144, %p145
    %p147 = scmp.ne.s32.totalorder %s135, %s136
    %p148 = scmp.eq.s32.totalorder %s21, 1
    %p149 = por %p147, %p148
    %p151 = scmp.ne.s32.totalorder %s136, %s150
    %p152 = scmp.eq.s32.totalorder %s21, 0
    %p153 = por %p151, %p152
    %s155 = sadd.s32 %s154, 1
    %p158 = scmp.eq.s32.totalorder %s15, 1
    %p159 = scmp.ne.s32.totalorder %s154, %s156
    %p160 = scmp.eq.s32.totalorder %s15, 0
    %p161 = por %p159, %p160
    %p162 = scmp.ne.s32.totalorder %s154, %s156
    %p163 = scmp.eq.s32.totalorder %s20, 1
    %p164 = por %p162, %p163
    %p165 = scmp.ne.s32.totalorder %s156, %s157
    %p166 = scmp.eq.s32.totalorder %s20, 0
    %p167 = por %p165, %p166
    %p168 = scmp.ne.s32.totalorder %s156, %s157
    %p169 = scmp.eq.s32.totalorder %s21, 1
    %p170 = por %p168, %p169
    %p172 = scmp.ne.s32.totalorder %s157, %s171
    %p173 = scmp.eq.s32.totalorder %s21, 0
    %p174 = por %p172, %p173
    %s175 = ssub.s32 %s15, %s22
    %p176 = scmp.eq.s32.totalorder %s175, 0
    %s178 = sadd.s32 %s177, 1
    %s179 = scalar_select %p176, %s177, %s178
    %p182 = pneg %p176
    %p183 = scmp.eq.s32.totalorder %s15, 1
    %p184 = por %p182, %p183
    %p185 = scmp.ne.s32.totalorder %s177, %s180
    %p186 = scmp.eq.s32.totalorder %s15, 0
    %p187 = por %p185, %p186
    %p188 = scmp.ne.s32.totalorder %s177, %s180
    %p189 = scmp.eq.s32.totalorder %s20, 1
    %p190 = por %p188, %p189
    %p191 = scmp.ne.s32.totalorder %s180, %s181
    %p192 = scmp.eq.s32.totalorder %s20, 0
    %p193 = por %p191, %p192
    %p194 = scmp.ne.s32.totalorder %s180, %s181
    %p195 = scmp.eq.s32.totalorder %s21, 1
    %p196 = por %p194, %p195
    %p198 = scmp.ne.s32.totalorder %s181, %s197
    %p199 = scmp.eq.s32.totalorder %s21, 0
    %p200 = por %p198, %p199
    %p201 = scmp.le.s32.totalorder 1, %s15
    %p202 = scmp.lt.s32.totalorder %s15, 3
    %p203 = pnand %p201, %p202
    %p204 = pneg %p203
    // Predicated region
    $region9: #{affinity_mlp.1} parent=5 // pred_check
      _
    $region10: #{affinity_mlp.1} parent=5 // pred_check_branch
      %206 = sbr.rel (%p203) target = $region12
    $region11: #{affinity_mlp.1} parent=5 // pred_region
      %s207 = ssub.s32 %s15, 1
      // Predicated region
      $region13: #{affinity_mlp.1} parent=11 // pred_check
        %p208 = pneg %p62
      $region14: #{affinity_mlp.1} parent=11 // pred_check_branch
        %210 = sbr.rel (%p208) target = $region16
      $region15: #{affinity_mlp.1} parent=11 // pred_region
        _
      $region16: #{affinity_mlp.1} parent=11 // pred_fallthru
        _
      // Predicated region
      $region17: #{affinity_mlp.1} parent=11 // pred_check
        %p211 = pneg %p83
      $region18: #{affinity_mlp.1} parent=11 // pred_check_branch
        %213 = sbr.rel (%p211) target = $region20
      $region19: #{affinity_mlp.1} parent=11 // pred_region
        _
      $region20: #{affinity_mlp.1} parent=11 // pred_fallthru
        _
      // Predicated region
      $region21: #{affinity_mlp.1} parent=11 // pred_check
        %p214 = pneg %p104
      $region22: #{affinity_mlp.1} parent=11 // pred_check_branch
        %216 = sbr.rel (%p214) target = $region24
      $region23: #{affinity_mlp.1} parent=11 // pred_region
        _
      $region24: #{affinity_mlp.1} parent=11 // pred_fallthru
        _
      // Predicated region
      $region25: #{affinity_mlp.1} parent=11 // pred_check
        %p217 = pneg %p125
      $region26: #{affinity_mlp.1} parent=11 // pred_check_branch
        %219 = sbr.rel (%p217) target = $region28
      $region27: #{affinity_mlp.1} parent=11 // pred_region
        _
      $region28: #{affinity_mlp.1} parent=11 // pred_fallthru
        _
      // Predicated region
      $region29: #{affinity_mlp.1} parent=11 // pred_check
        %p220 = pneg %p146
      $region30: #{affinity_mlp.1} parent=11 // pred_check_branch
        %222 = sbr.rel (%p220) target = $region32
      $region31: #{affinity_mlp.1} parent=11 // pred_region
        _
      $region32: #{affinity_mlp.1} parent=11 // pred_fallthru
        _
      // Predicated region
      $region33: #{affinity_mlp.1} parent=11 // pred_check
        %p223 = pneg %p167
      $region34: #{affinity_mlp.1} parent=11 // pred_check_branch
        %225 = sbr.rel (%p223) target = $region36
      $region35: #{affinity_mlp.1} parent=11 // pred_region
        _
      $region36: #{affinity_mlp.1} parent=11 // pred_fallthru
        _
    $region12: #{affinity_mlp.1} parent=5 // pred_fallthru
      _
    %p226 = scmp.lt.s32.totalorder %s15, 2
    // Predicated region
    $region37: #{affinity_mlp.1} parent=5 // pred_check
      %p227 = pneg %p226
    $region38: #{affinity_mlp.1} parent=5 // pred_check_branch
      %229 = sbr.rel (%p227) target = $region40
    $region39: #{affinity_mlp.1} parent=5 // pred_region
      // Predicated region
      $region41: #{affinity_mlp.1} parent=39 // pred_check
        %p230 = pneg %p35
      $region42: #{affinity_mlp.1} parent=39 // pred_check_branch
        %232 = sbr.rel (%p230) target = $region44
      $region43: #{affinity_mlp.1} parent=39 // pred_region
        %s233 = smul.u32 128, %s15
        %p234 = scmp.lt.s32.totalorder %s233, 255
        %s235 = scalar_select %p234, %s233, 255
        %s236 = smul.addr %s235, 4
        %s237 = scalar_lea.vmem %s0, %s236
        %s238 = smul.u32 128, %s15
      $region44: #{affinity_mlp.1} parent=39 // pred_fallthru
        _
    $region40: #{affinity_mlp.1} parent=5 // pred_fallthru
      _
    %p239 = scmp.le.s32.totalorder 1, %s15
    %p240 = scmp.lt.s32.totalorder %s15, 3
    %p241 = pnand %p239, %p240
    %p242 = pneg %p241
    // Predicated region
    $region45: #{affinity_mlp.1} parent=5 // pred_check
      _
    $region46: #{affinity_mlp.1} parent=5 // pred_check_branch
      %244 = sbr.rel (%p241) target = $region48
    $region47: #{affinity_mlp.1} parent=5 // pred_region
      %s245 = ssub.s32 %s15, 1
      %s246 = smul.u32 128, %s20
      %p247 = scmp.lt.s32.totalorder %s246, 255
      %s248 = scalar_select %p247, %s246, 255
      %s249 = smul.addr %s248, 4
      %s250 = scalar_lea.vmem %s0, %s249
      %p251 = pneg %p41
      %p252 = pneg %p38
      %p253 = pneg %p62
      %p254 = pneg %p59
      %p255 = pneg %p83
      %p256 = pneg %p80
      %p257 = pneg %p104
      %p258 = pneg %p101
      %p259 = pneg %p125
      %p260 = pneg %p122
      %p261 = pneg %p146
      %p262 = pneg %p143
      %p263 = pneg %p167
      %p264 = pneg %p164
      %p265 = pneg %p193
      %p266 = pneg %p190
      %s267 = smul.u32 128, %s20
      %p268 = scmp.lt.s32.totalorder %s267, 255
      %s269 = scalar_select %p268, %s267, 255
      %s270 = smul.addr %s269, 8
      %s271 = scalar_lea.vmem %s7, %s270
      %s272 = smul.u32 128, %s20
      %p273 = scmp.lt.s32.totalorder %s272, 255
      %s274 = scalar_select %p273, %s272, 255
      %s275 = smul.addr %s274, 4
      %s276 = scalar_lea.vmem %s0, %s275
      %s277 = smul.u32 128, %s20
      %s278 = smul.u32 128, %s20
      %p279 = scmp.lt.s32.totalorder %s278, 255
      %s280 = scalar_select %p279, %s278, 255
      %s281 = smul.addr %s280, 8
      %s282 = scalar_lea.vmem %s7, %s281
      %s283 = smul.u32 128, %s20
      %v284 = vld [vmem:[%s276] sm:$0xf]
      %v285 = vld [vmem:[%s276 + $0x4] sm:$0xf]
      %v286 = vld [vmem:[%s276 + $0x8] sm:$0xf]
      %v287 = vld [vmem:[%s276 + $0xc] sm:$0xf]
      %v288 = vld [vmem:[%s276 + $0x10] sm:$0xf]
      %v289 = vld [vmem:[%s276 + $0x14] sm:$0xf]
      %v290 = vld [vmem:[%s276 + $0x18] sm:$0xf]
      %v291 = vld [vmem:[%s276 + $0x1c] sm:$0xf]
      %v292 = vld [vmem:[%s276 + $0x20] sm:$0xf]
      %v293 = vld [vmem:[%s276 + $0x24] sm:$0xf]
      %v294 = vld [vmem:[%s276 + $0x28] sm:$0xf]
      %v295 = vld [vmem:[%s276 + $0x2c] sm:$0xf]
      %v296 = vld [vmem:[%s276 + $0x30] sm:$0xf]
      %v297 = vld [vmem:[%s276 + $0x34] sm:$0xf]
      %v298 = vld [vmem:[%s276 + $0x38] sm:$0xf]
      %v299 = vld [vmem:[%s276 + $0x3c] sm:$0xf]
      %v300 = vld [vmem:[%s276 + $0x40] sm:$0xf]
      %v301 = vld [vmem:[%s276 + $0x44] sm:$0xf]
      %v302 = vld [vmem:[%s276 + $0x48] sm:$0xf]
      %v303 = vld [vmem:[%s276 + $0x4c] sm:$0xf]
      %v304 = vld [vmem:[%s276 + $0x50] sm:$0xf]
      %v305 = vld [vmem:[%s276 + $0x54] sm:$0xf]
      %v306 = vld [vmem:[%s276 + $0x58] sm:$0xf]
      %v307 = vld [vmem:[%s276 + $0x5c] sm:$0xf]
      %v308 = vld [vmem:[%s276 + $0x60] sm:$0xf]
      %v309 = vld [vmem:[%s276 + $0x64] sm:$0xf]
      %v310 = vld [vmem:[%s276 + $0x68] sm:$0xf]
      %v311 = vld [vmem:[%s276 + $0x6c] sm:$0xf]
      %v312 = vld [vmem:[%s276 + $0x70] sm:$0xf]
      %v313 = vld [vmem:[%s276 + $0x74] sm:$0xf]
      %v314 = vld [vmem:[%s276 + $0x78] sm:$0xf]
      %v315 = vld [vmem:[%s276 + $0x7c] sm:$0xf]
      %v316 = vld [vmem:[%s276 + $0x80] sm:$0xf]
      %v317 = vld [vmem:[%s276 + $0x84] sm:$0xf]
      %v318 = vld [vmem:[%s276 + $0x88] sm:$0xf]
      %v319 = vld [vmem:[%s276 + $0x8c] sm:$0xf]
      %v320 = vld [vmem:[%s276 + $0x90] sm:$0xf]
      %v321 = vld [vmem:[%s276 + $0x94] sm:$0xf]
      %v322 = vld [vmem:[%s276 + $0x98] sm:$0xf]
      %v323 = vld [vmem:[%s276 + $0x9c] sm:$0xf]
      %v324 = vld [vmem:[%s276 + $0xa0] sm:$0xf]
      %v325 = vld [vmem:[%s276 + $0xa4] sm:$0xf]
      %v326 = vld [vmem:[%s276 + $0xa8] sm:$0xf]
      %v327 = vld [vmem:[%s276 + $0xac] sm:$0xf]
      %v328 = vld [vmem:[%s276 + $0xb0] sm:$0xf]
      %v329 = vld [vmem:[%s276 + $0xb4] sm:$0xf]
      %v330 = vld [vmem:[%s276 + $0xb8] sm:$0xf]
      %v331 = vld [vmem:[%s276 + $0xbc] sm:$0xf]
      %v332 = vld [vmem:[%s276 + $0xc0] sm:$0xf]
      %v333 = vld [vmem:[%s276 + $0xc4] sm:$0xf]
      %v334 = vld [vmem:[%s276 + $0xc8] sm:$0xf]
      %v335 = vld [vmem:[%s276 + $0xcc] sm:$0xf]
      %v336 = vld [vmem:[%s276 + $0xd0] sm:$0xf]
      %v337 = vld [vmem:[%s276 + $0xd4] sm:$0xf]
      %v338 = vld [vmem:[%s276 + $0xd8] sm:$0xf]
      %v339 = vld [vmem:[%s276 + $0xdc] sm:$0xf]
      %v340 = vld [vmem:[%s276 + $0xe0] sm:$0xf]
      %v341 = vld [vmem:[%s276 + $0xe4] sm:$0xf]
      %v342 = vld [vmem:[%s276 + $0xe8] sm:$0xf]
      %v343 = vld [vmem:[%s276 + $0xec] sm:$0xf]
      %v344 = vld [vmem:[%s276 + $0xf0] sm:$0xf]
      %v345 = vld [vmem:[%s276 + $0xf4] sm:$0xf]
      %v346 = vld [vmem:[%s276 + $0xf8] sm:$0xf]
      %v347 = vld [vmem:[%s276 + $0xfc] sm:$0xf]
      %v348 = vld [vmem:[%s276 + $0x100] sm:$0xf]
      %v349 = vld [vmem:[%s276 + $0x104] sm:$0xf]
      %v350 = vld [vmem:[%s276 + $0x108] sm:$0xf]
      %v351 = vld [vmem:[%s276 + $0x10c] sm:$0xf]
      %v352 = vld [vmem:[%s276 + $0x110] sm:$0xf]
      %v353 = vld [vmem:[%s276 + $0x114] sm:$0xf]
      %v354 = vld [vmem:[%s276 + $0x118] sm:$0xf]
      %v355 = vld [vmem:[%s276 + $0x11c] sm:$0xf]
      %v356 = vld [vmem:[%s276 + $0x120] sm:$0xf]
      %v357 = vld [vmem:[%s276 + $0x124] sm:$0xf]
      %v358 = vld [vmem:[%s276 + $0x128] sm:$0xf]
      %v359 = vld [vmem:[%s276 + $0x12c] sm:$0xf]
      %v360 = vld [vmem:[%s276 + $0x130] sm:$0xf]
      %v361 = vld [vmem:[%s276 + $0x134] sm:$0xf]
      %v362 = vld [vmem:[%s276 + $0x138] sm:$0xf]
      %v363 = vld [vmem:[%s276 + $0x13c] sm:$0xf]
      %v364 = vld [vmem:[%s276 + $0x140] sm:$0xf]
      %v365 = vld [vmem:[%s276 + $0x144] sm:$0xf]
      %v366 = vld [vmem:[%s276 + $0x148] sm:$0xf]
      %v367 = vld [vmem:[%s276 + $0x14c] sm:$0xf]
      %v368 = vld [vmem:[%s276 + $0x150] sm:$0xf]
      %v369 = vld [vmem:[%s276 + $0x154] sm:$0xf]
      %v370 = vld [vmem:[%s276 + $0x158] sm:$0xf]
      %v371 = vld [vmem:[%s276 + $0x15c] sm:$0xf]
      %v372 = vld [vmem:[%s276 + $0x160] sm:$0xf]
      %v373 = vld [vmem:[%s276 + $0x164] sm:$0xf]
      %v374 = vld [vmem:[%s276 + $0x168] sm:$0xf]
      %v375 = vld [vmem:[%s276 + $0x16c] sm:$0xf]
      %v376 = vld [vmem:[%s276 + $0x170] sm:$0xf]
      %v377 = vld [vmem:[%s276 + $0x174] sm:$0xf]
      %v378 = vld [vmem:[%s276 + $0x178] sm:$0xf]
      %v379 = vld [vmem:[%s276 + $0x17c] sm:$0xf]
      %v380 = vld [vmem:[%s276 + $0x180] sm:$0xf]
      %v381 = vld [vmem:[%s276 + $0x184] sm:$0xf]
      %v382 = vld [vmem:[%s276 + $0x188] sm:$0xf]
      %v383 = vld [vmem:[%s276 + $0x18c] sm:$0xf]
      %v384 = vld [vmem:[%s276 + $0x190] sm:$0xf]
      %v385 = vld [vmem:[%s276 + $0x194] sm:$0xf]
      %v386 = vld [vmem:[%s276 + $0x198] sm:$0xf]
      %v387 = vld [vmem:[%s276 + $0x19c] sm:$0xf]
      %v388 = vld [vmem:[%s276 + $0x1a0] sm:$0xf]
      %v389 = vld [vmem:[%s276 + $0x1a4] sm:$0xf]
      %v390 = vld [vmem:[%s276 + $0x1a8] sm:$0xf]
      %v391 = vld [vmem:[%s276 + $0x1ac] sm:$0xf]
      %v392 = vld [vmem:[%s276 + $0x1b0] sm:$0xf]
      %v393 = vld [vmem:[%s276 + $0x1b4] sm:$0xf]
      %v394 = vld [vmem:[%s276 + $0x1b8] sm:$0xf]
      %v395 = vld [vmem:[%s276 + $0x1bc] sm:$0xf]
      %v396 = vld [vmem:[%s276 + $0x1c0] sm:$0xf]
      %v397 = vld [vmem:[%s276 + $0x1c4] sm:$0xf]
      %v398 = vld [vmem:[%s276 + $0x1c8] sm:$0xf]
      %v399 = vld [vmem:[%s276 + $0x1cc] sm:$0xf]
      %v400 = vld [vmem:[%s276 + $0x1d0] sm:$0xf]
      %v401 = vld [vmem:[%s276 + $0x1d4] sm:$0xf]
      %v402 = vld [vmem:[%s276 + $0x1d8] sm:$0xf]
      %v403 = vld [vmem:[%s276 + $0x1dc] sm:$0xf]
      %v404 = vld [vmem:[%s276 + $0x1e0] sm:$0xf]
      %v405 = vld [vmem:[%s276 + $0x1e4] sm:$0xf]
      %v406 = vld [vmem:[%s276 + $0x1e8] sm:$0xf]
      %v407 = vld [vmem:[%s276 + $0x1ec] sm:$0xf]
      %v408 = vld [vmem:[%s276 + $0x1f0] sm:$0xf]
      %v409 = vld [vmem:[%s276 + $0x1f4] sm:$0xf]
      %v410 = vld [vmem:[%s276 + $0x1f8] sm:$0xf]
      %v411 = vld [vmem:[%s276 + $0x1fc] sm:$0xf]
      %v412 = vld [vmem:[%s1] sm:$0xff]
      %v413 = vld [vmem:[%s1 + $0x8] sm:$0xff]
      %v414 = vld [vmem:[%s1 + $0x10] sm:$0xff]
      %v415 = vld [vmem:[%s1 + $0x18] sm:$0xff]
      %v416 = vld [vmem:[%s1 + $0x20] sm:$0xff]
      %v417 = vld [vmem:[%s1 + $0x28] sm:$0xff]
      %v418 = vld [vmem:[%s1 + $0x30] sm:$0xff]
      %v419 = vld [vmem:[%s1 + $0x38] sm:$0xff]
      %v420 = vld [vmem:[%s1 + $0x40] sm:$0xff]
      %v421 = vld [vmem:[%s1 + $0x48] sm:$0xff]
      %v422 = vld [vmem:[%s1 + $0x50] sm:$0xff]
      %v423 = vld [vmem:[%s1 + $0x58] sm:$0xff]
      %v424 = vld [vmem:[%s1 + $0x60] sm:$0xff]
      %v425 = vld [vmem:[%s1 + $0x68] sm:$0xff]
      %v426 = vld [vmem:[%s1 + $0x70] sm:$0xff]
      %v427 = vld [vmem:[%s1 + $0x78] sm:$0xff]
      %v428 = vld [vmem:[%s2] sm:$0x3]
      %v430 = vperm.slane %v428, 0
      %v431 = vperm.slane %v428, 1
      %v562 = vunpack.c.l.b16 %v284
      %v563 = vunpack.c.l.b16 %v285
      %v564 = vunpack.c.l.b16 %v286
      %v565 = vunpack.c.l.b16 %v287
      %v566 = vunpack.c.l.b16 %v288
      %v567 = vunpack.c.l.b16 %v289
      %v568 = vunpack.c.l.b16 %v290
      %v569 = vunpack.c.l.b16 %v291
      %v570 = vunpack.c.l.b16 %v292
      %v571 = vunpack.c.l.b16 %v293
      %v572 = vunpack.c.l.b16 %v294
      %v573 = vunpack.c.l.b16 %v295
      %v574 = vunpack.c.l.b16 %v296
      %v575 = vunpack.c.l.b16 %v297
      %v576 = vunpack.c.l.b16 %v298
      %v577 = vunpack.c.l.b16 %v299
      %v578 = vunpack.c.l.b16 %v300
      %v579 = vunpack.c.l.b16 %v301
      %v580 = vunpack.c.l.b16 %v302
      %v581 = vunpack.c.l.b16 %v303
      %v582 = vunpack.c.l.b16 %v304
      %v583 = vunpack.c.l.b16 %v305
      %v584 = vunpack.c.l.b16 %v306
      %v585 = vunpack.c.l.b16 %v307
      %v586 = vunpack.c.l.b16 %v308
      %v587 = vunpack.c.l.b16 %v309
      %v588 = vunpack.c.l.b16 %v310
      %v589 = vunpack.c.l.b16 %v311
      %v590 = vunpack.c.l.b16 %v312
      %v591 = vunpack.c.l.b16 %v313
      %v592 = vunpack.c.l.b16 %v314
      %v593 = vunpack.c.l.b16 %v315
      %v594 = vunpack.c.l.b16 %v316
      %v595 = vunpack.c.l.b16 %v317
      %v596 = vunpack.c.l.b16 %v318
      %v597 = vunpack.c.l.b16 %v319
      %v598 = vunpack.c.l.b16 %v320
      %v599 = vunpack.c.l.b16 %v321
      %v600 = vunpack.c.l.b16 %v322
      %v601 = vunpack.c.l.b16 %v323
      %v602 = vunpack.c.l.b16 %v324
      %v603 = vunpack.c.l.b16 %v325
      %v604 = vunpack.c.l.b16 %v326
      %v605 = vunpack.c.l.b16 %v327
      %v606 = vunpack.c.l.b16 %v328
      %v607 = vunpack.c.l.b16 %v329
      %v608 = vunpack.c.l.b16 %v330
      %v609 = vunpack.c.l.b16 %v331
      %v610 = vunpack.c.l.b16 %v332
      %v611 = vunpack.c.l.b16 %v333
      %v612 = vunpack.c.l.b16 %v334
      %v613 = vunpack.c.l.b16 %v335
      %v614 = vunpack.c.l.b16 %v336
      %v615 = vunpack.c.l.b16 %v337
      %v616 = vunpack.c.l.b16 %v338
      %v617 = vunpack.c.l.b16 %v339
      %v618 = vunpack.c.l.b16 %v340
      %v619 = vunpack.c.l.b16 %v341
      %v620 = vunpack.c.l.b16 %v342
      %v621 = vunpack.c.l.b16 %v343
      %v622 = vunpack.c.l.b16 %v344
      %v623 = vunpack.c.l.b16 %v345
      %v624 = vunpack.c.l.b16 %v346
      %v625 = vunpack.c.l.b16 %v347
      %v626 = vunpack.c.l.b16 %v348
      %v627 = vunpack.c.l.b16 %v349
      %v628 = vunpack.c.l.b16 %v350
      %v629 = vunpack.c.l.b16 %v351
      %v630 = vunpack.c.l.b16 %v352
      %v631 = vunpack.c.l.b16 %v353
      %v632 = vunpack.c.l.b16 %v354
      %v633 = vunpack.c.l.b16 %v355
      %v634 = vunpack.c.l.b16 %v356
      %v635 = vunpack.c.l.b16 %v357
      %v636 = vunpack.c.l.b16 %v358
      %v637 = vunpack.c.l.b16 %v359
      %v638 = vunpack.c.l.b16 %v360
      %v639 = vunpack.c.l.b16 %v361
      %v640 = vunpack.c.l.b16 %v362
      %v641 = vunpack.c.l.b16 %v363
      %v642 = vunpack.c.l.b16 %v364
      %v643 = vunpack.c.l.b16 %v365
      %v644 = vunpack.c.l.b16 %v366
      %v645 = vunpack.c.l.b16 %v367
      %v646 = vunpack.c.l.b16 %v368
      %v647 = vunpack.c.l.b16 %v369
      %v648 = vunpack.c.l.b16 %v370
      %v649 = vunpack.c.l.b16 %v371
      %v650 = vunpack.c.l.b16 %v372
      %v651 = vunpack.c.l.b16 %v373
      %v652 = vunpack.c.l.b16 %v374
      %v653 = vunpack.c.l.b16 %v375
      %v654 = vunpack.c.l.b16 %v376
      %v655 = vunpack.c.l.b16 %v377
      %v656 = vunpack.c.l.b16 %v378
      %v657 = vunpack.c.l.b16 %v379
      %v658 = vunpack.c.l.b16 %v380
      %v659 = vunpack.c.l.b16 %v381
      %v660 = vunpack.c.l.b16 %v382
      %v661 = vunpack.c.l.b16 %v383
      %v662 = vunpack.c.l.b16 %v384
      %v663 = vunpack.c.l.b16 %v385
      %v664 = vunpack.c.l.b16 %v386
      %v665 = vunpack.c.l.b16 %v387
      %v666 = vunpack.c.l.b16 %v388
      %v667 = vunpack.c.l.b16 %v389
      %v668 = vunpack.c.l.b16 %v390
      %v669 = vunpack.c.l.b16 %v391
      %v670 = vunpack.c.l.b16 %v392
      %v671 = vunpack.c.l.b16 %v393
      %v672 = vunpack.c.l.b16 %v394
      %v673 = vunpack.c.l.b16 %v395
      %v674 = vunpack.c.l.b16 %v396
      %v675 = vunpack.c.l.b16 %v397
      %v676 = vunpack.c.l.b16 %v398
      %v677 = vunpack.c.l.b16 %v399
      %v678 = vunpack.c.l.b16 %v400
      %v679 = vunpack.c.l.b16 %v401
      %v680 = vunpack.c.l.b16 %v402
      %v681 = vunpack.c.l.b16 %v403
      %v682 = vunpack.c.l.b16 %v404
      %v683 = vunpack.c.l.b16 %v405
      %v684 = vunpack.c.l.b16 %v406
      %v685 = vunpack.c.l.b16 %v407
      %v686 = vunpack.c.l.b16 %v408
      %v687 = vunpack.c.l.b16 %v409
      %v688 = vunpack.c.l.b16 %v410
      %v689 = vunpack.c.l.b16 %v411
      %v690 = vpack.c.b16 %v563, %v562
      %v691 = vpack.c.b16 %v565, %v564
      %v692 = vpack.c.b16 %v567, %v566
      %v693 = vpack.c.b16 %v569, %v568
      %v694 = vpack.c.b16 %v571, %v570
      %v695 = vpack.c.b16 %v573, %v572
      %v696 = vpack.c.b16 %v575, %v574
      %v697 = vpack.c.b16 %v577, %v576
      %v698 = vpack.c.b16 %v579, %v578
      %v699 = vpack.c.b16 %v581, %v580
      %v700 = vpack.c.b16 %v583, %v582
      %v701 = vpack.c.b16 %v585, %v584
      %v702 = vpack.c.b16 %v587, %v586
      %v703 = vpack.c.b16 %v589, %v588
      %v704 = vpack.c.b16 %v591, %v590
      %v705 = vpack.c.b16 %v593, %v592
      %v706 = vpack.c.b16 %v595, %v594
      %v707 = vpack.c.b16 %v597, %v596
      %v708 = vpack.c.b16 %v599, %v598
      %v709 = vpack.c.b16 %v601, %v600
      %v710 = vpack.c.b16 %v603, %v602
      %v711 = vpack.c.b16 %v605, %v604
      %v712 = vpack.c.b16 %v607, %v606
      %v713 = vpack.c.b16 %v609, %v608
      %v714 = vpack.c.b16 %v611, %v610
      %v715 = vpack.c.b16 %v613, %v612
      %v716 = vpack.c.b16 %v615, %v614
      %v717 = vpack.c.b16 %v617, %v616
      %v718 = vpack.c.b16 %v619, %v618
      %v719 = vpack.c.b16 %v621, %v620
      %v720 = vpack.c.b16 %v623, %v622
      %v721 = vpack.c.b16 %v625, %v624
      %v722 = vpack.c.b16 %v627, %v626
      %v723 = vpack.c.b16 %v629, %v628
      %v724 = vpack.c.b16 %v631, %v630
      %v725 = vpack.c.b16 %v633, %v632
      %v726 = vpack.c.b16 %v635, %v634
      %v727 = vpack.c.b16 %v637, %v636
      %v728 = vpack.c.b16 %v639, %v638
      %v729 = vpack.c.b16 %v641, %v640
      %v730 = vpack.c.b16 %v643, %v642
      %v731 = vpack.c.b16 %v645, %v644
      %v732 = vpack.c.b16 %v647, %v646
      %v733 = vpack.c.b16 %v649, %v648
      %v734 = vpack.c.b16 %v651, %v650
      %v735 = vpack.c.b16 %v653, %v652
      %v736 = vpack.c.b16 %v655, %v654
      %v737 = vpack.c.b16 %v657, %v656
      %v738 = vpack.c.b16 %v659, %v658
      %v739 = vpack.c.b16 %v661, %v660
      %v740 = vpack.c.b16 %v663, %v662
      %v741 = vpack.c.b16 %v665, %v664
      %v742 = vpack.c.b16 %v667, %v666
      %v743 = vpack.c.b16 %v669, %v668
      %v744 = vpack.c.b16 %v671, %v670
      %v745 = vpack.c.b16 %v673, %v672
      %v746 = vpack.c.b16 %v675, %v674
      %v747 = vpack.c.b16 %v677, %v676
      %v748 = vpack.c.b16 %v679, %v678
      %v749 = vpack.c.b16 %v681, %v680
      %v750 = vpack.c.b16 %v683, %v682
      %v751 = vpack.c.b16 %v685, %v684
      %v752 = vpack.c.b16 %v687, %v686
      %v753 = vpack.c.b16 %v689, %v688
      %v834 = vunpack.c.l.b16 %v412
      %v835 = vunpack.c.h.b16 %v412
      %v836 = vunpack.c.l.b16 %v413
      %v837 = vunpack.c.h.b16 %v413
      %v838 = vunpack.c.l.b16 %v414
      %v839 = vunpack.c.h.b16 %v414
      %v840 = vunpack.c.l.b16 %v415
      %v841 = vunpack.c.h.b16 %v415
      %v842 = vunpack.c.l.b16 %v416
      %v843 = vunpack.c.h.b16 %v416
      %v844 = vunpack.c.l.b16 %v417
      %v845 = vunpack.c.h.b16 %v417
      %v846 = vunpack.c.l.b16 %v418
      %v847 = vunpack.c.h.b16 %v418
      %v848 = vunpack.c.l.b16 %v419
      %v849 = vunpack.c.h.b16 %v419
      %v850 = vunpack.c.l.b16 %v420
      %v851 = vunpack.c.h.b16 %v420
      %v852 = vunpack.c.l.b16 %v421
      %v853 = vunpack.c.h.b16 %v421
      %v854 = vunpack.c.l.b16 %v422
      %v855 = vunpack.c.h.b16 %v422
      %v856 = vunpack.c.l.b16 %v423
      %v857 = vunpack.c.h.b16 %v423
      %v858 = vunpack.c.l.b16 %v424
      %v859 = vunpack.c.h.b16 %v424
      %v860 = vunpack.c.l.b16 %v425
      %v861 = vunpack.c.h.b16 %v425
      %v862 = vunpack.c.l.b16 %v426
      %v863 = vunpack.c.h.b16 %v426
      %v864 = vunpack.c.l.b16 %v427
      %v865 = vunpack.c.h.b16 %v427
      %v866 = vpack.c.b16 %v836, %v834
      %v867 = vpack.c.b16 %v837, %v835
      %v868 = vpack.c.b16 %v840, %v838
      %v869 = vpack.c.b16 %v841, %v839
      %v870 = vpack.c.b16 %v844, %v842
      %v871 = vpack.c.b16 %v845, %v843
      %v872 = vpack.c.b16 %v848, %v846
      %v873 = vpack.c.b16 %v849, %v847
      %v874 = vpack.c.b16 %v852, %v850
      %v875 = vpack.c.b16 %v853, %v851
      %v876 = vpack.c.b16 %v856, %v854
      %v877 = vpack.c.b16 %v857, %v855
      %v878 = vpack.c.b16 %v860, %v858
      %v879 = vpack.c.b16 %v861, %v859
      %v880 = vpack.c.b16 %v864, %v862
      %v881 = vpack.c.b16 %v865, %v863
      %898 = vmatpush.bf16.msra.mxu0 %v880
      %899 = vmatpush.bf16.msra.mxu0 %v878
      %900 = vmatpush.bf16.msra.mxu0 %v876
      %901 = vmatpush.bf16.msra.mxu0 %v874
      %902 = vmatpush.bf16.msra.mxu0 %v872
      %903 = vmatpush.bf16.msra.mxu0 %v870
      %904 = vmatpush.bf16.msra.mxu0 %v868
      %905 = vmatpush.bf16.msra.mxu0 %v866
      %906 = vmatmul.bf16.gmra.mxu0 %v690
      %v907 = vpop.f32.mrf.mxu0
      %v908 = vadd.f32 %v430, %v907
      %v909 = vpop.f32.mrf.mxu0
      %v910 = vadd.f32 %v430, %v909
      %911 = vmatmul.bf16.gmra.mxu0 %v691
      %v912 = vpop.f32.mrf.mxu0
      %v913 = vadd.f32 %v430, %v912
      %v914 = vpop.f32.mrf.mxu0
      %v915 = vadd.f32 %v430, %v914
      %916 = vmatmul.bf16.gmra.mxu0 %v692
      %v917 = vpop.f32.mrf.mxu0
      %v918 = vadd.f32 %v430, %v917
      %v919 = vpop.f32.mrf.mxu0
      %v920 = vadd.f32 %v430, %v919
      %921 = vmatmul.bf16.gmra.mxu0 %v693
      %v922 = vpop.f32.mrf.mxu0
      %v923 = vadd.f32 %v430, %v922
      %v924 = vpop.f32.mrf.mxu0
      %v925 = vadd.f32 %v430, %v924
      %926 = vmatmul.bf16.gmra.mxu0 %v694
      %v927 = vpop.f32.mrf.mxu0
      %v928 = vadd.f32 %v430, %v927
      %v929 = vpop.f32.mrf.mxu0
      %v930 = vadd.f32 %v430, %v929
      %931 = vmatmul.bf16.gmra.mxu0 %v695
      %v932 = vpop.f32.mrf.mxu0
      %v933 = vadd.f32 %v430, %v932
      %v934 = vpop.f32.mrf.mxu0
      %v935 = vadd.f32 %v430, %v934
      %936 = vmatmul.bf16.gmra.mxu0 %v696
      %v937 = vpop.f32.mrf.mxu0
      %v938 = vadd.f32 %v430, %v937
      %v939 = vpop.f32.mrf.mxu0
      %v940 = vadd.f32 %v430, %v939
      %941 = vmatmul.bf16.gmra.mxu0 %v697
      %v942 = vpop.f32.mrf.mxu0
      %v943 = vadd.f32 %v430, %v942
      %v944 = vpop.f32.mrf.mxu0
      %v945 = vadd.f32 %v430, %v944
      %946 = vmatmul.bf16.gmra.mxu0 %v698
      %v947 = vpop.f32.mrf.mxu0
      %v948 = vadd.f32 %v430, %v947
      %v949 = vpop.f32.mrf.mxu0
      %v950 = vadd.f32 %v430, %v949
      %951 = vmatmul.bf16.gmra.mxu0 %v699
      %v952 = vpop.f32.mrf.mxu0
      %v953 = vadd.f32 %v430, %v952
      %v954 = vpop.f32.mrf.mxu0
      %v955 = vadd.f32 %v430, %v954
      %956 = vmatmul.bf16.gmra.mxu0 %v700
      %v957 = vpop.f32.mrf.mxu0
      %v958 = vadd.f32 %v430, %v957
      %v959 = vpop.f32.mrf.mxu0
      %v960 = vadd.f32 %v430, %v959
      %961 = vmatmul.bf16.gmra.mxu0 %v701
      %v962 = vpop.f32.mrf.mxu0
      %v963 = vadd.f32 %v430, %v962
      %v964 = vpop.f32.mrf.mxu0
      %v965 = vadd.f32 %v430, %v964
      %966 = vmatmul.bf16.gmra.mxu0 %v702
      %v967 = vpop.f32.mrf.mxu0
      %v968 = vadd.f32 %v430, %v967
      %v969 = vpop.f32.mrf.mxu0
      %v970 = vadd.f32 %v430, %v969
      %971 = vmatmul.bf16.gmra.mxu0 %v703
      %v972 = vpop.f32.mrf.mxu0
      %v973 = vadd.f32 %v430, %v972
      %v974 = vpop.f32.mrf.mxu0
      %v975 = vadd.f32 %v430, %v974
      %976 = vmatmul.bf16.gmra.mxu0 %v704
      %v977 = vpop.f32.mrf.mxu0
      %v978 = vadd.f32 %v430, %v977
      %v979 = vpop.f32.mrf.mxu0
      %v980 = vadd.f32 %v430, %v979
      %981 = vmatmul.bf16.gmra.mxu0 %v705
      %v982 = vpop.f32.mrf.mxu0
      %v983 = vadd.f32 %v430, %v982
      %v984 = vpop.f32.mrf.mxu0
      %v985 = vadd.f32 %v430, %v984
      %986 = vmatmul.bf16.gmra.mxu0 %v706
      %v987 = vpop.f32.mrf.mxu0
      %v988 = vadd.f32 %v430, %v987
      %v989 = vpop.f32.mrf.mxu0
      %v990 = vadd.f32 %v430, %v989
      %991 = vmatmul.bf16.gmra.mxu0 %v707
      %v992 = vpop.f32.mrf.mxu0
      %v993 = vadd.f32 %v430, %v992
      %v994 = vpop.f32.mrf.mxu0
      %v995 = vadd.f32 %v430, %v994
      %996 = vmatmul.bf16.gmra.mxu0 %v708
      %v997 = vpop.f32.mrf.mxu0
      %v998 = vadd.f32 %v430, %v997
      %v999 = vpop.f32.mrf.mxu0
      %v1000 = vadd.f32 %v430, %v999
      %1001 = vmatmul.bf16.gmra.mxu0 %v709
      %v1002 = vpop.f32.mrf.mxu0
      %v1003 = vadd.f32 %v430, %v1002
      %v1004 = vpop.f32.mrf.mxu0
      %v1005 = vadd.f32 %v430, %v1004
      %1006 = vmatmul.bf16.gmra.mxu0 %v710
      %v1007 = vpop.f32.mrf.mxu0
      %v1008 = vadd.f32 %v430, %v1007
      %v1009 = vpop.f32.mrf.mxu0
      %v1010 = vadd.f32 %v430, %v1009
      %1011 = vmatmul.bf16.gmra.mxu0 %v711
      %v1012 = vpop.f32.mrf.mxu0
      %v1013 = vadd.f32 %v430, %v1012
      %v1014 = vpop.f32.mrf.mxu0
      %v1015 = vadd.f32 %v430, %v1014
      %1016 = vmatmul.bf16.gmra.mxu0 %v712
      %v1017 = vpop.f32.mrf.mxu0
      %v1018 = vadd.f32 %v430, %v1017
      %v1019 = vpop.f32.mrf.mxu0
      %v1020 = vadd.f32 %v430, %v1019
      %1021 = vmatmul.bf16.gmra.mxu0 %v713
      %v1022 = vpop.f32.mrf.mxu0
      %v1023 = vadd.f32 %v430, %v1022
      %v1024 = vpop.f32.mrf.mxu0
      %v1025 = vadd.f32 %v430, %v1024
      %1026 = vmatmul.bf16.gmra.mxu0 %v714
      %v1027 = vpop.f32.mrf.mxu0
      %v1028 = vadd.f32 %v430, %v1027
      %v1029 = vpop.f32.mrf.mxu0
      %v1030 = vadd.f32 %v430, %v1029
      %1031 = vmatmul.bf16.gmra.mxu0 %v715
      %v1032 = vpop.f32.mrf.mxu0
      %v1033 = vadd.f32 %v430, %v1032
      %v1034 = vpop.f32.mrf.mxu0
      %v1035 = vadd.f32 %v430, %v1034
      %1036 = vmatmul.bf16.gmra.mxu0 %v716
      %v1037 = vpop.f32.mrf.mxu0
      %v1038 = vadd.f32 %v430, %v1037
      %v1039 = vpop.f32.mrf.mxu0
      %v1040 = vadd.f32 %v430, %v1039
      %1041 = vmatmul.bf16.gmra.mxu0 %v717
      %v1042 = vpop.f32.mrf.mxu0
      %v1043 = vadd.f32 %v430, %v1042
      %v1044 = vpop.f32.mrf.mxu0
      %v1045 = vadd.f32 %v430, %v1044
      %1046 = vmatmul.bf16.gmra.mxu0 %v718
      %v1047 = vpop.f32.mrf.mxu0
      %v1048 = vadd.f32 %v430, %v1047
      %v1049 = vpop.f32.mrf.mxu0
      %v1050 = vadd.f32 %v430, %v1049
      %1051 = vmatmul.bf16.gmra.mxu0 %v719
      %v1052 = vpop.f32.mrf.mxu0
      %v1053 = vadd.f32 %v430, %v1052
      %v1054 = vpop.f32.mrf.mxu0
      %v1055 = vadd.f32 %v430, %v1054
      %1056 = vmatmul.bf16.gmra.mxu0 %v720
      %v1057 = vpop.f32.mrf.mxu0
      %v1058 = vadd.f32 %v430, %v1057
      %v1059 = vpop.f32.mrf.mxu0
      %v1060 = vadd.f32 %v430, %v1059
      %1061 = vmatmul.bf16.gmra.mxu0 %v721
      %v1062 = vpop.f32.mrf.mxu0
      %v1063 = vadd.f32 %v430, %v1062
      %v1064 = vpop.f32.mrf.mxu0
      %v1065 = vadd.f32 %v430, %v1064
      %1066 = vmatmul.bf16.gmra.mxu0 %v722
      %v1067 = vpop.f32.mrf.mxu0
      %v1068 = vadd.f32 %v430, %v1067
      %v1069 = vpop.f32.mrf.mxu0
      %v1070 = vadd.f32 %v430, %v1069
      %1071 = vmatmul.bf16.gmra.mxu0 %v723
      %v1072 = vpop.f32.mrf.mxu0
      %v1073 = vadd.f32 %v430, %v1072
      %v1074 = vpop.f32.mrf.mxu0
      %v1075 = vadd.f32 %v430, %v1074
      %1076 = vmatmul.bf16.gmra.mxu0 %v724
      %v1077 = vpop.f32.mrf.mxu0
      %v1078 = vadd.f32 %v430, %v1077
      %v1079 = vpop.f32.mrf.mxu0
      %v1080 = vadd.f32 %v430, %v1079
      %1081 = vmatmul.bf16.gmra.mxu0 %v725
      %v1082 = vpop.f32.mrf.mxu0
      %v1083 = vadd.f32 %v430, %v1082
      %v1084 = vpop.f32.mrf.mxu0
      %v1085 = vadd.f32 %v430, %v1084
      %1086 = vmatmul.bf16.gmra.mxu0 %v726
      %v1087 = vpop.f32.mrf.mxu0
      %v1088 = vadd.f32 %v430, %v1087
      %v1089 = vpop.f32.mrf.mxu0
      %v1090 = vadd.f32 %v430, %v1089
      %1091 = vmatmul.bf16.gmra.mxu0 %v727
      %v1092 = vpop.f32.mrf.mxu0
      %v1093 = vadd.f32 %v430, %v1092
      %v1094 = vpop.f32.mrf.mxu0
      %v1095 = vadd.f32 %v430, %v1094
      %1096 = vmatmul.bf16.gmra.mxu0 %v728
      %v1097 = vpop.f32.mrf.mxu0
      %v1098 = vadd.f32 %v430, %v1097
      %v1099 = vpop.f32.mrf.mxu0
      %v1100 = vadd.f32 %v430, %v1099
      %1101 = vmatmul.bf16.gmra.mxu0 %v729
      %v1102 = vpop.f32.mrf.mxu0
      %v1103 = vadd.f32 %v430, %v1102
      %v1104 = vpop.f32.mrf.mxu0
      %v1105 = vadd.f32 %v430, %v1104
      %1106 = vmatmul.bf16.gmra.mxu0 %v730
      %v1107 = vpop.f32.mrf.mxu0
      %v1108 = vadd.f32 %v430, %v1107
      %v1109 = vpop.f32.mrf.mxu0
      %v1110 = vadd.f32 %v430, %v1109
      %1111 = vmatmul.bf16.gmra.mxu0 %v731
      %v1112 = vpop.f32.mrf.mxu0
      %v1113 = vadd.f32 %v430, %v1112
      %v1114 = vpop.f32.mrf.mxu0
      %v1115 = vadd.f32 %v430, %v1114
      %1116 = vmatmul.bf16.gmra.mxu0 %v732
      %v1117 = vpop.f32.mrf.mxu0
      %v1118 = vadd.f32 %v430, %v1117
      %v1119 = vpop.f32.mrf.mxu0
      %v1120 = vadd.f32 %v430, %v1119
      %1121 = vmatmul.bf16.gmra.mxu0 %v733
      %v1122 = vpop.f32.mrf.mxu0
      %v1123 = vadd.f32 %v430, %v1122
      %v1124 = vpop.f32.mrf.mxu0
      %v1125 = vadd.f32 %v430, %v1124
      %1126 = vmatmul.bf16.gmra.mxu0 %v734
      %v1127 = vpop.f32.mrf.mxu0
      %v1128 = vadd.f32 %v430, %v1127
      %v1129 = vpop.f32.mrf.mxu0
      %v1130 = vadd.f32 %v430, %v1129
      %1131 = vmatmul.bf16.gmra.mxu0 %v735
      %v1132 = vpop.f32.mrf.mxu0
      %v1133 = vadd.f32 %v430, %v1132
      %v1134 = vpop.f32.mrf.mxu0
      %v1135 = vadd.f32 %v430, %v1134
      %1136 = vmatmul.bf16.gmra.mxu0 %v736
      %v1137 = vpop.f32.mrf.mxu0
      %v1138 = vadd.f32 %v430, %v1137
      %v1139 = vpop.f32.mrf.mxu0
      %v1140 = vadd.f32 %v430, %v1139
      %1141 = vmatmul.bf16.gmra.mxu0 %v737
      %v1142 = vpop.f32.mrf.mxu0
      %v1143 = vadd.f32 %v430, %v1142
      %v1144 = vpop.f32.mrf.mxu0
      %v1145 = vadd.f32 %v430, %v1144
      %1146 = vmatmul.bf16.gmra.mxu0 %v738
      %v1147 = vpop.f32.mrf.mxu0
      %v1148 = vadd.f32 %v430, %v1147
      %v1149 = vpop.f32.mrf.mxu0
      %v1150 = vadd.f32 %v430, %v1149
      %1151 = vmatmul.bf16.gmra.mxu0 %v739
      %v1152 = vpop.f32.mrf.mxu0
      %v1153 = vadd.f32 %v430, %v1152
      %v1154 = vpop.f32.mrf.mxu0
      %v1155 = vadd.f32 %v430, %v1154
      %1156 = vmatmul.bf16.gmra.mxu0 %v740
      %v1157 = vpop.f32.mrf.mxu0
      %v1158 = vadd.f32 %v430, %v1157
      %v1159 = vpop.f32.mrf.mxu0
      %v1160 = vadd.f32 %v430, %v1159
      %1161 = vmatmul.bf16.gmra.mxu0 %v741
      %v1162 = vpop.f32.mrf.mxu0
      %v1163 = vadd.f32 %v430, %v1162
      %v1164 = vpop.f32.mrf.mxu0
      %v1165 = vadd.f32 %v430, %v1164
      %1166 = vmatmul.bf16.gmra.mxu0 %v742
      %v1167 = vpop.f32.mrf.mxu0
      %v1168 = vadd.f32 %v430, %v1167
      %v1169 = vpop.f32.mrf.mxu0
      %v1170 = vadd.f32 %v430, %v1169
      %1171 = vmatmul.bf16.gmra.mxu0 %v743
      %v1172 = vpop.f32.mrf.mxu0
      %v1173 = vadd.f32 %v430, %v1172
      %v1174 = vpop.f32.mrf.mxu0
      %v1175 = vadd.f32 %v430, %v1174
      %1176 = vmatmul.bf16.gmra.mxu0 %v744
      %v1177 = vpop.f32.mrf.mxu0
      %v1178 = vadd.f32 %v430, %v1177
      %v1179 = vpop.f32.mrf.mxu0
      %v1180 = vadd.f32 %v430, %v1179
      %1181 = vmatmul.bf16.gmra.mxu0 %v745
      %v1182 = vpop.f32.mrf.mxu0
      %v1183 = vadd.f32 %v430, %v1182
      %v1184 = vpop.f32.mrf.mxu0
      %v1185 = vadd.f32 %v430, %v1184
      %1186 = vmatmul.bf16.gmra.mxu0 %v746
      %v1187 = vpop.f32.mrf.mxu0
      %v1188 = vadd.f32 %v430, %v1187
      %v1189 = vpop.f32.mrf.mxu0
      %v1190 = vadd.f32 %v430, %v1189
      %1191 = vmatmul.bf16.gmra.mxu0 %v747
      %v1192 = vpop.f32.mrf.mxu0
      %v1193 = vadd.f32 %v430, %v1192
      %v1194 = vpop.f32.mrf.mxu0
      %v1195 = vadd.f32 %v430, %v1194
      %1196 = vmatmul.bf16.gmra.mxu0 %v748
      %v1197 = vpop.f32.mrf.mxu0
      %v1198 = vadd.f32 %v430, %v1197
      %v1199 = vpop.f32.mrf.mxu0
      %v1200 = vadd.f32 %v430, %v1199
      %1201 = vmatmul.bf16.gmra.mxu0 %v749
      %v1202 = vpop.f32.mrf.mxu0
      %v1203 = vadd.f32 %v430, %v1202
      %v1204 = vpop.f32.mrf.mxu0
      %v1205 = vadd.f32 %v430, %v1204
      %1206 = vmatmul.bf16.gmra.mxu0 %v750
      %v1207 = vpop.f32.mrf.mxu0
      %v1208 = vadd.f32 %v430, %v1207
      %v1209 = vpop.f32.mrf.mxu0
      %v1210 = vadd.f32 %v430, %v1209
      %1211 = vmatmul.bf16.gmra.mxu0 %v751
      %v1212 = vpop.f32.mrf.mxu0
      %v1213 = vadd.f32 %v430, %v1212
      %v1214 = vpop.f32.mrf.mxu0
      %v1215 = vadd.f32 %v430, %v1214
      %1216 = vmatmul.bf16.gmra.mxu0 %v752
      %v1217 = vpop.f32.mrf.mxu0
      %v1218 = vadd.f32 %v430, %v1217
      %v1219 = vpop.f32.mrf.mxu0
      %v1220 = vadd.f32 %v430, %v1219
      %1221 = vmatmul.bf16.gmra.mxu0 %v753
      %v1222 = vpop.f32.mrf.mxu0
      %v1223 = vadd.f32 %v430, %v1222
      %v1224 = vpop.f32.mrf.mxu0
      %v1225 = vadd.f32 %v430, %v1224
      %1226 = vdwg.mxu0
      %1227 = vmatpush.bf16.msra.mxu0 %v881
      %1228 = vmatpush.bf16.msra.mxu0 %v879
      %1229 = vmatpush.bf16.msra.mxu0 %v877
      %1230 = vmatpush.bf16.msra.mxu0 %v875
      %1231 = vmatpush.bf16.msra.mxu0 %v873
      %1232 = vmatpush.bf16.msra.mxu0 %v871
      %1233 = vmatpush.bf16.msra.mxu0 %v869
      %1234 = vmatpush.bf16.msra.mxu0 %v867
      %1235 = vmatmul.bf16.gmra.mxu0 %v690
      %v1236 = vpop.f32.mrf.mxu0
      %v1237 = vadd.f32 %v431, %v1236
      %v1238 = vpop.f32.mrf.mxu0
      %v1239 = vadd.f32 %v431, %v1238
      %1240 = vmatmul.bf16.gmra.mxu0 %v691
      %v1241 = vpop.f32.mrf.mxu0
      %v1242 = vadd.f32 %v431, %v1241
      %v1243 = vpop.f32.mrf.mxu0
      %v1244 = vadd.f32 %v431, %v1243
      %1245 = vmatmul.bf16.gmra.mxu0 %v692
      %v1246 = vpop.f32.mrf.mxu0
      %v1247 = vadd.f32 %v431, %v1246
      %v1248 = vpop.f32.mrf.mxu0
      %v1249 = vadd.f32 %v431, %v1248
      %1250 = vmatmul.bf16.gmra.mxu0 %v693
      %v1251 = vpop.f32.mrf.mxu0
      %v1252 = vadd.f32 %v431, %v1251
      %v1253 = vpop.f32.mrf.mxu0
      %v1254 = vadd.f32 %v431, %v1253
      %1255 = vmatmul.bf16.gmra.mxu0 %v694
      %v1256 = vpop.f32.mrf.mxu0
      %v1257 = vadd.f32 %v431, %v1256
      %v1258 = vpop.f32.mrf.mxu0
      %v1259 = vadd.f32 %v431, %v1258
      %1260 = vmatmul.bf16.gmra.mxu0 %v695
      %v1261 = vpop.f32.mrf.mxu0
      %v1262 = vadd.f32 %v431, %v1261
      %v1263 = vpop.f32.mrf.mxu0
      %v1264 = vadd.f32 %v431, %v1263
      %1265 = vmatmul.bf16.gmra.mxu0 %v696
      %v1266 = vpop.f32.mrf.mxu0
      %v1267 = vadd.f32 %v431, %v1266
      %v1268 = vpop.f32.mrf.mxu0
      %v1269 = vadd.f32 %v431, %v1268
      %1270 = vmatmul.bf16.gmra.mxu0 %v697
      %v1271 = vpop.f32.mrf.mxu0
      %v1272 = vadd.f32 %v431, %v1271
      %v1273 = vpop.f32.mrf.mxu0
      %v1274 = vadd.f32 %v431, %v1273
      %1275 = vmatmul.bf16.gmra.mxu0 %v698
      %v1276 = vpop.f32.mrf.mxu0
      %v1277 = vadd.f32 %v431, %v1276
      %v1278 = vpop.f32.mrf.mxu0
      %v1279 = vadd.f32 %v431, %v1278
      %1280 = vmatmul.bf16.gmra.mxu0 %v699
      %v1281 = vpop.f32.mrf.mxu0
      %v1282 = vadd.f32 %v431, %v1281
      %v1283 = vpop.f32.mrf.mxu0
      %v1284 = vadd.f32 %v431, %v1283
      %1285 = vmatmul.bf16.gmra.mxu0 %v700
      %v1286 = vpop.f32.mrf.mxu0
      %v1287 = vadd.f32 %v431, %v1286
      %v1288 = vpop.f32.mrf.mxu0
      %v1289 = vadd.f32 %v431, %v1288
      %1290 = vmatmul.bf16.gmra.mxu0 %v701
      %v1291 = vpop.f32.mrf.mxu0
      %v1292 = vadd.f32 %v431, %v1291
      %v1293 = vpop.f32.mrf.mxu0
      %v1294 = vadd.f32 %v431, %v1293
      %1295 = vmatmul.bf16.gmra.mxu0 %v702
      %v1296 = vpop.f32.mrf.mxu0
      %v1297 = vadd.f32 %v431, %v1296
      %v1298 = vpop.f32.mrf.mxu0
      %v1299 = vadd.f32 %v431, %v1298
      %1300 = vmatmul.bf16.gmra.mxu0 %v703
      %v1301 = vpop.f32.mrf.mxu0
      %v1302 = vadd.f32 %v431, %v1301
      %v1303 = vpop.f32.mrf.mxu0
      %v1304 = vadd.f32 %v431, %v1303
      %1305 = vmatmul.bf16.gmra.mxu0 %v704
      %v1306 = vpop.f32.mrf.mxu0
      %v1307 = vadd.f32 %v431, %v1306
      %v1308 = vpop.f32.mrf.mxu0
      %v1309 = vadd.f32 %v431, %v1308
      %1310 = vmatmul.bf16.gmra.mxu0 %v705
      %v1311 = vpop.f32.mrf.mxu0
      %v1312 = vadd.f32 %v431, %v1311
      %v1313 = vpop.f32.mrf.mxu0
      %v1314 = vadd.f32 %v431, %v1313
      %1315 = vmatmul.bf16.gmra.mxu0 %v706
      %v1316 = vpop.f32.mrf.mxu0
      %v1317 = vadd.f32 %v431, %v1316
      %v1318 = vpop.f32.mrf.mxu0
      %v1319 = vadd.f32 %v431, %v1318
      %1320 = vmatmul.bf16.gmra.mxu0 %v707
      %v1321 = vpop.f32.mrf.mxu0
      %v1322 = vadd.f32 %v431, %v1321
      %v1323 = vpop.f32.mrf.mxu0
      %v1324 = vadd.f32 %v431, %v1323
      %1325 = vmatmul.bf16.gmra.mxu0 %v708
      %v1326 = vpop.f32.mrf.mxu0
      %v1327 = vadd.f32 %v431, %v1326
      %v1328 = vpop.f32.mrf.mxu0
      %v1329 = vadd.f32 %v431, %v1328
      %1330 = vmatmul.bf16.gmra.mxu0 %v709
      %v1331 = vpop.f32.mrf.mxu0
      %v1332 = vadd.f32 %v431, %v1331
      %v1333 = vpop.f32.mrf.mxu0
      %v1334 = vadd.f32 %v431, %v1333
      %1335 = vmatmul.bf16.gmra.mxu0 %v710
      %v1336 = vpop.f32.mrf.mxu0
      %v1337 = vadd.f32 %v431, %v1336
      %v1338 = vpop.f32.mrf.mxu0
      %v1339 = vadd.f32 %v431, %v1338
      %1340 = vmatmul.bf16.gmra.mxu0 %v711
      %v1341 = vpop.f32.mrf.mxu0
      %v1342 = vadd.f32 %v431, %v1341
      %v1343 = vpop.f32.mrf.mxu0
      %v1344 = vadd.f32 %v431, %v1343
      %1345 = vmatmul.bf16.gmra.mxu0 %v712
      %v1346 = vpop.f32.mrf.mxu0
      %v1347 = vadd.f32 %v431, %v1346
      %v1348 = vpop.f32.mrf.mxu0
      %v1349 = vadd.f32 %v431, %v1348
      %1350 = vmatmul.bf16.gmra.mxu0 %v713
      %v1351 = vpop.f32.mrf.mxu0
      %v1352 = vadd.f32 %v431, %v1351
      %v1353 = vpop.f32.mrf.mxu0
      %v1354 = vadd.f32 %v431, %v1353
      %1355 = vmatmul.bf16.gmra.mxu0 %v714
      %v1356 = vpop.f32.mrf.mxu0
      %v1357 = vadd.f32 %v431, %v1356
      %v1358 = vpop.f32.mrf.mxu0
      %v1359 = vadd.f32 %v431, %v1358
      %1360 = vmatmul.bf16.gmra.mxu0 %v715
      %v1361 = vpop.f32.mrf.mxu0
      %v1362 = vadd.f32 %v431, %v1361
      %v1363 = vpop.f32.mrf.mxu0
      %v1364 = vadd.f32 %v431, %v1363
      %1365 = vmatmul.bf16.gmra.mxu0 %v716
      %v1366 = vpop.f32.mrf.mxu0
      %v1367 = vadd.f32 %v431, %v1366
      %v1368 = vpop.f32.mrf.mxu0
      %v1369 = vadd.f32 %v431, %v1368
      %1370 = vmatmul.bf16.gmra.mxu0 %v717
      %v1371 = vpop.f32.mrf.mxu0
      %v1372 = vadd.f32 %v431, %v1371
      %v1373 = vpop.f32.mrf.mxu0
      %v1374 = vadd.f32 %v431, %v1373
      %1375 = vmatmul.bf16.gmra.mxu0 %v718
      %v1376 = vpop.f32.mrf.mxu0
      %v1377 = vadd.f32 %v431, %v1376
      %v1378 = vpop.f32.mrf.mxu0
      %v1379 = vadd.f32 %v431, %v1378
      %1380 = vmatmul.bf16.gmra.mxu0 %v719
      %v1381 = vpop.f32.mrf.mxu0
      %v1382 = vadd.f32 %v431, %v1381
      %v1383 = vpop.f32.mrf.mxu0
      %v1384 = vadd.f32 %v431, %v1383
      %1385 = vmatmul.bf16.gmra.mxu0 %v720
      %v1386 = vpop.f32.mrf.mxu0
      %v1387 = vadd.f32 %v431, %v1386
      %v1388 = vpop.f32.mrf.mxu0
      %v1389 = vadd.f32 %v431, %v1388
      %1390 = vmatmul.bf16.gmra.mxu0 %v721
      %v1391 = vpop.f32.mrf.mxu0
      %v1392 = vadd.f32 %v431, %v1391
      %v1393 = vpop.f32.mrf.mxu0
      %v1394 = vadd.f32 %v431, %v1393
      %1395 = vmatmul.bf16.gmra.mxu0 %v722
      %v1396 = vpop.f32.mrf.mxu0
      %v1397 = vadd.f32 %v431, %v1396
      %v1398 = vpop.f32.mrf.mxu0
      %v1399 = vadd.f32 %v431, %v1398
      %1400 = vmatmul.bf16.gmra.mxu0 %v723
      %v1401 = vpop.f32.mrf.mxu0
      %v1402 = vadd.f32 %v431, %v1401
      %v1403 = vpop.f32.mrf.mxu0
      %v1404 = vadd.f32 %v431, %v1403
      %1405 = vmatmul.bf16.gmra.mxu0 %v724
      %v1406 = vpop.f32.mrf.mxu0
      %v1407 = vadd.f32 %v431, %v1406
      %v1408 = vpop.f32.mrf.mxu0
      %v1409 = vadd.f32 %v431, %v1408
      %1410 = vmatmul.bf16.gmra.mxu0 %v725
      %v1411 = vpop.f32.mrf.mxu0
      %v1412 = vadd.f32 %v431, %v1411
      %v1413 = vpop.f32.mrf.mxu0
      %v1414 = vadd.f32 %v431, %v1413
      %1415 = vmatmul.bf16.gmra.mxu0 %v726
      %v1416 = vpop.f32.mrf.mxu0
      %v1417 = vadd.f32 %v431, %v1416
      %v1418 = vpop.f32.mrf.mxu0
      %v1419 = vadd.f32 %v431, %v1418
      %1420 = vmatmul.bf16.gmra.mxu0 %v727
      %v1421 = vpop.f32.mrf.mxu0
      %v1422 = vadd.f32 %v431, %v1421
      %v1423 = vpop.f32.mrf.mxu0
      %v1424 = vadd.f32 %v431, %v1423
      %1425 = vmatmul.bf16.gmra.mxu0 %v728
      %v1426 = vpop.f32.mrf.mxu0
      %v1427 = vadd.f32 %v431, %v1426
      %v1428 = vpop.f32.mrf.mxu0
      %v1429 = vadd.f32 %v431, %v1428
      %1430 = vmatmul.bf16.gmra.mxu0 %v729
      %v1431 = vpop.f32.mrf.mxu0
      %v1432 = vadd.f32 %v431, %v1431
      %v1433 = vpop.f32.mrf.mxu0
      %v1434 = vadd.f32 %v431, %v1433
      %1435 = vmatmul.bf16.gmra.mxu0 %v730
      %v1436 = vpop.f32.mrf.mxu0
      %v1437 = vadd.f32 %v431, %v1436
      %v1438 = vpop.f32.mrf.mxu0
      %v1439 = vadd.f32 %v431, %v1438
      %1440 = vmatmul.bf16.gmra.mxu0 %v731
      %v1441 = vpop.f32.mrf.mxu0
      %v1442 = vadd.f32 %v431, %v1441
      %v1443 = vpop.f32.mrf.mxu0
      %v1444 = vadd.f32 %v431, %v1443
      %1445 = vmatmul.bf16.gmra.mxu0 %v732
      %v1446 = vpop.f32.mrf.mxu0
      %v1447 = vadd.f32 %v431, %v1446
      %v1448 = vpop.f32.mrf.mxu0
      %v1449 = vadd.f32 %v431, %v1448
      %1450 = vmatmul.bf16.gmra.mxu0 %v733
      %v1451 = vpop.f32.mrf.mxu0
      %v1452 = vadd.f32 %v431, %v1451
      %v1453 = vpop.f32.mrf.mxu0
      %v1454 = vadd.f32 %v431, %v1453
      %1455 = vmatmul.bf16.gmra.mxu0 %v734
      %v1456 = vpop.f32.mrf.mxu0
      %v1457 = vadd.f32 %v431, %v1456
      %v1458 = vpop.f32.mrf.mxu0
      %v1459 = vadd.f32 %v431, %v1458
      %1460 = vmatmul.bf16.gmra.mxu0 %v735
      %v1461 = vpop.f32.mrf.mxu0
      %v1462 = vadd.f32 %v431, %v1461
      %v1463 = vpop.f32.mrf.mxu0
      %v1464 = vadd.f32 %v431, %v1463
      %1465 = vmatmul.bf16.gmra.mxu0 %v736
      %v1466 = vpop.f32.mrf.mxu0
      %v1467 = vadd.f32 %v431, %v1466
      %v1468 = vpop.f32.mrf.mxu0
      %v1469 = vadd.f32 %v431, %v1468
      %1470 = vmatmul.bf16.gmra.mxu0 %v737
      %v1471 = vpop.f32.mrf.mxu0
      %v1472 = vadd.f32 %v431, %v1471
      %v1473 = vpop.f32.mrf.mxu0
      %v1474 = vadd.f32 %v431, %v1473
      %1475 = vmatmul.bf16.gmra.mxu0 %v738
      %v1476 = vpop.f32.mrf.mxu0
      %v1477 = vadd.f32 %v431, %v1476
      %v1478 = vpop.f32.mrf.mxu0
      %v1479 = vadd.f32 %v431, %v1478
      %1480 = vmatmul.bf16.gmra.mxu0 %v739
      %v1481 = vpop.f32.mrf.mxu0
      %v1482 = vadd.f32 %v431, %v1481
      %v1483 = vpop.f32.mrf.mxu0
      %v1484 = vadd.f32 %v431, %v1483
      %1485 = vmatmul.bf16.gmra.mxu0 %v740
      %v1486 = vpop.f32.mrf.mxu0
      %v1487 = vadd.f32 %v431, %v1486
      %v1488 = vpop.f32.mrf.mxu0
      %v1489 = vadd.f32 %v431, %v1488
      %1490 = vmatmul.bf16.gmra.mxu0 %v741
      %v1491 = vpop.f32.mrf.mxu0
      %v1492 = vadd.f32 %v431, %v1491
      %v1493 = vpop.f32.mrf.mxu0
      %v1494 = vadd.f32 %v431, %v1493
      %1495 = vmatmul.bf16.gmra.mxu0 %v742
      %v1496 = vpop.f32.mrf.mxu0
      %v1497 = vadd.f32 %v431, %v1496
      %v1498 = vpop.f32.mrf.mxu0
      %v1499 = vadd.f32 %v431, %v1498
      %1500 = vmatmul.bf16.gmra.mxu0 %v743
      %v1501 = vpop.f32.mrf.mxu0
      %v1502 = vadd.f32 %v431, %v1501
      %v1503 = vpop.f32.mrf.mxu0
      %v1504 = vadd.f32 %v431, %v1503
      %1505 = vmatmul.bf16.gmra.mxu0 %v744
      %v1506 = vpop.f32.mrf.mxu0
      %v1507 = vadd.f32 %v431, %v1506
      %v1508 = vpop.f32.mrf.mxu0
      %v1509 = vadd.f32 %v431, %v1508
      %1510 = vmatmul.bf16.gmra.mxu0 %v745
      %v1511 = vpop.f32.mrf.mxu0
      %v1512 = vadd.f32 %v431, %v1511
      %v1513 = vpop.f32.mrf.mxu0
      %v1514 = vadd.f32 %v431, %v1513
      %1515 = vmatmul.bf16.gmra.mxu0 %v746
      %v1516 = vpop.f32.mrf.mxu0
      %v1517 = vadd.f32 %v431, %v1516
      %v1518 = vpop.f32.mrf.mxu0
      %v1519 = vadd.f32 %v431, %v1518
      %1520 = vmatmul.bf16.gmra.mxu0 %v747
      %v1521 = vpop.f32.mrf.mxu0
      %v1522 = vadd.f32 %v431, %v1521
      %v1523 = vpop.f32.mrf.mxu0
      %v1524 = vadd.f32 %v431, %v1523
      %1525 = vmatmul.bf16.gmra.mxu0 %v748
      %v1526 = vpop.f32.mrf.mxu0
      %v1527 = vadd.f32 %v431, %v1526
      %v1528 = vpop.f32.mrf.mxu0
      %v1529 = vadd.f32 %v431, %v1528
      %1530 = vmatmul.bf16.gmra.mxu0 %v749
      %v1531 = vpop.f32.mrf.mxu0
      %v1532 = vadd.f32 %v431, %v1531
      %v1533 = vpop.f32.mrf.mxu0
      %v1534 = vadd.f32 %v431, %v1533
      %1535 = vmatmul.bf16.gmra.mxu0 %v750
      %v1536 = vpop.f32.mrf.mxu0
      %v1537 = vadd.f32 %v431, %v1536
      %v1538 = vpop.f32.mrf.mxu0
      %v1539 = vadd.f32 %v431, %v1538
      %1540 = vmatmul.bf16.gmra.mxu0 %v751
      %v1541 = vpop.f32.mrf.mxu0
      %v1542 = vadd.f32 %v431, %v1541
      %v1543 = vpop.f32.mrf.mxu0
      %v1544 = vadd.f32 %v431, %v1543
      %1545 = vmatmul.bf16.gmra.mxu0 %v752
      %v1546 = vpop.f32.mrf.mxu0
      %v1547 = vadd.f32 %v431, %v1546
      %v1548 = vpop.f32.mrf.mxu0
      %v1549 = vadd.f32 %v431, %v1548
      %1550 = vmatmul.bf16.gmra.mxu0 %v753
      %v1551 = vpop.f32.mrf.mxu0
      %v1552 = vadd.f32 %v431, %v1551
      %v1553 = vpop.f32.mrf.mxu0
      %v1554 = vadd.f32 %v431, %v1553
      %1555 = vdwg.mxu0
      %v1556 = vmax.f32 %v908, 0.0
      %v1557 = vmax.f32 %v1237, 0.0
      %v1558 = vmax.f32 %v910, 0.0
      %v1559 = vmax.f32 %v1239, 0.0
      %v1560 = vmax.f32 %v913, 0.0
      %v1561 = vmax.f32 %v1242, 0.0
      %v1562 = vmax.f32 %v915, 0.0
      %v1563 = vmax.f32 %v1244, 0.0
      %v1564 = vmax.f32 %v918, 0.0
      %v1565 = vmax.f32 %v1247, 0.0
      %v1566 = vmax.f32 %v920, 0.0
      %v1567 = vmax.f32 %v1249, 0.0
      %v1568 = vmax.f32 %v923, 0.0
      %v1569 = vmax.f32 %v1252, 0.0
      %v1570 = vmax.f32 %v925, 0.0
      %v1571 = vmax.f32 %v1254, 0.0
      %v1572 = vmax.f32 %v928, 0.0
      %v1573 = vmax.f32 %v1257, 0.0
      %v1574 = vmax.f32 %v930, 0.0
      %v1575 = vmax.f32 %v1259, 0.0
      %v1576 = vmax.f32 %v933, 0.0
      %v1577 = vmax.f32 %v1262, 0.0
      %v1578 = vmax.f32 %v935, 0.0
      %v1579 = vmax.f32 %v1264, 0.0
      %v1580 = vmax.f32 %v938, 0.0
      %v1581 = vmax.f32 %v1267, 0.0
      %v1582 = vmax.f32 %v940, 0.0
      %v1583 = vmax.f32 %v1269, 0.0
      %v1584 = vmax.f32 %v943, 0.0
      %v1585 = vmax.f32 %v1272, 0.0
      %v1586 = vmax.f32 %v945, 0.0
      %v1587 = vmax.f32 %v1274, 0.0
      %v1588 = vmax.f32 %v948, 0.0
      %v1589 = vmax.f32 %v1277, 0.0
      %v1590 = vmax.f32 %v950, 0.0
      %v1591 = vmax.f32 %v1279, 0.0
      %v1592 = vmax.f32 %v953, 0.0
      %v1593 = vmax.f32 %v1282, 0.0
      %v1594 = vmax.f32 %v955, 0.0
      %v1595 = vmax.f32 %v1284, 0.0
      %v1596 = vmax.f32 %v958, 0.0
      %v1597 = vmax.f32 %v1287, 0.0
      %v1598 = vmax.f32 %v960, 0.0
      %v1599 = vmax.f32 %v1289, 0.0
      %v1600 = vmax.f32 %v963, 0.0
      %v1601 = vmax.f32 %v1292, 0.0
      %v1602 = vmax.f32 %v965, 0.0
      %v1603 = vmax.f32 %v1294, 0.0
      %v1604 = vmax.f32 %v968, 0.0
      %v1605 = vmax.f32 %v1297, 0.0
      %v1606 = vmax.f32 %v970, 0.0
      %v1607 = vmax.f32 %v1299, 0.0
      %v1608 = vmax.f32 %v973, 0.0
      %v1609 = vmax.f32 %v1302, 0.0
      %v1610 = vmax.f32 %v975, 0.0
      %v1611 = vmax.f32 %v1304, 0.0
      %v1612 = vmax.f32 %v978, 0.0
      %v1613 = vmax.f32 %v1307, 0.0
      %v1614 = vmax.f32 %v980, 0.0
      %v1615 = vmax.f32 %v1309, 0.0
      %v1616 = vmax.f32 %v983, 0.0
      %v1617 = vmax.f32 %v1312, 0.0
      %v1618 = vmax.f32 %v985, 0.0
      %v1619 = vmax.f32 %v1314, 0.0
      %v1620 = vmax.f32 %v988, 0.0
      %v1621 = vmax.f32 %v1317, 0.0
      %v1622 = vmax.f32 %v990, 0.0
      %v1623 = vmax.f32 %v1319, 0.0
      %v1624 = vmax.f32 %v993, 0.0
      %v1625 = vmax.f32 %v1322, 0.0
      %v1626 = vmax.f32 %v995, 0.0
      %v1627 = vmax.f32 %v1324, 0.0
      %v1628 = vmax.f32 %v998, 0.0
      %v1629 = vmax.f32 %v1327, 0.0
      %v1630 = vmax.f32 %v1000, 0.0
      %v1631 = vmax.f32 %v1329, 0.0
      %v1632 = vmax.f32 %v1003, 0.0
      %v1633 = vmax.f32 %v1332, 0.0
      %v1634 = vmax.f32 %v1005, 0.0
      %v1635 = vmax.f32 %v1334, 0.0
      %v1636 = vmax.f32 %v1008, 0.0
      %v1637 = vmax.f32 %v1337, 0.0
      %v1638 = vmax.f32 %v1010, 0.0
      %v1639 = vmax.f32 %v1339, 0.0
      %v1640 = vmax.f32 %v1013, 0.0
      %v1641 = vmax.f32 %v1342, 0.0
      %v1642 = vmax.f32 %v1015, 0.0
      %v1643 = vmax.f32 %v1344, 0.0
      %v1644 = vmax.f32 %v1018, 0.0
      %v1645 = vmax.f32 %v1347, 0.0
      %v1646 = vmax.f32 %v1020, 0.0
      %v1647 = vmax.f32 %v1349, 0.0
      %v1648 = vmax.f32 %v1023, 0.0
      %v1649 = vmax.f32 %v1352, 0.0
      %v1650 = vmax.f32 %v1025, 0.0
      %v1651 = vmax.f32 %v1354, 0.0
      %v1652 = vmax.f32 %v1028, 0.0
      %v1653 = vmax.f32 %v1357, 0.0
      %v1654 = vmax.f32 %v1030, 0.0
      %v1655 = vmax.f32 %v1359, 0.0
      %v1656 = vmax.f32 %v1033, 0.0
      %v1657 = vmax.f32 %v1362, 0.0
      %v1658 = vmax.f32 %v1035, 0.0
      %v1659 = vmax.f32 %v1364, 0.0
      %v1660 = vmax.f32 %v1038, 0.0
      %v1661 = vmax.f32 %v1367, 0.0
      %v1662 = vmax.f32 %v1040, 0.0
      %v1663 = vmax.f32 %v1369, 0.0
      %v1664 = vmax.f32 %v1043, 0.0
      %v1665 = vmax.f32 %v1372, 0.0
      %v1666 = vmax.f32 %v1045, 0.0
      %v1667 = vmax.f32 %v1374, 0.0
      %v1668 = vmax.f32 %v1048, 0.0
      %v1669 = vmax.f32 %v1377, 0.0
      %v1670 = vmax.f32 %v1050, 0.0
      %v1671 = vmax.f32 %v1379, 0.0
      %v1672 = vmax.f32 %v1053, 0.0
      %v1673 = vmax.f32 %v1382, 0.0
      %v1674 = vmax.f32 %v1055, 0.0
      %v1675 = vmax.f32 %v1384, 0.0
      %v1676 = vmax.f32 %v1058, 0.0
      %v1677 = vmax.f32 %v1387, 0.0
      %v1678 = vmax.f32 %v1060, 0.0
      %v1679 = vmax.f32 %v1389, 0.0
      %v1680 = vmax.f32 %v1063, 0.0
      %v1681 = vmax.f32 %v1392, 0.0
      %v1682 = vmax.f32 %v1065, 0.0
      %v1683 = vmax.f32 %v1394, 0.0
      %v1684 = vmax.f32 %v1068, 0.0
      %v1685 = vmax.f32 %v1397, 0.0
      %v1686 = vmax.f32 %v1070, 0.0
      %v1687 = vmax.f32 %v1399, 0.0
      %v1688 = vmax.f32 %v1073, 0.0
      %v1689 = vmax.f32 %v1402, 0.0
      %v1690 = vmax.f32 %v1075, 0.0
      %v1691 = vmax.f32 %v1404, 0.0
      %v1692 = vmax.f32 %v1078, 0.0
      %v1693 = vmax.f32 %v1407, 0.0
      %v1694 = vmax.f32 %v1080, 0.0
      %v1695 = vmax.f32 %v1409, 0.0
      %v1696 = vmax.f32 %v1083, 0.0
      %v1697 = vmax.f32 %v1412, 0.0
      %v1698 = vmax.f32 %v1085, 0.0
      %v1699 = vmax.f32 %v1414, 0.0
      %v1700 = vmax.f32 %v1088, 0.0
      %v1701 = vmax.f32 %v1417, 0.0
      %v1702 = vmax.f32 %v1090, 0.0
      %v1703 = vmax.f32 %v1419, 0.0
      %v1704 = vmax.f32 %v1093, 0.0
      %v1705 = vmax.f32 %v1422, 0.0
      %v1706 = vmax.f32 %v1095, 0.0
      %v1707 = vmax.f32 %v1424, 0.0
      %v1708 = vmax.f32 %v1098, 0.0
      %v1709 = vmax.f32 %v1427, 0.0
      %v1710 = vmax.f32 %v1100, 0.0
      %v1711 = vmax.f32 %v1429, 0.0
      %v1712 = vmax.f32 %v1103, 0.0
      %v1713 = vmax.f32 %v1432, 0.0
      %v1714 = vmax.f32 %v1105, 0.0
      %v1715 = vmax.f32 %v1434, 0.0
      %v1716 = vmax.f32 %v1108, 0.0
      %v1717 = vmax.f32 %v1437, 0.0
      %v1718 = vmax.f32 %v1110, 0.0
      %v1719 = vmax.f32 %v1439, 0.0
      %v1720 = vmax.f32 %v1113, 0.0
      %v1721 = vmax.f32 %v1442, 0.0
      %v1722 = vmax.f32 %v1115, 0.0
      %v1723 = vmax.f32 %v1444, 0.0
      %v1724 = vmax.f32 %v1118, 0.0
      %v1725 = vmax.f32 %v1447, 0.0
      %v1726 = vmax.f32 %v1120, 0.0
      %v1727 = vmax.f32 %v1449, 0.0
      %v1728 = vmax.f32 %v1123, 0.0
      %v1729 = vmax.f32 %v1452, 0.0
      %v1730 = vmax.f32 %v1125, 0.0
      %v1731 = vmax.f32 %v1454, 0.0
      %v1732 = vmax.f32 %v1128, 0.0
      %v1733 = vmax.f32 %v1457, 0.0
      %v1734 = vmax.f32 %v1130, 0.0
      %v1735 = vmax.f32 %v1459, 0.0
      %v1736 = vmax.f32 %v1133, 0.0
      %v1737 = vmax.f32 %v1462, 0.0
      %v1738 = vmax.f32 %v1135, 0.0
      %v1739 = vmax.f32 %v1464, 0.0
      %v1740 = vmax.f32 %v1138, 0.0
      %v1741 = vmax.f32 %v1467, 0.0
      %v1742 = vmax.f32 %v1140, 0.0
      %v1743 = vmax.f32 %v1469, 0.0
      %v1744 = vmax.f32 %v1143, 0.0
      %v1745 = vmax.f32 %v1472, 0.0
      %v1746 = vmax.f32 %v1145, 0.0
      %v1747 = vmax.f32 %v1474, 0.0
      %v1748 = vmax.f32 %v1148, 0.0
      %v1749 = vmax.f32 %v1477, 0.0
      %v1750 = vmax.f32 %v1150, 0.0
      %v1751 = vmax.f32 %v1479, 0.0
      %v1752 = vmax.f32 %v1153, 0.0
      %v1753 = vmax.f32 %v1482, 0.0
      %v1754 = vmax.f32 %v1155, 0.0
      %v1755 = vmax.f32 %v1484, 0.0
      %v1756 = vmax.f32 %v1158, 0.0
      %v1757 = vmax.f32 %v1487, 0.0
      %v1758 = vmax.f32 %v1160, 0.0
      %v1759 = vmax.f32 %v1489, 0.0
      %v1760 = vmax.f32 %v1163, 0.0
      %v1761 = vmax.f32 %v1492, 0.0
      %v1762 = vmax.f32 %v1165, 0.0
      %v1763 = vmax.f32 %v1494, 0.0
      %v1764 = vmax.f32 %v1168, 0.0
      %v1765 = vmax.f32 %v1497, 0.0
      %v1766 = vmax.f32 %v1170, 0.0
      %v1767 = vmax.f32 %v1499, 0.0
      %v1768 = vmax.f32 %v1173, 0.0
      %v1769 = vmax.f32 %v1502, 0.0
      %v1770 = vmax.f32 %v1175, 0.0
      %v1771 = vmax.f32 %v1504, 0.0
      %v1772 = vmax.f32 %v1178, 0.0
      %v1773 = vmax.f32 %v1507, 0.0
      %v1774 = vmax.f32 %v1180, 0.0
      %v1775 = vmax.f32 %v1509, 0.0
      %v1776 = vmax.f32 %v1183, 0.0
      %v1777 = vmax.f32 %v1512, 0.0
      %v1778 = vmax.f32 %v1185, 0.0
      %v1779 = vmax.f32 %v1514, 0.0
      %v1780 = vmax.f32 %v1188, 0.0
      %v1781 = vmax.f32 %v1517, 0.0
      %v1782 = vmax.f32 %v1190, 0.0
      %v1783 = vmax.f32 %v1519, 0.0
      %v1784 = vmax.f32 %v1193, 0.0
      %v1785 = vmax.f32 %v1522, 0.0
      %v1786 = vmax.f32 %v1195, 0.0
      %v1787 = vmax.f32 %v1524, 0.0
      %v1788 = vmax.f32 %v1198, 0.0
      %v1789 = vmax.f32 %v1527, 0.0
      %v1790 = vmax.f32 %v1200, 0.0
      %v1791 = vmax.f32 %v1529, 0.0
      %v1792 = vmax.f32 %v1203, 0.0
      %v1793 = vmax.f32 %v1532, 0.0
      %v1794 = vmax.f32 %v1205, 0.0
      %v1795 = vmax.f32 %v1534, 0.0
      %v1796 = vmax.f32 %v1208, 0.0
      %v1797 = vmax.f32 %v1537, 0.0
      %v1798 = vmax.f32 %v1210, 0.0
      %v1799 = vmax.f32 %v1539, 0.0
      %v1800 = vmax.f32 %v1213, 0.0
      %v1801 = vmax.f32 %v1542, 0.0
      %v1802 = vmax.f32 %v1215, 0.0
      %v1803 = vmax.f32 %v1544, 0.0
      %v1804 = vmax.f32 %v1218, 0.0
      %v1805 = vmax.f32 %v1547, 0.0
      %v1806 = vmax.f32 %v1220, 0.0
      %v1807 = vmax.f32 %v1549, 0.0
      %v1808 = vmax.f32 %v1223, 0.0
      %v1809 = vmax.f32 %v1552, 0.0
      %v1810 = vmax.f32 %v1225, 0.0
      %v1811 = vmax.f32 %v1554, 0.0
      %v1812 = vpack.c.bf16 %v1558, %v1556
      %v1813 = vpack.c.bf16 %v1559, %v1557
      %v1814 = vpack.c.bf16 %v1562, %v1560
      %v1815 = vpack.c.bf16 %v1563, %v1561
      %v1816 = vpack.c.bf16 %v1566, %v1564
      %v1817 = vpack.c.bf16 %v1567, %v1565
      %v1818 = vpack.c.bf16 %v1570, %v1568
      %v1819 = vpack.c.bf16 %v1571, %v1569
      %v1820 = vpack.c.bf16 %v1574, %v1572
      %v1821 = vpack.c.bf16 %v1575, %v1573
      %v1822 = vpack.c.bf16 %v1578, %v1576
      %v1823 = vpack.c.bf16 %v1579, %v1577
      %v1824 = vpack.c.bf16 %v1582, %v1580
      %v1825 = vpack.c.bf16 %v1583, %v1581
      %v1826 = vpack.c.bf16 %v1586, %v1584
      %v1827 = vpack.c.bf16 %v1587, %v1585
      %v1828 = vpack.c.bf16 %v1590, %v1588
      %v1829 = vpack.c.bf16 %v1591, %v1589
      %v1830 = vpack.c.bf16 %v1594, %v1592
      %v1831 = vpack.c.bf16 %v1595, %v1593
      %v1832 = vpack.c.bf16 %v1598, %v1596
      %v1833 = vpack.c.bf16 %v1599, %v1597
      %v1834 = vpack.c.bf16 %v1602, %v1600
      %v1835 = vpack.c.bf16 %v1603, %v1601
      %v1836 = vpack.c.bf16 %v1606, %v1604
      %v1837 = vpack.c.bf16 %v1607, %v1605
      %v1838 = vpack.c.bf16 %v1610, %v1608
      %v1839 = vpack.c.bf16 %v1611, %v1609
      %v1840 = vpack.c.bf16 %v1614, %v1612
      %v1841 = vpack.c.bf16 %v1615, %v1613
      %v1842 = vpack.c.bf16 %v1618, %v1616
      %v1843 = vpack.c.bf16 %v1619, %v1617
      %v1844 = vpack.c.bf16 %v1622, %v1620
      %v1845 = vpack.c.bf16 %v1623, %v1621
      %v1846 = vpack.c.bf16 %v1626, %v1624
      %v1847 = vpack.c.bf16 %v1627, %v1625
      %v1848 = vpack.c.bf16 %v1630, %v1628
      %v1849 = vpack.c.bf16 %v1631, %v1629
      %v1850 = vpack.c.bf16 %v1634, %v1632
      %v1851 = vpack.c.bf16 %v1635, %v1633
      %v1852 = vpack.c.bf16 %v1638, %v1636
      %v1853 = vpack.c.bf16 %v1639, %v1637
      %v1854 = vpack.c.bf16 %v1642, %v1640
      %v1855 = vpack.c.bf16 %v1643, %v1641
      %v1856 = vpack.c.bf16 %v1646, %v1644
      %v1857 = vpack.c.bf16 %v1647, %v1645
      %v1858 = vpack.c.bf16 %v1650, %v1648
      %v1859 = vpack.c.bf16 %v1651, %v1649
      %v1860 = vpack.c.bf16 %v1654, %v1652
      %v1861 = vpack.c.bf16 %v1655, %v1653
      %v1862 = vpack.c.bf16 %v1658, %v1656
      %v1863 = vpack.c.bf16 %v1659, %v1657
      %v1864 = vpack.c.bf16 %v1662, %v1660
      %v1865 = vpack.c.bf16 %v1663, %v1661
      %v1866 = vpack.c.bf16 %v1666, %v1664
      %v1867 = vpack.c.bf16 %v1667, %v1665
      %v1868 = vpack.c.bf16 %v1670, %v1668
      %v1869 = vpack.c.bf16 %v1671, %v1669
      %v1870 = vpack.c.bf16 %v1674, %v1672
      %v1871 = vpack.c.bf16 %v1675, %v1673
      %v1872 = vpack.c.bf16 %v1678, %v1676
      %v1873 = vpack.c.bf16 %v1679, %v1677
      %v1874 = vpack.c.bf16 %v1682, %v1680
      %v1875 = vpack.c.bf16 %v1683, %v1681
      %v1876 = vpack.c.bf16 %v1686, %v1684
      %v1877 = vpack.c.bf16 %v1687, %v1685
      %v1878 = vpack.c.bf16 %v1690, %v1688
      %v1879 = vpack.c.bf16 %v1691, %v1689
      %v1880 = vpack.c.bf16 %v1694, %v1692
      %v1881 = vpack.c.bf16 %v1695, %v1693
      %v1882 = vpack.c.bf16 %v1698, %v1696
      %v1883 = vpack.c.bf16 %v1699, %v1697
      %v1884 = vpack.c.bf16 %v1702, %v1700
      %v1885 = vpack.c.bf16 %v1703, %v1701
      %v1886 = vpack.c.bf16 %v1706, %v1704
      %v1887 = vpack.c.bf16 %v1707, %v1705
      %v1888 = vpack.c.bf16 %v1710, %v1708
      %v1889 = vpack.c.bf16 %v1711, %v1709
      %v1890 = vpack.c.bf16 %v1714, %v1712
      %v1891 = vpack.c.bf16 %v1715, %v1713
      %v1892 = vpack.c.bf16 %v1718, %v1716
      %v1893 = vpack.c.bf16 %v1719, %v1717
      %v1894 = vpack.c.bf16 %v1722, %v1720
      %v1895 = vpack.c.bf16 %v1723, %v1721
      %v1896 = vpack.c.bf16 %v1726, %v1724
      %v1897 = vpack.c.bf16 %v1727, %v1725
      %v1898 = vpack.c.bf16 %v1730, %v1728
      %v1899 = vpack.c.bf16 %v1731, %v1729
      %v1900 = vpack.c.bf16 %v1734, %v1732
      %v1901 = vpack.c.bf16 %v1735, %v1733
      %v1902 = vpack.c.bf16 %v1738, %v1736
      %v1903 = vpack.c.bf16 %v1739, %v1737
      %v1904 = vpack.c.bf16 %v1742, %v1740
      %v1905 = vpack.c.bf16 %v1743, %v1741
      %v1906 = vpack.c.bf16 %v1746, %v1744
      %v1907 = vpack.c.bf16 %v1747, %v1745
      %v1908 = vpack.c.bf16 %v1750, %v1748
      %v1909 = vpack.c.bf16 %v1751, %v1749
      %v1910 = vpack.c.bf16 %v1754, %v1752
      %v1911 = vpack.c.bf16 %v1755, %v1753
      %v1912 = vpack.c.bf16 %v1758, %v1756
      %v1913 = vpack.c.bf16 %v1759, %v1757
      %v1914 = vpack.c.bf16 %v1762, %v1760
      %v1915 = vpack.c.bf16 %v1763, %v1761
      %v1916 = vpack.c.bf16 %v1766, %v1764
      %v1917 = vpack.c.bf16 %v1767, %v1765
      %v1918 = vpack.c.bf16 %v1770, %v1768
      %v1919 = vpack.c.bf16 %v1771, %v1769
      %v1920 = vpack.c.bf16 %v1774, %v1772
      %v1921 = vpack.c.bf16 %v1775, %v1773
      %v1922 = vpack.c.bf16 %v1778, %v1776
      %v1923 = vpack.c.bf16 %v1779, %v1777
      %v1924 = vpack.c.bf16 %v1782, %v1780
      %v1925 = vpack.c.bf16 %v1783, %v1781
      %v1926 = vpack.c.bf16 %v1786, %v1784
      %v1927 = vpack.c.bf16 %v1787, %v1785
      %v1928 = vpack.c.bf16 %v1790, %v1788
      %v1929 = vpack.c.bf16 %v1791, %v1789
      %v1930 = vpack.c.bf16 %v1794, %v1792
      %v1931 = vpack.c.bf16 %v1795, %v1793
      %v1932 = vpack.c.bf16 %v1798, %v1796
      %v1933 = vpack.c.bf16 %v1799, %v1797
      %v1934 = vpack.c.bf16 %v1802, %v1800
      %v1935 = vpack.c.bf16 %v1803, %v1801
      %v1936 = vpack.c.bf16 %v1806, %v1804
      %v1937 = vpack.c.bf16 %v1807, %v1805
      %v1938 = vpack.c.bf16 %v1810, %v1808
      %v1939 = vpack.c.bf16 %v1811, %v1809
      %v1940 = vld [vmem:[%s3] sm:$0xf]
      %v1941 = vld [vmem:[%s3 + $0x4] sm:$0xf]
      %v1942 = vld [vmem:[%s3 + $0x8] sm:$0xf]
      %v1943 = vld [vmem:[%s3 + $0xc] sm:$0xf]
      %v1944 = vld [vmem:[%s3 + $0x10] sm:$0xf]
      %v1945 = vld [vmem:[%s3 + $0x14] sm:$0xf]
      %v1946 = vld [vmem:[%s3 + $0x18] sm:$0xf]
      %v1947 = vld [vmem:[%s3 + $0x1c] sm:$0xf]
      %v1948 = vld [vmem:[%s3 + $0x20] sm:$0xf]
      %v1949 = vld [vmem:[%s3 + $0x24] sm:$0xf]
      %v1950 = vld [vmem:[%s3 + $0x28] sm:$0xf]
      %v1951 = vld [vmem:[%s3 + $0x2c] sm:$0xf]
      %v1952 = vld [vmem:[%s3 + $0x30] sm:$0xf]
      %v1953 = vld [vmem:[%s3 + $0x34] sm:$0xf]
      %v1954 = vld [vmem:[%s3 + $0x38] sm:$0xf]
      %v1955 = vld [vmem:[%s3 + $0x3c] sm:$0xf]
      %v1956 = vld [vmem:[%s3 + $0x40] sm:$0xf]
      %v1957 = vld [vmem:[%s3 + $0x44] sm:$0xf]
      %v1958 = vld [vmem:[%s3 + $0x48] sm:$0xf]
      %v1959 = vld [vmem:[%s3 + $0x4c] sm:$0xf]
      %v1960 = vld [vmem:[%s3 + $0x50] sm:$0xf]
      %v1961 = vld [vmem:[%s3 + $0x54] sm:$0xf]
      %v1962 = vld [vmem:[%s3 + $0x58] sm:$0xf]
      %v1963 = vld [vmem:[%s3 + $0x5c] sm:$0xf]
      %v1964 = vld [vmem:[%s3 + $0x60] sm:$0xf]
      %v1965 = vld [vmem:[%s3 + $0x64] sm:$0xf]
      %v1966 = vld [vmem:[%s3 + $0x68] sm:$0xf]
      %v1967 = vld [vmem:[%s3 + $0x6c] sm:$0xf]
      %v1968 = vld [vmem:[%s3 + $0x70] sm:$0xf]
      %v1969 = vld [vmem:[%s3 + $0x74] sm:$0xf]
      %v1970 = vld [vmem:[%s3 + $0x78] sm:$0xf]
      %v1971 = vld [vmem:[%s3 + $0x7c] sm:$0xf]
      %v1972 = vld [vmem:[%s4] sm:$0x1]
      %v1974 = vperm.slane %v1972, 0
      %v2008 = vunpack.c.l.b16 %v1940
      %v2009 = vunpack.c.l.b16 %v1941
      %v2010 = vunpack.c.l.b16 %v1942
      %v2011 = vunpack.c.l.b16 %v1943
      %v2012 = vunpack.c.l.b16 %v1944
      %v2013 = vunpack.c.l.b16 %v1945
      %v2014 = vunpack.c.l.b16 %v1946
      %v2015 = vunpack.c.l.b16 %v1947
      %v2016 = vunpack.c.l.b16 %v1948
      %v2017 = vunpack.c.l.b16 %v1949
      %v2018 = vunpack.c.l.b16 %v1950
      %v2019 = vunpack.c.l.b16 %v1951
      %v2020 = vunpack.c.l.b16 %v1952
      %v2021 = vunpack.c.l.b16 %v1953
      %v2022 = vunpack.c.l.b16 %v1954
      %v2023 = vunpack.c.l.b16 %v1955
      %v2024 = vunpack.c.l.b16 %v1956
      %v2025 = vunpack.c.l.b16 %v1957
      %v2026 = vunpack.c.l.b16 %v1958
      %v2027 = vunpack.c.l.b16 %v1959
      %v2028 = vunpack.c.l.b16 %v1960
      %v2029 = vunpack.c.l.b16 %v1961
      %v2030 = vunpack.c.l.b16 %v1962
      %v2031 = vunpack.c.l.b16 %v1963
      %v2032 = vunpack.c.l.b16 %v1964
      %v2033 = vunpack.c.l.b16 %v1965
      %v2034 = vunpack.c.l.b16 %v1966
      %v2035 = vunpack.c.l.b16 %v1967
      %v2036 = vunpack.c.l.b16 %v1968
      %v2037 = vunpack.c.l.b16 %v1969
      %v2038 = vunpack.c.l.b16 %v1970
      %v2039 = vunpack.c.l.b16 %v1971
      %v2040 = vpack.c.b16 %v2009, %v2008
      %v2041 = vpack.c.b16 %v2011, %v2010
      %v2042 = vpack.c.b16 %v2013, %v2012
      %v2043 = vpack.c.b16 %v2015, %v2014
      %v2044 = vpack.c.b16 %v2017, %v2016
      %v2045 = vpack.c.b16 %v2019, %v2018
      %v2046 = vpack.c.b16 %v2021, %v2020
      %v2047 = vpack.c.b16 %v2023, %v2022
      %v2048 = vpack.c.b16 %v2025, %v2024
      %v2049 = vpack.c.b16 %v2027, %v2026
      %v2050 = vpack.c.b16 %v2029, %v2028
      %v2051 = vpack.c.b16 %v2031, %v2030
      %v2052 = vpack.c.b16 %v2033, %v2032
      %v2053 = vpack.c.b16 %v2035, %v2034
      %v2054 = vpack.c.b16 %v2037, %v2036
      %v2055 = vpack.c.b16 %v2039, %v2038
      %2072 = vmatpush.bf16.msra.mxu0 %v2047
      %2073 = vmatpush.bf16.msra.mxu0 %v2046
      %2074 = vmatpush.bf16.msra.mxu0 %v2045
      %2075 = vmatpush.bf16.msra.mxu0 %v2044
      %2076 = vmatpush.bf16.msra.mxu0 %v2043
      %2077 = vmatpush.bf16.msra.mxu0 %v2042
      %2078 = vmatpush.bf16.msra.mxu0 %v2041
      %2079 = vmatpush.bf16.msra.mxu0 %v2040
      %2080 = vmatmul.bf16.gmra.mxu0 %v1812
      %v2081 = vpop.f32.mrf.mxu0
      %v2082 = vadd.f32 %v1974, %v2081
      %v2083 = vpop.f32.mrf.mxu0
      %v2084 = vadd.f32 %v1974, %v2083
      %2085 = vmatmul.bf16.gmra.mxu0 %v1814
      %v2086 = vpop.f32.mrf.mxu0
      %v2087 = vadd.f32 %v1974, %v2086
      %v2088 = vpop.f32.mrf.mxu0
      %v2089 = vadd.f32 %v1974, %v2088
      %2090 = vmatmul.bf16.gmra.mxu0 %v1816
      %v2091 = vpop.f32.mrf.mxu0
      %v2092 = vadd.f32 %v1974, %v2091
      %v2093 = vpop.f32.mrf.mxu0
      %v2094 = vadd.f32 %v1974, %v2093
      %2095 = vmatmul.bf16.gmra.mxu0 %v1818
      %v2096 = vpop.f32.mrf.mxu0
      %v2097 = vadd.f32 %v1974, %v2096
      %v2098 = vpop.f32.mrf.mxu0
      %v2099 = vadd.f32 %v1974, %v2098
      %2100 = vmatmul.bf16.gmra.mxu0 %v1820
      %v2101 = vpop.f32.mrf.mxu0
      %v2102 = vadd.f32 %v1974, %v2101
      %v2103 = vpop.f32.mrf.mxu0
      %v2104 = vadd.f32 %v1974, %v2103
      %2105 = vmatmul.bf16.gmra.mxu0 %v1822
      %v2106 = vpop.f32.mrf.mxu0
      %v2107 = vadd.f32 %v1974, %v2106
      %v2108 = vpop.f32.mrf.mxu0
      %v2109 = vadd.f32 %v1974, %v2108
      %2110 = vmatmul.bf16.gmra.mxu0 %v1824
      %v2111 = vpop.f32.mrf.mxu0
      %v2112 = vadd.f32 %v1974, %v2111
      %v2113 = vpop.f32.mrf.mxu0
      %v2114 = vadd.f32 %v1974, %v2113
      %2115 = vmatmul.bf16.gmra.mxu0 %v1826
      %v2116 = vpop.f32.mrf.mxu0
      %v2117 = vadd.f32 %v1974, %v2116
      %v2118 = vpop.f32.mrf.mxu0
      %v2119 = vadd.f32 %v1974, %v2118
      %2120 = vmatmul.bf16.gmra.mxu0 %v1828
      %v2121 = vpop.f32.mrf.mxu0
      %v2122 = vadd.f32 %v1974, %v2121
      %v2123 = vpop.f32.mrf.mxu0
      %v2124 = vadd.f32 %v1974, %v2123
      %2125 = vmatmul.bf16.gmra.mxu0 %v1830
      %v2126 = vpop.f32.mrf.mxu0
      %v2127 = vadd.f32 %v1974, %v2126
      %v2128 = vpop.f32.mrf.mxu0
      %v2129 = vadd.f32 %v1974, %v2128
      %2130 = vmatmul.bf16.gmra.mxu0 %v1832
      %v2131 = vpop.f32.mrf.mxu0
      %v2132 = vadd.f32 %v1974, %v2131
      %v2133 = vpop.f32.mrf.mxu0
      %v2134 = vadd.f32 %v1974, %v2133
      %2135 = vmatmul.bf16.gmra.mxu0 %v1834
      %v2136 = vpop.f32.mrf.mxu0
      %v2137 = vadd.f32 %v1974, %v2136
      %v2138 = vpop.f32.mrf.mxu0
      %v2139 = vadd.f32 %v1974, %v2138
      %2140 = vmatmul.bf16.gmra.mxu0 %v1836
      %v2141 = vpop.f32.mrf.mxu0
      %v2142 = vadd.f32 %v1974, %v2141
      %v2143 = vpop.f32.mrf.mxu0
      %v2144 = vadd.f32 %v1974, %v2143
      %2145 = vmatmul.bf16.gmra.mxu0 %v1838
      %v2146 = vpop.f32.mrf.mxu0
      %v2147 = vadd.f32 %v1974, %v2146
      %v2148 = vpop.f32.mrf.mxu0
      %v2149 = vadd.f32 %v1974, %v2148
      %2150 = vmatmul.bf16.gmra.mxu0 %v1840
      %v2151 = vpop.f32.mrf.mxu0
      %v2152 = vadd.f32 %v1974, %v2151
      %v2153 = vpop.f32.mrf.mxu0
      %v2154 = vadd.f32 %v1974, %v2153
      %2155 = vmatmul.bf16.gmra.mxu0 %v1842
      %v2156 = vpop.f32.mrf.mxu0
      %v2157 = vadd.f32 %v1974, %v2156
      %v2158 = vpop.f32.mrf.mxu0
      %v2159 = vadd.f32 %v1974, %v2158
      %2160 = vmatmul.bf16.gmra.mxu0 %v1844
      %v2161 = vpop.f32.mrf.mxu0
      %v2162 = vadd.f32 %v1974, %v2161
      %v2163 = vpop.f32.mrf.mxu0
      %v2164 = vadd.f32 %v1974, %v2163
      %2165 = vmatmul.bf16.gmra.mxu0 %v1846
      %v2166 = vpop.f32.mrf.mxu0
      %v2167 = vadd.f32 %v1974, %v2166
      %v2168 = vpop.f32.mrf.mxu0
      %v2169 = vadd.f32 %v1974, %v2168
      %2170 = vmatmul.bf16.gmra.mxu0 %v1848
      %v2171 = vpop.f32.mrf.mxu0
      %v2172 = vadd.f32 %v1974, %v2171
      %v2173 = vpop.f32.mrf.mxu0
      %v2174 = vadd.f32 %v1974, %v2173
      %2175 = vmatmul.bf16.gmra.mxu0 %v1850
      %v2176 = vpop.f32.mrf.mxu0
      %v2177 = vadd.f32 %v1974, %v2176
      %v2178 = vpop.f32.mrf.mxu0
      %v2179 = vadd.f32 %v1974, %v2178
      %2180 = vmatmul.bf16.gmra.mxu0 %v1852
      %v2181 = vpop.f32.mrf.mxu0
      %v2182 = vadd.f32 %v1974, %v2181
      %v2183 = vpop.f32.mrf.mxu0
      %v2184 = vadd.f32 %v1974, %v2183
      %2185 = vmatmul.bf16.gmra.mxu0 %v1854
      %v2186 = vpop.f32.mrf.mxu0
      %v2187 = vadd.f32 %v1974, %v2186
      %v2188 = vpop.f32.mrf.mxu0
      %v2189 = vadd.f32 %v1974, %v2188
      %2190 = vmatmul.bf16.gmra.mxu0 %v1856
      %v2191 = vpop.f32.mrf.mxu0
      %v2192 = vadd.f32 %v1974, %v2191
      %v2193 = vpop.f32.mrf.mxu0
      %v2194 = vadd.f32 %v1974, %v2193
      %2195 = vmatmul.bf16.gmra.mxu0 %v1858
      %v2196 = vpop.f32.mrf.mxu0
      %v2197 = vadd.f32 %v1974, %v2196
      %v2198 = vpop.f32.mrf.mxu0
      %v2199 = vadd.f32 %v1974, %v2198
      %2200 = vmatmul.bf16.gmra.mxu0 %v1860
      %v2201 = vpop.f32.mrf.mxu0
      %v2202 = vadd.f32 %v1974, %v2201
      %v2203 = vpop.f32.mrf.mxu0
      %v2204 = vadd.f32 %v1974, %v2203
      %2205 = vmatmul.bf16.gmra.mxu0 %v1862
      %v2206 = vpop.f32.mrf.mxu0
      %v2207 = vadd.f32 %v1974, %v2206
      %v2208 = vpop.f32.mrf.mxu0
      %v2209 = vadd.f32 %v1974, %v2208
      %2210 = vmatmul.bf16.gmra.mxu0 %v1864
      %v2211 = vpop.f32.mrf.mxu0
      %v2212 = vadd.f32 %v1974, %v2211
      %v2213 = vpop.f32.mrf.mxu0
      %v2214 = vadd.f32 %v1974, %v2213
      %2215 = vmatmul.bf16.gmra.mxu0 %v1866
      %v2216 = vpop.f32.mrf.mxu0
      %v2217 = vadd.f32 %v1974, %v2216
      %v2218 = vpop.f32.mrf.mxu0
      %v2219 = vadd.f32 %v1974, %v2218
      %2220 = vmatmul.bf16.gmra.mxu0 %v1868
      %v2221 = vpop.f32.mrf.mxu0
      %v2222 = vadd.f32 %v1974, %v2221
      %v2223 = vpop.f32.mrf.mxu0
      %v2224 = vadd.f32 %v1974, %v2223
      %2225 = vmatmul.bf16.gmra.mxu0 %v1870
      %v2226 = vpop.f32.mrf.mxu0
      %v2227 = vadd.f32 %v1974, %v2226
      %v2228 = vpop.f32.mrf.mxu0
      %v2229 = vadd.f32 %v1974, %v2228
      %2230 = vmatmul.bf16.gmra.mxu0 %v1872
      %v2231 = vpop.f32.mrf.mxu0
      %v2232 = vadd.f32 %v1974, %v2231
      %v2233 = vpop.f32.mrf.mxu0
      %v2234 = vadd.f32 %v1974, %v2233
      %2235 = vmatmul.bf16.gmra.mxu0 %v1874
      %v2236 = vpop.f32.mrf.mxu0
      %v2237 = vadd.f32 %v1974, %v2236
      %v2238 = vpop.f32.mrf.mxu0
      %v2239 = vadd.f32 %v1974, %v2238
      %2240 = vmatmul.bf16.gmra.mxu0 %v1876
      %v2241 = vpop.f32.mrf.mxu0
      %v2242 = vadd.f32 %v1974, %v2241
      %v2243 = vpop.f32.mrf.mxu0
      %v2244 = vadd.f32 %v1974, %v2243
      %2245 = vmatmul.bf16.gmra.mxu0 %v1878
      %v2246 = vpop.f32.mrf.mxu0
      %v2247 = vadd.f32 %v1974, %v2246
      %v2248 = vpop.f32.mrf.mxu0
      %v2249 = vadd.f32 %v1974, %v2248
      %2250 = vmatmul.bf16.gmra.mxu0 %v1880
      %v2251 = vpop.f32.mrf.mxu0
      %v2252 = vadd.f32 %v1974, %v2251
      %v2253 = vpop.f32.mrf.mxu0
      %v2254 = vadd.f32 %v1974, %v2253
      %2255 = vmatmul.bf16.gmra.mxu0 %v1882
      %v2256 = vpop.f32.mrf.mxu0
      %v2257 = vadd.f32 %v1974, %v2256
      %v2258 = vpop.f32.mrf.mxu0
      %v2259 = vadd.f32 %v1974, %v2258
      %2260 = vmatmul.bf16.gmra.mxu0 %v1884
      %v2261 = vpop.f32.mrf.mxu0
      %v2262 = vadd.f32 %v1974, %v2261
      %v2263 = vpop.f32.mrf.mxu0
      %v2264 = vadd.f32 %v1974, %v2263
      %2265 = vmatmul.bf16.gmra.mxu0 %v1886
      %v2266 = vpop.f32.mrf.mxu0
      %v2267 = vadd.f32 %v1974, %v2266
      %v2268 = vpop.f32.mrf.mxu0
      %v2269 = vadd.f32 %v1974, %v2268
      %2270 = vmatmul.bf16.gmra.mxu0 %v1888
      %v2271 = vpop.f32.mrf.mxu0
      %v2272 = vadd.f32 %v1974, %v2271
      %v2273 = vpop.f32.mrf.mxu0
      %v2274 = vadd.f32 %v1974, %v2273
      %2275 = vmatmul.bf16.gmra.mxu0 %v1890
      %v2276 = vpop.f32.mrf.mxu0
      %v2277 = vadd.f32 %v1974, %v2276
      %v2278 = vpop.f32.mrf.mxu0
      %v2279 = vadd.f32 %v1974, %v2278
      %2280 = vmatmul.bf16.gmra.mxu0 %v1892
      %v2281 = vpop.f32.mrf.mxu0
      %v2282 = vadd.f32 %v1974, %v2281
      %v2283 = vpop.f32.mrf.mxu0
      %v2284 = vadd.f32 %v1974, %v2283
      %2285 = vmatmul.bf16.gmra.mxu0 %v1894
      %v2286 = vpop.f32.mrf.mxu0
      %v2287 = vadd.f32 %v1974, %v2286
      %v2288 = vpop.f32.mrf.mxu0
      %v2289 = vadd.f32 %v1974, %v2288
      %2290 = vmatmul.bf16.gmra.mxu0 %v1896
      %v2291 = vpop.f32.mrf.mxu0
      %v2292 = vadd.f32 %v1974, %v2291
      %v2293 = vpop.f32.mrf.mxu0
      %v2294 = vadd.f32 %v1974, %v2293
      %2295 = vmatmul.bf16.gmra.mxu0 %v1898
      %v2296 = vpop.f32.mrf.mxu0
      %v2297 = vadd.f32 %v1974, %v2296
      %v2298 = vpop.f32.mrf.mxu0
      %v2299 = vadd.f32 %v1974, %v2298
      %2300 = vmatmul.bf16.gmra.mxu0 %v1900
      %v2301 = vpop.f32.mrf.mxu0
      %v2302 = vadd.f32 %v1974, %v2301
      %v2303 = vpop.f32.mrf.mxu0
      %v2304 = vadd.f32 %v1974, %v2303
      %2305 = vmatmul.bf16.gmra.mxu0 %v1902
      %v2306 = vpop.f32.mrf.mxu0
      %v2307 = vadd.f32 %v1974, %v2306
      %v2308 = vpop.f32.mrf.mxu0
      %v2309 = vadd.f32 %v1974, %v2308
      %2310 = vmatmul.bf16.gmra.mxu0 %v1904
      %v2311 = vpop.f32.mrf.mxu0
      %v2312 = vadd.f32 %v1974, %v2311
      %v2313 = vpop.f32.mrf.mxu0
      %v2314 = vadd.f32 %v1974, %v2313
      %2315 = vmatmul.bf16.gmra.mxu0 %v1906
      %v2316 = vpop.f32.mrf.mxu0
      %v2317 = vadd.f32 %v1974, %v2316
      %v2318 = vpop.f32.mrf.mxu0
      %v2319 = vadd.f32 %v1974, %v2318
      %2320 = vmatmul.bf16.gmra.mxu0 %v1908
      %v2321 = vpop.f32.mrf.mxu0
      %v2322 = vadd.f32 %v1974, %v2321
      %v2323 = vpop.f32.mrf.mxu0
      %v2324 = vadd.f32 %v1974, %v2323
      %2325 = vmatmul.bf16.gmra.mxu0 %v1910
      %v2326 = vpop.f32.mrf.mxu0
      %v2327 = vadd.f32 %v1974, %v2326
      %v2328 = vpop.f32.mrf.mxu0
      %v2329 = vadd.f32 %v1974, %v2328
      %2330 = vmatmul.bf16.gmra.mxu0 %v1912
      %v2331 = vpop.f32.mrf.mxu0
      %v2332 = vadd.f32 %v1974, %v2331
      %v2333 = vpop.f32.mrf.mxu0
      %v2334 = vadd.f32 %v1974, %v2333
      %2335 = vmatmul.bf16.gmra.mxu0 %v1914
      %v2336 = vpop.f32.mrf.mxu0
      %v2337 = vadd.f32 %v1974, %v2336
      %v2338 = vpop.f32.mrf.mxu0
      %v2339 = vadd.f32 %v1974, %v2338
      %2340 = vmatmul.bf16.gmra.mxu0 %v1916
      %v2341 = vpop.f32.mrf.mxu0
      %v2342 = vadd.f32 %v1974, %v2341
      %v2343 = vpop.f32.mrf.mxu0
      %v2344 = vadd.f32 %v1974, %v2343
      %2345 = vmatmul.bf16.gmra.mxu0 %v1918
      %v2346 = vpop.f32.mrf.mxu0
      %v2347 = vadd.f32 %v1974, %v2346
      %v2348 = vpop.f32.mrf.mxu0
      %v2349 = vadd.f32 %v1974, %v2348
      %2350 = vmatmul.bf16.gmra.mxu0 %v1920
      %v2351 = vpop.f32.mrf.mxu0
      %v2352 = vadd.f32 %v1974, %v2351
      %v2353 = vpop.f32.mrf.mxu0
      %v2354 = vadd.f32 %v1974, %v2353
      %2355 = vmatmul.bf16.gmra.mxu0 %v1922
      %v2356 = vpop.f32.mrf.mxu0
      %v2357 = vadd.f32 %v1974, %v2356
      %v2358 = vpop.f32.mrf.mxu0
      %v2359 = vadd.f32 %v1974, %v2358
      %2360 = vmatmul.bf16.gmra.mxu0 %v1924
      %v2361 = vpop.f32.mrf.mxu0
      %v2362 = vadd.f32 %v1974, %v2361
      %v2363 = vpop.f32.mrf.mxu0
      %v2364 = vadd.f32 %v1974, %v2363
      %2365 = vmatmul.bf16.gmra.mxu0 %v1926
      %v2366 = vpop.f32.mrf.mxu0
      %v2367 = vadd.f32 %v1974, %v2366
      %v2368 = vpop.f32.mrf.mxu0
      %v2369 = vadd.f32 %v1974, %v2368
      %2370 = vmatmul.bf16.gmra.mxu0 %v1928
      %v2371 = vpop.f32.mrf.mxu0
      %v2372 = vadd.f32 %v1974, %v2371
      %v2373 = vpop.f32.mrf.mxu0
      %v2374 = vadd.f32 %v1974, %v2373
      %2375 = vmatmul.bf16.gmra.mxu0 %v1930
      %v2376 = vpop.f32.mrf.mxu0
      %v2377 = vadd.f32 %v1974, %v2376
      %v2378 = vpop.f32.mrf.mxu0
      %v2379 = vadd.f32 %v1974, %v2378
      %2380 = vmatmul.bf16.gmra.mxu0 %v1932
      %v2381 = vpop.f32.mrf.mxu0
      %v2382 = vadd.f32 %v1974, %v2381
      %v2383 = vpop.f32.mrf.mxu0
      %v2384 = vadd.f32 %v1974, %v2383
      %2385 = vmatmul.bf16.gmra.mxu0 %v1934
      %v2386 = vpop.f32.mrf.mxu0
      %v2387 = vadd.f32 %v1974, %v2386
      %v2388 = vpop.f32.mrf.mxu0
      %v2389 = vadd.f32 %v1974, %v2388
      %2390 = vmatmul.bf16.gmra.mxu0 %v1936
      %v2391 = vpop.f32.mrf.mxu0
      %v2392 = vadd.f32 %v1974, %v2391
      %v2393 = vpop.f32.mrf.mxu0
      %v2394 = vadd.f32 %v1974, %v2393
      %2395 = vmatmul.bf16.gmra.mxu0 %v1938
      %v2396 = vpop.f32.mrf.mxu0
      %v2397 = vadd.f32 %v1974, %v2396
      %v2398 = vpop.f32.mrf.mxu0
      %v2399 = vadd.f32 %v1974, %v2398
      %2400 = vdwg.mxu0
      %2401 = vmatpush.bf16.msra.mxu0 %v2055
      %2402 = vmatpush.bf16.msra.mxu0 %v2054
      %2403 = vmatpush.bf16.msra.mxu0 %v2053
      %2404 = vmatpush.bf16.msra.mxu0 %v2052
      %2405 = vmatpush.bf16.msra.mxu0 %v2051
      %2406 = vmatpush.bf16.msra.mxu0 %v2050
      %2407 = vmatpush.bf16.msra.mxu0 %v2049
      %2408 = vmatpush.bf16.msra.mxu0 %v2048
      %2409 = vmatmul.bf16.gmra.mxu0 %v1813
      %v2410 = vpop.f32.mrf.mxu0
      %v2411 = vadd.f32 %v2082, %v2410
      %v2412 = vpop.f32.mrf.mxu0
      %v2413 = vadd.f32 %v2084, %v2412
      %2414 = vmatmul.bf16.gmra.mxu0 %v1815
      %v2415 = vpop.f32.mrf.mxu0
      %v2416 = vadd.f32 %v2087, %v2415
      %v2417 = vpop.f32.mrf.mxu0
      %v2418 = vadd.f32 %v2089, %v2417
      %2419 = vmatmul.bf16.gmra.mxu0 %v1817
      %v2420 = vpop.f32.mrf.mxu0
      %v2421 = vadd.f32 %v2092, %v2420
      %v2422 = vpop.f32.mrf.mxu0
      %v2423 = vadd.f32 %v2094, %v2422
      %2424 = vmatmul.bf16.gmra.mxu0 %v1819
      %v2425 = vpop.f32.mrf.mxu0
      %v2426 = vadd.f32 %v2097, %v2425
      %v2427 = vpop.f32.mrf.mxu0
      %v2428 = vadd.f32 %v2099, %v2427
      %2429 = vmatmul.bf16.gmra.mxu0 %v1821
      %v2430 = vpop.f32.mrf.mxu0
      %v2431 = vadd.f32 %v2102, %v2430
      %v2432 = vpop.f32.mrf.mxu0
      %v2433 = vadd.f32 %v2104, %v2432
      %2434 = vmatmul.bf16.gmra.mxu0 %v1823
      %v2435 = vpop.f32.mrf.mxu0
      %v2436 = vadd.f32 %v2107, %v2435
      %v2437 = vpop.f32.mrf.mxu0
      %v2438 = vadd.f32 %v2109, %v2437
      %2439 = vmatmul.bf16.gmra.mxu0 %v1825
      %v2440 = vpop.f32.mrf.mxu0
      %v2441 = vadd.f32 %v2112, %v2440
      %v2442 = vpop.f32.mrf.mxu0
      %v2443 = vadd.f32 %v2114, %v2442
      %2444 = vmatmul.bf16.gmra.mxu0 %v1827
      %v2445 = vpop.f32.mrf.mxu0
      %v2446 = vadd.f32 %v2117, %v2445
      %v2447 = vpop.f32.mrf.mxu0
      %v2448 = vadd.f32 %v2119, %v2447
      %2449 = vmatmul.bf16.gmra.mxu0 %v1829
      %v2450 = vpop.f32.mrf.mxu0
      %v2451 = vadd.f32 %v2122, %v2450
      %v2452 = vpop.f32.mrf.mxu0
      %v2453 = vadd.f32 %v2124, %v2452
      %2454 = vmatmul.bf16.gmra.mxu0 %v1831
      %v2455 = vpop.f32.mrf.mxu0
      %v2456 = vadd.f32 %v2127, %v2455
      %v2457 = vpop.f32.mrf.mxu0
      %v2458 = vadd.f32 %v2129, %v2457
      %2459 = vmatmul.bf16.gmra.mxu0 %v1833
      %v2460 = vpop.f32.mrf.mxu0
      %v2461 = vadd.f32 %v2132, %v2460
      %v2462 = vpop.f32.mrf.mxu0
      %v2463 = vadd.f32 %v2134, %v2462
      %2464 = vmatmul.bf16.gmra.mxu0 %v1835
      %v2465 = vpop.f32.mrf.mxu0
      %v2466 = vadd.f32 %v2137, %v2465
      %v2467 = vpop.f32.mrf.mxu0
      %v2468 = vadd.f32 %v2139, %v2467
      %2469 = vmatmul.bf16.gmra.mxu0 %v1837
      %v2470 = vpop.f32.mrf.mxu0
      %v2471 = vadd.f32 %v2142, %v2470
      %v2472 = vpop.f32.mrf.mxu0
      %v2473 = vadd.f32 %v2144, %v2472
      %2474 = vmatmul.bf16.gmra.mxu0 %v1839
      %v2475 = vpop.f32.mrf.mxu0
      %v2476 = vadd.f32 %v2147, %v2475
      %v2477 = vpop.f32.mrf.mxu0
      %v2478 = vadd.f32 %v2149, %v2477
      %2479 = vmatmul.bf16.gmra.mxu0 %v1841
      %v2480 = vpop.f32.mrf.mxu0
      %v2481 = vadd.f32 %v2152, %v2480
      %v2482 = vpop.f32.mrf.mxu0
      %v2483 = vadd.f32 %v2154, %v2482
      %2484 = vmatmul.bf16.gmra.mxu0 %v1843
      %v2485 = vpop.f32.mrf.mxu0
      %v2486 = vadd.f32 %v2157, %v2485
      %v2487 = vpop.f32.mrf.mxu0
      %v2488 = vadd.f32 %v2159, %v2487
      %2489 = vmatmul.bf16.gmra.mxu0 %v1845
      %v2490 = vpop.f32.mrf.mxu0
      %v2491 = vadd.f32 %v2162, %v2490
      %v2492 = vpop.f32.mrf.mxu0
      %v2493 = vadd.f32 %v2164, %v2492
      %2494 = vmatmul.bf16.gmra.mxu0 %v1847
      %v2495 = vpop.f32.mrf.mxu0
      %v2496 = vadd.f32 %v2167, %v2495
      %v2497 = vpop.f32.mrf.mxu0
      %v2498 = vadd.f32 %v2169, %v2497
      %2499 = vmatmul.bf16.gmra.mxu0 %v1849
      %v2500 = vpop.f32.mrf.mxu0
      %v2501 = vadd.f32 %v2172, %v2500
      %v2502 = vpop.f32.mrf.mxu0
      %v2503 = vadd.f32 %v2174, %v2502
      %2504 = vmatmul.bf16.gmra.mxu0 %v1851
      %v2505 = vpop.f32.mrf.mxu0
      %v2506 = vadd.f32 %v2177, %v2505
      %v2507 = vpop.f32.mrf.mxu0
      %v2508 = vadd.f32 %v2179, %v2507
      %2509 = vmatmul.bf16.gmra.mxu0 %v1853
      %v2510 = vpop.f32.mrf.mxu0
      %v2511 = vadd.f32 %v2182, %v2510
      %v2512 = vpop.f32.mrf.mxu0
      %v2513 = vadd.f32 %v2184, %v2512
      %2514 = vmatmul.bf16.gmra.mxu0 %v1855
      %v2515 = vpop.f32.mrf.mxu0
      %v2516 = vadd.f32 %v2187, %v2515
      %v2517 = vpop.f32.mrf.mxu0
      %v2518 = vadd.f32 %v2189, %v2517
      %2519 = vmatmul.bf16.gmra.mxu0 %v1857
      %v2520 = vpop.f32.mrf.mxu0
      %v2521 = vadd.f32 %v2192, %v2520
      %v2522 = vpop.f32.mrf.mxu0
      %v2523 = vadd.f32 %v2194, %v2522
      %2524 = vmatmul.bf16.gmra.mxu0 %v1859
      %v2525 = vpop.f32.mrf.mxu0
      %v2526 = vadd.f32 %v2197, %v2525
      %v2527 = vpop.f32.mrf.mxu0
      %v2528 = vadd.f32 %v2199, %v2527
      %2529 = vmatmul.bf16.gmra.mxu0 %v1861
      %v2530 = vpop.f32.mrf.mxu0
      %v2531 = vadd.f32 %v2202, %v2530
      %v2532 = vpop.f32.mrf.mxu0
      %v2533 = vadd.f32 %v2204, %v2532
      %2534 = vmatmul.bf16.gmra.mxu0 %v1863
      %v2535 = vpop.f32.mrf.mxu0
      %v2536 = vadd.f32 %v2207, %v2535
      %v2537 = vpop.f32.mrf.mxu0
      %v2538 = vadd.f32 %v2209, %v2537
      %2539 = vmatmul.bf16.gmra.mxu0 %v1865
      %v2540 = vpop.f32.mrf.mxu0
      %v2541 = vadd.f32 %v2212, %v2540
      %v2542 = vpop.f32.mrf.mxu0
      %v2543 = vadd.f32 %v2214, %v2542
      %2544 = vmatmul.bf16.gmra.mxu0 %v1867
      %v2545 = vpop.f32.mrf.mxu0
      %v2546 = vadd.f32 %v2217, %v2545
      %v2547 = vpop.f32.mrf.mxu0
      %v2548 = vadd.f32 %v2219, %v2547
      %2549 = vmatmul.bf16.gmra.mxu0 %v1869
      %v2550 = vpop.f32.mrf.mxu0
      %v2551 = vadd.f32 %v2222, %v2550
      %v2552 = vpop.f32.mrf.mxu0
      %v2553 = vadd.f32 %v2224, %v2552
      %2554 = vmatmul.bf16.gmra.mxu0 %v1871
      %v2555 = vpop.f32.mrf.mxu0
      %v2556 = vadd.f32 %v2227, %v2555
      %v2557 = vpop.f32.mrf.mxu0
      %v2558 = vadd.f32 %v2229, %v2557
      %2559 = vmatmul.bf16.gmra.mxu0 %v1873
      %v2560 = vpop.f32.mrf.mxu0
      %v2561 = vadd.f32 %v2232, %v2560
      %v2562 = vpop.f32.mrf.mxu0
      %v2563 = vadd.f32 %v2234, %v2562
      %2564 = vmatmul.bf16.gmra.mxu0 %v1875
      %v2565 = vpop.f32.mrf.mxu0
      %v2566 = vadd.f32 %v2237, %v2565
      %v2567 = vpop.f32.mrf.mxu0
      %v2568 = vadd.f32 %v2239, %v2567
      %2569 = vmatmul.bf16.gmra.mxu0 %v1877
      %v2570 = vpop.f32.mrf.mxu0
      %v2571 = vadd.f32 %v2242, %v2570
      %v2572 = vpop.f32.mrf.mxu0
      %v2573 = vadd.f32 %v2244, %v2572
      %2574 = vmatmul.bf16.gmra.mxu0 %v1879
      %v2575 = vpop.f32.mrf.mxu0
      %v2576 = vadd.f32 %v2247, %v2575
      %v2577 = vpop.f32.mrf.mxu0
      %v2578 = vadd.f32 %v2249, %v2577
      %2579 = vmatmul.bf16.gmra.mxu0 %v1881
      %v2580 = vpop.f32.mrf.mxu0
      %v2581 = vadd.f32 %v2252, %v2580
      %v2582 = vpop.f32.mrf.mxu0
      %v2583 = vadd.f32 %v2254, %v2582
      %2584 = vmatmul.bf16.gmra.mxu0 %v1883
      %v2585 = vpop.f32.mrf.mxu0
      %v2586 = vadd.f32 %v2257, %v2585
      %v2587 = vpop.f32.mrf.mxu0
      %v2588 = vadd.f32 %v2259, %v2587
      %2589 = vmatmul.bf16.gmra.mxu0 %v1885
      %v2590 = vpop.f32.mrf.mxu0
      %v2591 = vadd.f32 %v2262, %v2590
      %v2592 = vpop.f32.mrf.mxu0
      %v2593 = vadd.f32 %v2264, %v2592
      %2594 = vmatmul.bf16.gmra.mxu0 %v1887
      %v2595 = vpop.f32.mrf.mxu0
      %v2596 = vadd.f32 %v2267, %v2595
      %v2597 = vpop.f32.mrf.mxu0
      %v2598 = vadd.f32 %v2269, %v2597
      %2599 = vmatmul.bf16.gmra.mxu0 %v1889
      %v2600 = vpop.f32.mrf.mxu0
      %v2601 = vadd.f32 %v2272, %v2600
      %v2602 = vpop.f32.mrf.mxu0
      %v2603 = vadd.f32 %v2274, %v2602
      %2604 = vmatmul.bf16.gmra.mxu0 %v1891
      %v2605 = vpop.f32.mrf.mxu0
      %v2606 = vadd.f32 %v2277, %v2605
      %v2607 = vpop.f32.mrf.mxu0
      %v2608 = vadd.f32 %v2279, %v2607
      %2609 = vmatmul.bf16.gmra.mxu0 %v1893
      %v2610 = vpop.f32.mrf.mxu0
      %v2611 = vadd.f32 %v2282, %v2610
      %v2612 = vpop.f32.mrf.mxu0
      %v2613 = vadd.f32 %v2284, %v2612
      %2614 = vmatmul.bf16.gmra.mxu0 %v1895
      %v2615 = vpop.f32.mrf.mxu0
      %v2616 = vadd.f32 %v2287, %v2615
      %v2617 = vpop.f32.mrf.mxu0
      %v2618 = vadd.f32 %v2289, %v2617
      %2619 = vmatmul.bf16.gmra.mxu0 %v1897
      %v2620 = vpop.f32.mrf.mxu0
      %v2621 = vadd.f32 %v2292, %v2620
      %v2622 = vpop.f32.mrf.mxu0
      %v2623 = vadd.f32 %v2294, %v2622
      %2624 = vmatmul.bf16.gmra.mxu0 %v1899
      %v2625 = vpop.f32.mrf.mxu0
      %v2626 = vadd.f32 %v2297, %v2625
      %v2627 = vpop.f32.mrf.mxu0
      %v2628 = vadd.f32 %v2299, %v2627
      %2629 = vmatmul.bf16.gmra.mxu0 %v1901
      %v2630 = vpop.f32.mrf.mxu0
      %v2631 = vadd.f32 %v2302, %v2630
      %v2632 = vpop.f32.mrf.mxu0
      %v2633 = vadd.f32 %v2304, %v2632
      %2634 = vmatmul.bf16.gmra.mxu0 %v1903
      %v2635 = vpop.f32.mrf.mxu0
      %v2636 = vadd.f32 %v2307, %v2635
      %v2637 = vpop.f32.mrf.mxu0
      %v2638 = vadd.f32 %v2309, %v2637
      %2639 = vmatmul.bf16.gmra.mxu0 %v1905
      %v2640 = vpop.f32.mrf.mxu0
      %v2641 = vadd.f32 %v2312, %v2640
      %v2642 = vpop.f32.mrf.mxu0
      %v2643 = vadd.f32 %v2314, %v2642
      %2644 = vmatmul.bf16.gmra.mxu0 %v1907
      %v2645 = vpop.f32.mrf.mxu0
      %v2646 = vadd.f32 %v2317, %v2645
      %v2647 = vpop.f32.mrf.mxu0
      %v2648 = vadd.f32 %v2319, %v2647
      %2649 = vmatmul.bf16.gmra.mxu0 %v1909
      %v2650 = vpop.f32.mrf.mxu0
      %v2651 = vadd.f32 %v2322, %v2650
      %v2652 = vpop.f32.mrf.mxu0
      %v2653 = vadd.f32 %v2324, %v2652
      %2654 = vmatmul.bf16.gmra.mxu0 %v1911
      %v2655 = vpop.f32.mrf.mxu0
      %v2656 = vadd.f32 %v2327, %v2655
      %v2657 = vpop.f32.mrf.mxu0
      %v2658 = vadd.f32 %v2329, %v2657
      %2659 = vmatmul.bf16.gmra.mxu0 %v1913
      %v2660 = vpop.f32.mrf.mxu0
      %v2661 = vadd.f32 %v2332, %v2660
      %v2662 = vpop.f32.mrf.mxu0
      %v2663 = vadd.f32 %v2334, %v2662
      %2664 = vmatmul.bf16.gmra.mxu0 %v1915
      %v2665 = vpop.f32.mrf.mxu0
      %v2666 = vadd.f32 %v2337, %v2665
      %v2667 = vpop.f32.mrf.mxu0
      %v2668 = vadd.f32 %v2339, %v2667
      %2669 = vmatmul.bf16.gmra.mxu0 %v1917
      %v2670 = vpop.f32.mrf.mxu0
      %v2671 = vadd.f32 %v2342, %v2670
      %v2672 = vpop.f32.mrf.mxu0
      %v2673 = vadd.f32 %v2344, %v2672
      %2674 = vmatmul.bf16.gmra.mxu0 %v1919
      %v2675 = vpop.f32.mrf.mxu0
      %v2676 = vadd.f32 %v2347, %v2675
      %v2677 = vpop.f32.mrf.mxu0
      %v2678 = vadd.f32 %v2349, %v2677
      %2679 = vmatmul.bf16.gmra.mxu0 %v1921
      %v2680 = vpop.f32.mrf.mxu0
      %v2681 = vadd.f32 %v2352, %v2680
      %v2682 = vpop.f32.mrf.mxu0
      %v2683 = vadd.f32 %v2354, %v2682
      %2684 = vmatmul.bf16.gmra.mxu0 %v1923
      %v2685 = vpop.f32.mrf.mxu0
      %v2686 = vadd.f32 %v2357, %v2685
      %v2687 = vpop.f32.mrf.mxu0
      %v2688 = vadd.f32 %v2359, %v2687
      %2689 = vmatmul.bf16.gmra.mxu0 %v1925
      %v2690 = vpop.f32.mrf.mxu0
      %v2691 = vadd.f32 %v2362, %v2690
      %v2692 = vpop.f32.mrf.mxu0
      %v2693 = vadd.f32 %v2364, %v2692
      %2694 = vmatmul.bf16.gmra.mxu0 %v1927
      %v2695 = vpop.f32.mrf.mxu0
      %v2696 = vadd.f32 %v2367, %v2695
      %v2697 = vpop.f32.mrf.mxu0
      %v2698 = vadd.f32 %v2369, %v2697
      %2699 = vmatmul.bf16.gmra.mxu0 %v1929
      %v2700 = vpop.f32.mrf.mxu0
      %v2701 = vadd.f32 %v2372, %v2700
      %v2702 = vpop.f32.mrf.mxu0
      %v2703 = vadd.f32 %v2374, %v2702
      %2704 = vmatmul.bf16.gmra.mxu0 %v1931
      %v2705 = vpop.f32.mrf.mxu0
      %v2706 = vadd.f32 %v2377, %v2705
      %v2707 = vpop.f32.mrf.mxu0
      %v2708 = vadd.f32 %v2379, %v2707
      %2709 = vmatmul.bf16.gmra.mxu0 %v1933
      %v2710 = vpop.f32.mrf.mxu0
      %v2711 = vadd.f32 %v2382, %v2710
      %v2712 = vpop.f32.mrf.mxu0
      %v2713 = vadd.f32 %v2384, %v2712
      %2714 = vmatmul.bf16.gmra.mxu0 %v1935
      %v2715 = vpop.f32.mrf.mxu0
      %v2716 = vadd.f32 %v2387, %v2715
      %v2717 = vpop.f32.mrf.mxu0
      %v2718 = vadd.f32 %v2389, %v2717
      %2719 = vmatmul.bf16.gmra.mxu0 %v1937
      %v2720 = vpop.f32.mrf.mxu0
      %v2721 = vadd.f32 %v2392, %v2720
      %v2722 = vpop.f32.mrf.mxu0
      %v2723 = vadd.f32 %v2394, %v2722
      %2724 = vmatmul.bf16.gmra.mxu0 %v1939
      %v2725 = vpop.f32.mrf.mxu0
      %v2726 = vadd.f32 %v2397, %v2725
      %v2727 = vpop.f32.mrf.mxu0
      %v2728 = vadd.f32 %v2399, %v2727
      %2729 = vdwg.mxu0
      %v2730 = vmax.f32 %v2411, 0.0
      %v2731 = vmax.f32 %v2413, 0.0
      %v2732 = vmax.f32 %v2416, 0.0
      %v2733 = vmax.f32 %v2418, 0.0
      %v2734 = vmax.f32 %v2421, 0.0
      %v2735 = vmax.f32 %v2423, 0.0
      %v2736 = vmax.f32 %v2426, 0.0
      %v2737 = vmax.f32 %v2428, 0.0
      %v2738 = vmax.f32 %v2431, 0.0
      %v2739 = vmax.f32 %v2433, 0.0
      %v2740 = vmax.f32 %v2436, 0.0
      %v2741 = vmax.f32 %v2438, 0.0
      %v2742 = vmax.f32 %v2441, 0.0
      %v2743 = vmax.f32 %v2443, 0.0
      %v2744 = vmax.f32 %v2446, 0.0
      %v2745 = vmax.f32 %v2448, 0.0
      %v2746 = vmax.f32 %v2451, 0.0
      %v2747 = vmax.f32 %v2453, 0.0
      %v2748 = vmax.f32 %v2456, 0.0
      %v2749 = vmax.f32 %v2458, 0.0
      %v2750 = vmax.f32 %v2461, 0.0
      %v2751 = vmax.f32 %v2463, 0.0
      %v2752 = vmax.f32 %v2466, 0.0
      %v2753 = vmax.f32 %v2468, 0.0
      %v2754 = vmax.f32 %v2471, 0.0
      %v2755 = vmax.f32 %v2473, 0.0
      %v2756 = vmax.f32 %v2476, 0.0
      %v2757 = vmax.f32 %v2478, 0.0
      %v2758 = vmax.f32 %v2481, 0.0
      %v2759 = vmax.f32 %v2483, 0.0
      %v2760 = vmax.f32 %v2486, 0.0
      %v2761 = vmax.f32 %v2488, 0.0
      %v2762 = vmax.f32 %v2491, 0.0
      %v2763 = vmax.f32 %v2493, 0.0
      %v2764 = vmax.f32 %v2496, 0.0
      %v2765 = vmax.f32 %v2498, 0.0
      %v2766 = vmax.f32 %v2501, 0.0
      %v2767 = vmax.f32 %v2503, 0.0
      %v2768 = vmax.f32 %v2506, 0.0
      %v2769 = vmax.f32 %v2508, 0.0
      %v2770 = vmax.f32 %v2511, 0.0
      %v2771 = vmax.f32 %v2513, 0.0
      %v2772 = vmax.f32 %v2516, 0.0
      %v2773 = vmax.f32 %v2518, 0.0
      %v2774 = vmax.f32 %v2521, 0.0
      %v2775 = vmax.f32 %v2523, 0.0
      %v2776 = vmax.f32 %v2526, 0.0
      %v2777 = vmax.f32 %v2528, 0.0
      %v2778 = vmax.f32 %v2531, 0.0
      %v2779 = vmax.f32 %v2533, 0.0
      %v2780 = vmax.f32 %v2536, 0.0
      %v2781 = vmax.f32 %v2538, 0.0
      %v2782 = vmax.f32 %v2541, 0.0
      %v2783 = vmax.f32 %v2543, 0.0
      %v2784 = vmax.f32 %v2546, 0.0
      %v2785 = vmax.f32 %v2548, 0.0
      %v2786 = vmax.f32 %v2551, 0.0
      %v2787 = vmax.f32 %v2553, 0.0
      %v2788 = vmax.f32 %v2556, 0.0
      %v2789 = vmax.f32 %v2558, 0.0
      %v2790 = vmax.f32 %v2561, 0.0
      %v2791 = vmax.f32 %v2563, 0.0
      %v2792 = vmax.f32 %v2566, 0.0
      %v2793 = vmax.f32 %v2568, 0.0
      %v2794 = vmax.f32 %v2571, 0.0
      %v2795 = vmax.f32 %v2573, 0.0
      %v2796 = vmax.f32 %v2576, 0.0
      %v2797 = vmax.f32 %v2578, 0.0
      %v2798 = vmax.f32 %v2581, 0.0
      %v2799 = vmax.f32 %v2583, 0.0
      %v2800 = vmax.f32 %v2586, 0.0
      %v2801 = vmax.f32 %v2588, 0.0
      %v2802 = vmax.f32 %v2591, 0.0
      %v2803 = vmax.f32 %v2593, 0.0
      %v2804 = vmax.f32 %v2596, 0.0
      %v2805 = vmax.f32 %v2598, 0.0
      %v2806 = vmax.f32 %v2601, 0.0
      %v2807 = vmax.f32 %v2603, 0.0
      %v2808 = vmax.f32 %v2606, 0.0
      %v2809 = vmax.f32 %v2608, 0.0
      %v2810 = vmax.f32 %v2611, 0.0
      %v2811 = vmax.f32 %v2613, 0.0
      %v2812 = vmax.f32 %v2616, 0.0
      %v2813 = vmax.f32 %v2618, 0.0
      %v2814 = vmax.f32 %v2621, 0.0
      %v2815 = vmax.f32 %v2623, 0.0
      %v2816 = vmax.f32 %v2626, 0.0
      %v2817 = vmax.f32 %v2628, 0.0
      %v2818 = vmax.f32 %v2631, 0.0
      %v2819 = vmax.f32 %v2633, 0.0
      %v2820 = vmax.f32 %v2636, 0.0
      %v2821 = vmax.f32 %v2638, 0.0
      %v2822 = vmax.f32 %v2641, 0.0
      %v2823 = vmax.f32 %v2643, 0.0
      %v2824 = vmax.f32 %v2646, 0.0
      %v2825 = vmax.f32 %v2648, 0.0
      %v2826 = vmax.f32 %v2651, 0.0
      %v2827 = vmax.f32 %v2653, 0.0
      %v2828 = vmax.f32 %v2656, 0.0
      %v2829 = vmax.f32 %v2658, 0.0
      %v2830 = vmax.f32 %v2661, 0.0
      %v2831 = vmax.f32 %v2663, 0.0
      %v2832 = vmax.f32 %v2666, 0.0
      %v2833 = vmax.f32 %v2668, 0.0
      %v2834 = vmax.f32 %v2671, 0.0
      %v2835 = vmax.f32 %v2673, 0.0
      %v2836 = vmax.f32 %v2676, 0.0
      %v2837 = vmax.f32 %v2678, 0.0
      %v2838 = vmax.f32 %v2681, 0.0
      %v2839 = vmax.f32 %v2683, 0.0
      %v2840 = vmax.f32 %v2686, 0.0
      %v2841 = vmax.f32 %v2688, 0.0
      %v2842 = vmax.f32 %v2691, 0.0
      %v2843 = vmax.f32 %v2693, 0.0
      %v2844 = vmax.f32 %v2696, 0.0
      %v2845 = vmax.f32 %v2698, 0.0
      %v2846 = vmax.f32 %v2701, 0.0
      %v2847 = vmax.f32 %v2703, 0.0
      %v2848 = vmax.f32 %v2706, 0.0
      %v2849 = vmax.f32 %v2708, 0.0
      %v2850 = vmax.f32 %v2711, 0.0
      %v2851 = vmax.f32 %v2713, 0.0
      %v2852 = vmax.f32 %v2716, 0.0
      %v2853 = vmax.f32 %v2718, 0.0
      %v2854 = vmax.f32 %v2721, 0.0
      %v2855 = vmax.f32 %v2723, 0.0
      %v2856 = vmax.f32 %v2726, 0.0
      %v2857 = vmax.f32 %v2728, 0.0
      %v2858 = vld [vmem:[%s5] sm:$0x1]
      %v2860 = vperm.slane %v2858, 0
      %v2862 = vmul.f32 %v2730, %v2860
      %v2863 = vmul.f32 %v2731, %v2860
      %v2864 = vmul.f32 %v2732, %v2860
      %v2865 = vmul.f32 %v2733, %v2860
      %v2866 = vmul.f32 %v2734, %v2860
      %v2867 = vmul.f32 %v2735, %v2860
      %v2868 = vmul.f32 %v2736, %v2860
      %v2869 = vmul.f32 %v2737, %v2860
      %v2870 = vmul.f32 %v2738, %v2860
      %v2871 = vmul.f32 %v2739, %v2860
      %v2872 = vmul.f32 %v2740, %v2860
      %v2873 = vmul.f32 %v2741, %v2860
      %v2874 = vmul.f32 %v2742, %v2860
      %v2875 = vmul.f32 %v2743, %v2860
      %v2876 = vmul.f32 %v2744, %v2860
      %v2877 = vmul.f32 %v2745, %v2860
      %v2878 = vmul.f32 %v2746, %v2860
      %v2879 = vmul.f32 %v2747, %v2860
      %v2880 = vmul.f32 %v2748, %v2860
      %v2881 = vmul.f32 %v2749, %v2860
      %v2882 = vmul.f32 %v2750, %v2860
      %v2883 = vmul.f32 %v2751, %v2860
      %v2884 = vmul.f32 %v2752, %v2860
      %v2885 = vmul.f32 %v2753, %v2860
      %v2886 = vmul.f32 %v2754, %v2860
      %v2887 = vmul.f32 %v2755, %v2860
      %v2888 = vmul.f32 %v2756, %v2860
      %v2889 = vmul.f32 %v2757, %v2860
      %v2890 = vmul.f32 %v2758, %v2860
      %v2891 = vmul.f32 %v2759, %v2860
      %v2892 = vmul.f32 %v2760, %v2860
      %v2893 = vmul.f32 %v2761, %v2860
      %v2894 = vmul.f32 %v2762, %v2860
      %v2895 = vmul.f32 %v2763, %v2860
      %v2896 = vmul.f32 %v2764, %v2860
      %v2897 = vmul.f32 %v2765, %v2860
      %v2898 = vmul.f32 %v2766, %v2860
      %v2899 = vmul.f32 %v2767, %v2860
      %v2900 = vmul.f32 %v2768, %v2860
      %v2901 = vmul.f32 %v2769, %v2860
      %v2902 = vmul.f32 %v2770, %v2860
      %v2903 = vmul.f32 %v2771, %v2860
      %v2904 = vmul.f32 %v2772, %v2860
      %v2905 = vmul.f32 %v2773, %v2860
      %v2906 = vmul.f32 %v2774, %v2860
      %v2907 = vmul.f32 %v2775, %v2860
      %v2908 = vmul.f32 %v2776, %v2860
      %v2909 = vmul.f32 %v2777, %v2860
      %v2910 = vmul.f32 %v2778, %v2860
      %v2911 = vmul.f32 %v2779, %v2860
      %v2912 = vmul.f32 %v2780, %v2860
      %v2913 = vmul.f32 %v2781, %v2860
      %v2914 = vmul.f32 %v2782, %v2860
      %v2915 = vmul.f32 %v2783, %v2860
      %v2916 = vmul.f32 %v2784, %v2860
      %v2917 = vmul.f32 %v2785, %v2860
      %v2918 = vmul.f32 %v2786, %v2860
      %v2919 = vmul.f32 %v2787, %v2860
      %v2920 = vmul.f32 %v2788, %v2860
      %v2921 = vmul.f32 %v2789, %v2860
      %v2922 = vmul.f32 %v2790, %v2860
      %v2923 = vmul.f32 %v2791, %v2860
      %v2924 = vmul.f32 %v2792, %v2860
      %v2925 = vmul.f32 %v2793, %v2860
      %v2926 = vmul.f32 %v2794, %v2860
      %v2927 = vmul.f32 %v2795, %v2860
      %v2928 = vmul.f32 %v2796, %v2860
      %v2929 = vmul.f32 %v2797, %v2860
      %v2930 = vmul.f32 %v2798, %v2860
      %v2931 = vmul.f32 %v2799, %v2860
      %v2932 = vmul.f32 %v2800, %v2860
      %v2933 = vmul.f32 %v2801, %v2860
      %v2934 = vmul.f32 %v2802, %v2860
      %v2935 = vmul.f32 %v2803, %v2860
      %v2936 = vmul.f32 %v2804, %v2860
      %v2937 = vmul.f32 %v2805, %v2860
      %v2938 = vmul.f32 %v2806, %v2860
      %v2939 = vmul.f32 %v2807, %v2860
      %v2940 = vmul.f32 %v2808, %v2860
      %v2941 = vmul.f32 %v2809, %v2860
      %v2942 = vmul.f32 %v2810, %v2860
      %v2943 = vmul.f32 %v2811, %v2860
      %v2944 = vmul.f32 %v2812, %v2860
      %v2945 = vmul.f32 %v2813, %v2860
      %v2946 = vmul.f32 %v2814, %v2860
      %v2947 = vmul.f32 %v2815, %v2860
      %v2948 = vmul.f32 %v2816, %v2860
      %v2949 = vmul.f32 %v2817, %v2860
      %v2950 = vmul.f32 %v2818, %v2860
      %v2951 = vmul.f32 %v2819, %v2860
      %v2952 = vmul.f32 %v2820, %v2860
      %v2953 = vmul.f32 %v2821, %v2860
      %v2954 = vmul.f32 %v2822, %v2860
      %v2955 = vmul.f32 %v2823, %v2860
      %v2956 = vmul.f32 %v2824, %v2860
      %v2957 = vmul.f32 %v2825, %v2860
      %v2958 = vmul.f32 %v2826, %v2860
      %v2959 = vmul.f32 %v2827, %v2860
      %v2960 = vmul.f32 %v2828, %v2860
      %v2961 = vmul.f32 %v2829, %v2860
      %v2962 = vmul.f32 %v2830, %v2860
      %v2963 = vmul.f32 %v2831, %v2860
      %v2964 = vmul.f32 %v2832, %v2860
      %v2965 = vmul.f32 %v2833, %v2860
      %v2966 = vmul.f32 %v2834, %v2860
      %v2967 = vmul.f32 %v2835, %v2860
      %v2968 = vmul.f32 %v2836, %v2860
      %v2969 = vmul.f32 %v2837, %v2860
      %v2970 = vmul.f32 %v2838, %v2860
      %v2971 = vmul.f32 %v2839, %v2860
      %v2972 = vmul.f32 %v2840, %v2860
      %v2973 = vmul.f32 %v2841, %v2860
      %v2974 = vmul.f32 %v2842, %v2860
      %v2975 = vmul.f32 %v2843, %v2860
      %v2976 = vmul.f32 %v2844, %v2860
      %v2977 = vmul.f32 %v2845, %v2860
      %v2978 = vmul.f32 %v2846, %v2860
      %v2979 = vmul.f32 %v2847, %v2860
      %v2980 = vmul.f32 %v2848, %v2860
      %v2981 = vmul.f32 %v2849, %v2860
      %v2982 = vmul.f32 %v2850, %v2860
      %v2983 = vmul.f32 %v2851, %v2860
      %v2984 = vmul.f32 %v2852, %v2860
      %v2985 = vmul.f32 %v2853, %v2860
      %v2986 = vmul.f32 %v2854, %v2860
      %v2987 = vmul.f32 %v2855, %v2860
      %v2988 = vmul.f32 %v2856, %v2860
      %v2989 = vmul.f32 %v2857, %v2860
      %vm2990 = vcmask 523264
      %v2991 = vsel %vm2990, %v2862, 0.0
      %2992 = vadd.xlane.f32.xlu0 %v2991
      %v2993 = vpop.xlane.xlu0 %2992
      %v2994 = vsel %vm2990, %v2863, 0.0
      %2995 = vadd.xlane.f32.xlu0 %v2994
      %v2996 = vpop.xlane.xlu0 %2995
      %v2997 = vsel %vm2990, %v2864, 0.0
      %2998 = vadd.xlane.f32.xlu0 %v2997
      %v2999 = vpop.xlane.xlu0 %2998
      %v3000 = vsel %vm2990, %v2865, 0.0
      %3001 = vadd.xlane.f32.xlu0 %v3000
      %v3002 = vpop.xlane.xlu0 %3001
      %v3003 = vsel %vm2990, %v2866, 0.0
      %3004 = vadd.xlane.f32.xlu0 %v3003
      %v3005 = vpop.xlane.xlu0 %3004
      %v3006 = vsel %vm2990, %v2867, 0.0
      %3007 = vadd.xlane.f32.xlu0 %v3006
      %v3008 = vpop.xlane.xlu0 %3007
      %v3009 = vsel %vm2990, %v2868, 0.0
      %3010 = vadd.xlane.f32.xlu0 %v3009
      %v3011 = vpop.xlane.xlu0 %3010
      %v3012 = vsel %vm2990, %v2869, 0.0
      %3013 = vadd.xlane.f32.xlu0 %v3012
      %v3014 = vpop.xlane.xlu0 %3013
      %v3015 = vsel %vm2990, %v2870, 0.0
      %3016 = vadd.xlane.f32.xlu0 %v3015
      %v3017 = vpop.xlane.xlu0 %3016
      %v3018 = vsel %vm2990, %v2871, 0.0
      %3019 = vadd.xlane.f32.xlu0 %v3018
      %v3020 = vpop.xlane.xlu0 %3019
      %v3021 = vsel %vm2990, %v2872, 0.0
      %3022 = vadd.xlane.f32.xlu0 %v3021
      %v3023 = vpop.xlane.xlu0 %3022
      %v3024 = vsel %vm2990, %v2873, 0.0
      %3025 = vadd.xlane.f32.xlu0 %v3024
      %v3026 = vpop.xlane.xlu0 %3025
      %v3027 = vsel %vm2990, %v2874, 0.0
      %3028 = vadd.xlane.f32.xlu0 %v3027
      %v3029 = vpop.xlane.xlu0 %3028
      %v3030 = vsel %vm2990, %v2875, 0.0
      %3031 = vadd.xlane.f32.xlu0 %v3030
      %v3032 = vpop.xlane.xlu0 %3031
      %v3033 = vsel %vm2990, %v2876, 0.0
      %3034 = vadd.xlane.f32.xlu0 %v3033
      %v3035 = vpop.xlane.xlu0 %3034
      %v3036 = vsel %vm2990, %v2877, 0.0
      %3037 = vadd.xlane.f32.xlu0 %v3036
      %v3038 = vpop.xlane.xlu0 %3037
      %v3039 = vsel %vm2990, %v2878, 0.0
      %3040 = vadd.xlane.f32.xlu0 %v3039
      %v3041 = vpop.xlane.xlu0 %3040
      %v3042 = vsel %vm2990, %v2879, 0.0
      %3043 = vadd.xlane.f32.xlu0 %v3042
      %v3044 = vpop.xlane.xlu0 %3043
      %v3045 = vsel %vm2990, %v2880, 0.0
      %3046 = vadd.xlane.f32.xlu0 %v3045
      %v3047 = vpop.xlane.xlu0 %3046
      %v3048 = vsel %vm2990, %v2881, 0.0
      %3049 = vadd.xlane.f32.xlu0 %v3048
      %v3050 = vpop.xlane.xlu0 %3049
      %v3051 = vsel %vm2990, %v2882, 0.0
      %3052 = vadd.xlane.f32.xlu0 %v3051
      %v3053 = vpop.xlane.xlu0 %3052
      %v3054 = vsel %vm2990, %v2883, 0.0
      %3055 = vadd.xlane.f32.xlu0 %v3054
      %v3056 = vpop.xlane.xlu0 %3055
      %v3057 = vsel %vm2990, %v2884, 0.0
      %3058 = vadd.xlane.f32.xlu0 %v3057
      %v3059 = vpop.xlane.xlu0 %3058
      %v3060 = vsel %vm2990, %v2885, 0.0
      %3061 = vadd.xlane.f32.xlu0 %v3060
      %v3062 = vpop.xlane.xlu0 %3061
      %v3063 = vsel %vm2990, %v2886, 0.0
      %3064 = vadd.xlane.f32.xlu0 %v3063
      %v3065 = vpop.xlane.xlu0 %3064
      %v3066 = vsel %vm2990, %v2887, 0.0
      %3067 = vadd.xlane.f32.xlu0 %v3066
      %v3068 = vpop.xlane.xlu0 %3067
      %v3069 = vsel %vm2990, %v2888, 0.0
      %3070 = vadd.xlane.f32.xlu0 %v3069
      %v3071 = vpop.xlane.xlu0 %3070
      %v3072 = vsel %vm2990, %v2889, 0.0
      %3073 = vadd.xlane.f32.xlu0 %v3072
      %v3074 = vpop.xlane.xlu0 %3073
      %v3075 = vsel %vm2990, %v2890, 0.0
      %3076 = vadd.xlane.f32.xlu0 %v3075
      %v3077 = vpop.xlane.xlu0 %3076
      %v3078 = vsel %vm2990, %v2891, 0.0
      %3079 = vadd.xlane.f32.xlu0 %v3078
      %v3080 = vpop.xlane.xlu0 %3079
      %v3081 = vsel %vm2990, %v2892, 0.0
      %3082 = vadd.xlane.f32.xlu0 %v3081
      %v3083 = vpop.xlane.xlu0 %3082
      %v3084 = vsel %vm2990, %v2893, 0.0
      %3085 = vadd.xlane.f32.xlu0 %v3084
      %v3086 = vpop.xlane.xlu0 %3085
      %v3087 = vsel %vm2990, %v2894, 0.0
      %3088 = vadd.xlane.f32.xlu0 %v3087
      %v3089 = vpop.xlane.xlu0 %3088
      %v3090 = vsel %vm2990, %v2895, 0.0
      %3091 = vadd.xlane.f32.xlu0 %v3090
      %v3092 = vpop.xlane.xlu0 %3091
      %v3093 = vsel %vm2990, %v2896, 0.0
      %3094 = vadd.xlane.f32.xlu0 %v3093
      %v3095 = vpop.xlane.xlu0 %3094
      %v3096 = vsel %vm2990, %v2897, 0.0
      %3097 = vadd.xlane.f32.xlu0 %v3096
      %v3098 = vpop.xlane.xlu0 %3097
      %v3099 = vsel %vm2990, %v2898, 0.0
      %3100 = vadd.xlane.f32.xlu0 %v3099
      %v3101 = vpop.xlane.xlu0 %3100
      %v3102 = vsel %vm2990, %v2899, 0.0
      %3103 = vadd.xlane.f32.xlu0 %v3102
      %v3104 = vpop.xlane.xlu0 %3103
      %v3105 = vsel %vm2990, %v2900, 0.0
      %3106 = vadd.xlane.f32.xlu0 %v3105
      %v3107 = vpop.xlane.xlu0 %3106
      %v3108 = vsel %vm2990, %v2901, 0.0
      %3109 = vadd.xlane.f32.xlu0 %v3108
      %v3110 = vpop.xlane.xlu0 %3109
      %v3111 = vsel %vm2990, %v2902, 0.0
      %3112 = vadd.xlane.f32.xlu0 %v3111
      %v3113 = vpop.xlane.xlu0 %3112
      %v3114 = vsel %vm2990, %v2903, 0.0
      %3115 = vadd.xlane.f32.xlu0 %v3114
      %v3116 = vpop.xlane.xlu0 %3115
      %v3117 = vsel %vm2990, %v2904, 0.0
      %3118 = vadd.xlane.f32.xlu0 %v3117
      %v3119 = vpop.xlane.xlu0 %3118
      %v3120 = vsel %vm2990, %v2905, 0.0
      %3121 = vadd.xlane.f32.xlu0 %v3120
      %v3122 = vpop.xlane.xlu0 %3121
      %v3123 = vsel %vm2990, %v2906, 0.0
      %3124 = vadd.xlane.f32.xlu0 %v3123
      %v3125 = vpop.xlane.xlu0 %3124
      %v3126 = vsel %vm2990, %v2907, 0.0
      %3127 = vadd.xlane.f32.xlu0 %v3126
      %v3128 = vpop.xlane.xlu0 %3127
      %v3129 = vsel %vm2990, %v2908, 0.0
      %3130 = vadd.xlane.f32.xlu0 %v3129
      %v3131 = vpop.xlane.xlu0 %3130
      %v3132 = vsel %vm2990, %v2909, 0.0
      %3133 = vadd.xlane.f32.xlu0 %v3132
      %v3134 = vpop.xlane.xlu0 %3133
      %v3135 = vsel %vm2990, %v2910, 0.0
      %3136 = vadd.xlane.f32.xlu0 %v3135
      %v3137 = vpop.xlane.xlu0 %3136
      %v3138 = vsel %vm2990, %v2911, 0.0
      %3139 = vadd.xlane.f32.xlu0 %v3138
      %v3140 = vpop.xlane.xlu0 %3139
      %v3141 = vsel %vm2990, %v2912, 0.0
      %3142 = vadd.xlane.f32.xlu0 %v3141
      %v3143 = vpop.xlane.xlu0 %3142
      %v3144 = vsel %vm2990, %v2913, 0.0
      %3145 = vadd.xlane.f32.xlu0 %v3144
      %v3146 = vpop.xlane.xlu0 %3145
      %v3147 = vsel %vm2990, %v2914, 0.0
      %3148 = vadd.xlane.f32.xlu0 %v3147
      %v3149 = vpop.xlane.xlu0 %3148
      %v3150 = vsel %vm2990, %v2915, 0.0
      %3151 = vadd.xlane.f32.xlu0 %v3150
      %v3152 = vpop.xlane.xlu0 %3151
      %v3153 = vsel %vm2990, %v2916, 0.0
      %3154 = vadd.xlane.f32.xlu0 %v3153
      %v3155 = vpop.xlane.xlu0 %3154
      %v3156 = vsel %vm2990, %v2917, 0.0
      %3157 = vadd.xlane.f32.xlu0 %v3156
      %v3158 = vpop.xlane.xlu0 %3157
      %v3159 = vsel %vm2990, %v2918, 0.0
      %3160 = vadd.xlane.f32.xlu0 %v3159
      %v3161 = vpop.xlane.xlu0 %3160
      %v3162 = vsel %vm2990, %v2919, 0.0
      %3163 = vadd.xlane.f32.xlu0 %v3162
      %v3164 = vpop.xlane.xlu0 %3163
      %v3165 = vsel %vm2990, %v2920, 0.0
      %3166 = vadd.xlane.f32.xlu0 %v3165
      %v3167 = vpop.xlane.xlu0 %3166
      %v3168 = vsel %vm2990, %v2921, 0.0
      %3169 = vadd.xlane.f32.xlu0 %v3168
      %v3170 = vpop.xlane.xlu0 %3169
      %v3171 = vsel %vm2990, %v2922, 0.0
      %3172 = vadd.xlane.f32.xlu0 %v3171
      %v3173 = vpop.xlane.xlu0 %3172
      %v3174 = vsel %vm2990, %v2923, 0.0
      %3175 = vadd.xlane.f32.xlu0 %v3174
      %v3176 = vpop.xlane.xlu0 %3175
      %v3177 = vsel %vm2990, %v2924, 0.0
      %3178 = vadd.xlane.f32.xlu0 %v3177
      %v3179 = vpop.xlane.xlu0 %3178
      %v3180 = vsel %vm2990, %v2925, 0.0
      %3181 = vadd.xlane.f32.xlu0 %v3180
      %v3182 = vpop.xlane.xlu0 %3181
      %v3183 = vsel %vm2990, %v2926, 0.0
      %3184 = vadd.xlane.f32.xlu0 %v3183
      %v3185 = vpop.xlane.xlu0 %3184
      %v3186 = vsel %vm2990, %v2927, 0.0
      %3187 = vadd.xlane.f32.xlu0 %v3186
      %v3188 = vpop.xlane.xlu0 %3187
      %v3189 = vsel %vm2990, %v2928, 0.0
      %3190 = vadd.xlane.f32.xlu0 %v3189
      %v3191 = vpop.xlane.xlu0 %3190
      %v3192 = vsel %vm2990, %v2929, 0.0
      %3193 = vadd.xlane.f32.xlu0 %v3192
      %v3194 = vpop.xlane.xlu0 %3193
      %v3195 = vsel %vm2990, %v2930, 0.0
      %3196 = vadd.xlane.f32.xlu0 %v3195
      %v3197 = vpop.xlane.xlu0 %3196
      %v3198 = vsel %vm2990, %v2931, 0.0
      %3199 = vadd.xlane.f32.xlu0 %v3198
      %v3200 = vpop.xlane.xlu0 %3199
      %v3201 = vsel %vm2990, %v2932, 0.0
      %3202 = vadd.xlane.f32.xlu0 %v3201
      %v3203 = vpop.xlane.xlu0 %3202
      %v3204 = vsel %vm2990, %v2933, 0.0
      %3205 = vadd.xlane.f32.xlu0 %v3204
      %v3206 = vpop.xlane.xlu0 %3205
      %v3207 = vsel %vm2990, %v2934, 0.0
      %3208 = vadd.xlane.f32.xlu0 %v3207
      %v3209 = vpop.xlane.xlu0 %3208
      %v3210 = vsel %vm2990, %v2935, 0.0
      %3211 = vadd.xlane.f32.xlu0 %v3210
      %v3212 = vpop.xlane.xlu0 %3211
      %v3213 = vsel %vm2990, %v2936, 0.0
      %3214 = vadd.xlane.f32.xlu0 %v3213
      %v3215 = vpop.xlane.xlu0 %3214
      %v3216 = vsel %vm2990, %v2937, 0.0
      %3217 = vadd.xlane.f32.xlu0 %v3216
      %v3218 = vpop.xlane.xlu0 %3217
      %v3219 = vsel %vm2990, %v2938, 0.0
      %3220 = vadd.xlane.f32.xlu0 %v3219
      %v3221 = vpop.xlane.xlu0 %3220
      %v3222 = vsel %vm2990, %v2939, 0.0
      %3223 = vadd.xlane.f32.xlu0 %v3222
      %v3224 = vpop.xlane.xlu0 %3223
      %v3225 = vsel %vm2990, %v2940, 0.0
      %3226 = vadd.xlane.f32.xlu0 %v3225
      %v3227 = vpop.xlane.xlu0 %3226
      %v3228 = vsel %vm2990, %v2941, 0.0
      %3229 = vadd.xlane.f32.xlu0 %v3228
      %v3230 = vpop.xlane.xlu0 %3229
      %v3231 = vsel %vm2990, %v2942, 0.0
      %3232 = vadd.xlane.f32.xlu0 %v3231
      %v3233 = vpop.xlane.xlu0 %3232
      %v3234 = vsel %vm2990, %v2943, 0.0
      %3235 = vadd.xlane.f32.xlu0 %v3234
      %v3236 = vpop.xlane.xlu0 %3235
      %v3237 = vsel %vm2990, %v2944, 0.0
      %3238 = vadd.xlane.f32.xlu0 %v3237
      %v3239 = vpop.xlane.xlu0 %3238
      %v3240 = vsel %vm2990, %v2945, 0.0
      %3241 = vadd.xlane.f32.xlu0 %v3240
      %v3242 = vpop.xlane.xlu0 %3241
      %v3243 = vsel %vm2990, %v2946, 0.0
      %3244 = vadd.xlane.f32.xlu0 %v3243
      %v3245 = vpop.xlane.xlu0 %3244
      %v3246 = vsel %vm2990, %v2947, 0.0
      %3247 = vadd.xlane.f32.xlu0 %v3246
      %v3248 = vpop.xlane.xlu0 %3247
      %v3249 = vsel %vm2990, %v2948, 0.0
      %3250 = vadd.xlane.f32.xlu0 %v3249
      %v3251 = vpop.xlane.xlu0 %3250
      %v3252 = vsel %vm2990, %v2949, 0.0
      %3253 = vadd.xlane.f32.xlu0 %v3252
      %v3254 = vpop.xlane.xlu0 %3253
      %v3255 = vsel %vm2990, %v2950, 0.0
      %3256 = vadd.xlane.f32.xlu0 %v3255
      %v3257 = vpop.xlane.xlu0 %3256
      %v3258 = vsel %vm2990, %v2951, 0.0
      %3259 = vadd.xlane.f32.xlu0 %v3258
      %v3260 = vpop.xlane.xlu0 %3259
      %v3261 = vsel %vm2990, %v2952, 0.0
      %3262 = vadd.xlane.f32.xlu0 %v3261
      %v3263 = vpop.xlane.xlu0 %3262
      %v3264 = vsel %vm2990, %v2953, 0.0
      %3265 = vadd.xlane.f32.xlu0 %v3264
      %v3266 = vpop.xlane.xlu0 %3265
      %v3267 = vsel %vm2990, %v2954, 0.0
      %3268 = vadd.xlane.f32.xlu0 %v3267
      %v3269 = vpop.xlane.xlu0 %3268
      %v3270 = vsel %vm2990, %v2955, 0.0
      %3271 = vadd.xlane.f32.xlu0 %v3270
      %v3272 = vpop.xlane.xlu0 %3271
      %v3273 = vsel %vm2990, %v2956, 0.0
      %3274 = vadd.xlane.f32.xlu0 %v3273
      %v3275 = vpop.xlane.xlu0 %3274
      %v3276 = vsel %vm2990, %v2957, 0.0
      %3277 = vadd.xlane.f32.xlu0 %v3276
      %v3278 = vpop.xlane.xlu0 %3277
      %v3279 = vsel %vm2990, %v2958, 0.0
      %3280 = vadd.xlane.f32.xlu0 %v3279
      %v3281 = vpop.xlane.xlu0 %3280
      %v3282 = vsel %vm2990, %v2959, 0.0
      %3283 = vadd.xlane.f32.xlu0 %v3282
      %v3284 = vpop.xlane.xlu0 %3283
      %v3285 = vsel %vm2990, %v2960, 0.0
      %3286 = vadd.xlane.f32.xlu0 %v3285
      %v3287 = vpop.xlane.xlu0 %3286
      %v3288 = vsel %vm2990, %v2961, 0.0
      %3289 = vadd.xlane.f32.xlu0 %v3288
      %v3290 = vpop.xlane.xlu0 %3289
      %v3291 = vsel %vm2990, %v2962, 0.0
      %3292 = vadd.xlane.f32.xlu0 %v3291
      %v3293 = vpop.xlane.xlu0 %3292
      %v3294 = vsel %vm2990, %v2963, 0.0
      %3295 = vadd.xlane.f32.xlu0 %v3294
      %v3296 = vpop.xlane.xlu0 %3295
      %v3297 = vsel %vm2990, %v2964, 0.0
      %3298 = vadd.xlane.f32.xlu0 %v3297
      %v3299 = vpop.xlane.xlu0 %3298
      %v3300 = vsel %vm2990, %v2965, 0.0
      %3301 = vadd.xlane.f32.xlu0 %v3300
      %v3302 = vpop.xlane.xlu0 %3301
      %v3303 = vsel %vm2990, %v2966, 0.0
      %3304 = vadd.xlane.f32.xlu0 %v3303
      %v3305 = vpop.xlane.xlu0 %3304
      %v3306 = vsel %vm2990, %v2967, 0.0
      %3307 = vadd.xlane.f32.xlu0 %v3306
      %v3308 = vpop.xlane.xlu0 %3307
      %v3309 = vsel %vm2990, %v2968, 0.0
      %3310 = vadd.xlane.f32.xlu0 %v3309
      %v3311 = vpop.xlane.xlu0 %3310
      %v3312 = vsel %vm2990, %v2969, 0.0
      %3313 = vadd.xlane.f32.xlu0 %v3312
      %v3314 = vpop.xlane.xlu0 %3313
      %v3315 = vsel %vm2990, %v2970, 0.0
      %3316 = vadd.xlane.f32.xlu0 %v3315
      %v3317 = vpop.xlane.xlu0 %3316
      %v3318 = vsel %vm2990, %v2971, 0.0
      %3319 = vadd.xlane.f32.xlu0 %v3318
      %v3320 = vpop.xlane.xlu0 %3319
      %v3321 = vsel %vm2990, %v2972, 0.0
      %3322 = vadd.xlane.f32.xlu0 %v3321
      %v3323 = vpop.xlane.xlu0 %3322
      %v3324 = vsel %vm2990, %v2973, 0.0
      %3325 = vadd.xlane.f32.xlu0 %v3324
      %v3326 = vpop.xlane.xlu0 %3325
      %v3327 = vsel %vm2990, %v2974, 0.0
      %3328 = vadd.xlane.f32.xlu0 %v3327
      %v3329 = vpop.xlane.xlu0 %3328
      %v3330 = vsel %vm2990, %v2975, 0.0
      %3331 = vadd.xlane.f32.xlu0 %v3330
      %v3332 = vpop.xlane.xlu0 %3331
      %v3333 = vsel %vm2990, %v2976, 0.0
      %3334 = vadd.xlane.f32.xlu0 %v3333
      %v3335 = vpop.xlane.xlu0 %3334
      %v3336 = vsel %vm2990, %v2977, 0.0
      %3337 = vadd.xlane.f32.xlu0 %v3336
      %v3338 = vpop.xlane.xlu0 %3337
      %v3339 = vsel %vm2990, %v2978, 0.0
      %3340 = vadd.xlane.f32.xlu0 %v3339
      %v3341 = vpop.xlane.xlu0 %3340
      %v3342 = vsel %vm2990, %v2979, 0.0
      %3343 = vadd.xlane.f32.xlu0 %v3342
      %v3344 = vpop.xlane.xlu0 %3343
      %v3345 = vsel %vm2990, %v2980, 0.0
      %3346 = vadd.xlane.f32.xlu0 %v3345
      %v3347 = vpop.xlane.xlu0 %3346
      %v3348 = vsel %vm2990, %v2981, 0.0
      %3349 = vadd.xlane.f32.xlu0 %v3348
      %v3350 = vpop.xlane.xlu0 %3349
      %v3351 = vsel %vm2990, %v2982, 0.0
      %3352 = vadd.xlane.f32.xlu0 %v3351
      %v3353 = vpop.xlane.xlu0 %3352
      %v3354 = vsel %vm2990, %v2983, 0.0
      %3355 = vadd.xlane.f32.xlu0 %v3354
      %v3356 = vpop.xlane.xlu0 %3355
      %v3357 = vsel %vm2990, %v2984, 0.0
      %3358 = vadd.xlane.f32.xlu0 %v3357
      %v3359 = vpop.xlane.xlu0 %3358
      %v3360 = vsel %vm2990, %v2985, 0.0
      %3361 = vadd.xlane.f32.xlu0 %v3360
      %v3362 = vpop.xlane.xlu0 %3361
      %v3363 = vsel %vm2990, %v2986, 0.0
      %3364 = vadd.xlane.f32.xlu0 %v3363
      %v3365 = vpop.xlane.xlu0 %3364
      %v3366 = vsel %vm2990, %v2987, 0.0
      %3367 = vadd.xlane.f32.xlu0 %v3366
      %v3368 = vpop.xlane.xlu0 %3367
      %v3369 = vsel %vm2990, %v2988, 0.0
      %3370 = vadd.xlane.f32.xlu0 %v3369
      %v3371 = vpop.xlane.xlu0 %3370
      %v3372 = vsel %vm2990, %v2989, 0.0
      %3373 = vadd.xlane.f32.xlu0 %v3372
      %v3374 = vpop.xlane.xlu0 %3373
      %v3375 = vld [vmem:[#allocation2] sm:$0x1]
      %v3377 = vperm.slane %v3375, 0
      %v3379 = vadd.f32 %v2993, %v3377
      %v3380 = vadd.f32 %v2996, %v3377
      %v3381 = vadd.f32 %v2999, %v3377
      %v3382 = vadd.f32 %v3002, %v3377
      %v3383 = vadd.f32 %v3005, %v3377
      %v3384 = vadd.f32 %v3008, %v3377
      %v3385 = vadd.f32 %v3011, %v3377
      %v3386 = vadd.f32 %v3014, %v3377
      %v3387 = vadd.f32 %v3017, %v3377
      %v3388 = vadd.f32 %v3020, %v3377
      %v3389 = vadd.f32 %v3023, %v3377
      %v3390 = vadd.f32 %v3026, %v3377
      %v3391 = vadd.f32 %v3029, %v3377
      %v3392 = vadd.f32 %v3032, %v3377
      %v3393 = vadd.f32 %v3035, %v3377
      %v3394 = vadd.f32 %v3038, %v3377
      %v3395 = vadd.f32 %v3041, %v3377
      %v3396 = vadd.f32 %v3044, %v3377
      %v3397 = vadd.f32 %v3047, %v3377
      %v3398 = vadd.f32 %v3050, %v3377
      %v3399 = vadd.f32 %v3053, %v3377
      %v3400 = vadd.f32 %v3056, %v3377
      %v3401 = vadd.f32 %v3059, %v3377
      %v3402 = vadd.f32 %v3062, %v3377
      %v3403 = vadd.f32 %v3065, %v3377
      %v3404 = vadd.f32 %v3068, %v3377
      %v3405 = vadd.f32 %v3071, %v3377
      %v3406 = vadd.f32 %v3074, %v3377
      %v3407 = vadd.f32 %v3077, %v3377
      %v3408 = vadd.f32 %v3080, %v3377
      %v3409 = vadd.f32 %v3083, %v3377
      %v3410 = vadd.f32 %v3086, %v3377
      %v3411 = vadd.f32 %v3089, %v3377
      %v3412 = vadd.f32 %v3092, %v3377
      %v3413 = vadd.f32 %v3095, %v3377
      %v3414 = vadd.f32 %v3098, %v3377
      %v3415 = vadd.f32 %v3101, %v3377
      %v3416 = vadd.f32 %v3104, %v3377
      %v3417 = vadd.f32 %v3107, %v3377
      %v3418 = vadd.f32 %v3110, %v3377
      %v3419 = vadd.f32 %v3113, %v3377
      %v3420 = vadd.f32 %v3116, %v3377
      %v3421 = vadd.f32 %v3119, %v3377
      %v3422 = vadd.f32 %v3122, %v3377
      %v3423 = vadd.f32 %v3125, %v3377
      %v3424 = vadd.f32 %v3128, %v3377
      %v3425 = vadd.f32 %v3131, %v3377
      %v3426 = vadd.f32 %v3134, %v3377
      %v3427 = vadd.f32 %v3137, %v3377
      %v3428 = vadd.f32 %v3140, %v3377
      %v3429 = vadd.f32 %v3143, %v3377
      %v3430 = vadd.f32 %v3146, %v3377
      %v3431 = vadd.f32 %v3149, %v3377
      %v3432 = vadd.f32 %v3152, %v3377
      %v3433 = vadd.f32 %v3155, %v3377
      %v3434 = vadd.f32 %v3158, %v3377
      %v3435 = vadd.f32 %v3161, %v3377
      %v3436 = vadd.f32 %v3164, %v3377
      %v3437 = vadd.f32 %v3167, %v3377
      %v3438 = vadd.f32 %v3170, %v3377
      %v3439 = vadd.f32 %v3173, %v3377
      %v3440 = vadd.f32 %v3176, %v3377
      %v3441 = vadd.f32 %v3179, %v3377
      %v3442 = vadd.f32 %v3182, %v3377
      %v3443 = vadd.f32 %v3185, %v3377
      %v3444 = vadd.f32 %v3188, %v3377
      %v3445 = vadd.f32 %v3191, %v3377
      %v3446 = vadd.f32 %v3194, %v3377
      %v3447 = vadd.f32 %v3197, %v3377
      %v3448 = vadd.f32 %v3200, %v3377
      %v3449 = vadd.f32 %v3203, %v3377
      %v3450 = vadd.f32 %v3206, %v3377
      %v3451 = vadd.f32 %v3209, %v3377
      %v3452 = vadd.f32 %v3212, %v3377
      %v3453 = vadd.f32 %v3215, %v3377
      %v3454 = vadd.f32 %v3218, %v3377
      %v3455 = vadd.f32 %v3221, %v3377
      %v3456 = vadd.f32 %v3224, %v3377
      %v3457 = vadd.f32 %v3227, %v3377
      %v3458 = vadd.f32 %v3230, %v3377
      %v3459 = vadd.f32 %v3233, %v3377
      %v3460 = vadd.f32 %v3236, %v3377
      %v3461 = vadd.f32 %v3239, %v3377
      %v3462 = vadd.f32 %v3242, %v3377
      %v3463 = vadd.f32 %v3245, %v3377
      %v3464 = vadd.f32 %v3248, %v3377
      %v3465 = vadd.f32 %v3251, %v3377
      %v3466 = vadd.f32 %v3254, %v3377
      %v3467 = vadd.f32 %v3257, %v3377
      %v3468 = vadd.f32 %v3260, %v3377
      %v3469 = vadd.f32 %v3263, %v3377
      %v3470 = vadd.f32 %v3266, %v3377
      %v3471 = vadd.f32 %v3269, %v3377
      %v3472 = vadd.f32 %v3272, %v3377
      %v3473 = vadd.f32 %v3275, %v3377
      %v3474 = vadd.f32 %v3278, %v3377
      %v3475 = vadd.f32 %v3281, %v3377
      %v3476 = vadd.f32 %v3284, %v3377
      %v3477 = vadd.f32 %v3287, %v3377
      %v3478 = vadd.f32 %v3290, %v3377
      %v3479 = vadd.f32 %v3293, %v3377
      %v3480 = vadd.f32 %v3296, %v3377
      %v3481 = vadd.f32 %v3299, %v3377
      %v3482 = vadd.f32 %v3302, %v3377
      %v3483 = vadd.f32 %v3305, %v3377
      %v3484 = vadd.f32 %v3308, %v3377
      %v3485 = vadd.f32 %v3311, %v3377
      %v3486 = vadd.f32 %v3314, %v3377
      %v3487 = vadd.f32 %v3317, %v3377
      %v3488 = vadd.f32 %v3320, %v3377
      %v3489 = vadd.f32 %v3323, %v3377
      %v3490 = vadd.f32 %v3326, %v3377
      %v3491 = vadd.f32 %v3329, %v3377
      %v3492 = vadd.f32 %v3332, %v3377
      %v3493 = vadd.f32 %v3335, %v3377
      %v3494 = vadd.f32 %v3338, %v3377
      %v3495 = vadd.f32 %v3341, %v3377
      %v3496 = vadd.f32 %v3344, %v3377
      %v3497 = vadd.f32 %v3347, %v3377
      %v3498 = vadd.f32 %v3350, %v3377
      %v3499 = vadd.f32 %v3353, %v3377
      %v3500 = vadd.f32 %v3356, %v3377
      %v3501 = vadd.f32 %v3359, %v3377
      %v3502 = vadd.f32 %v3362, %v3377
      %v3503 = vadd.f32 %v3365, %v3377
      %v3504 = vadd.f32 %v3368, %v3377
      %v3505 = vadd.f32 %v3371, %v3377
      %v3506 = vadd.f32 %v3374, %v3377
      %v3507 = vxor.u32 %v3379, 2147483648
      %v3508 = vxor.u32 %v3380, 2147483648
      %v3509 = vxor.u32 %v3381, 2147483648
      %v3510 = vxor.u32 %v3382, 2147483648
      %v3511 = vxor.u32 %v3383, 2147483648
      %v3512 = vxor.u32 %v3384, 2147483648
      %v3513 = vxor.u32 %v3385, 2147483648
      %v3514 = vxor.u32 %v3386, 2147483648
      %v3515 = vxor.u32 %v3387, 2147483648
      %v3516 = vxor.u32 %v3388, 2147483648
      %v3517 = vxor.u32 %v3389, 2147483648
      %v3518 = vxor.u32 %v3390, 2147483648
      %v3519 = vxor.u32 %v3391, 2147483648
      %v3520 = vxor.u32 %v3392, 2147483648
      %v3521 = vxor.u32 %v3393, 2147483648
      %v3522 = vxor.u32 %v3394, 2147483648
      %v3523 = vxor.u32 %v3395, 2147483648
      %v3524 = vxor.u32 %v3396, 2147483648
      %v3525 = vxor.u32 %v3397, 2147483648
      %v3526 = vxor.u32 %v3398, 2147483648
      %v3527 = vxor.u32 %v3399, 2147483648
      %v3528 = vxor.u32 %v3400, 2147483648
      %v3529 = vxor.u32 %v3401, 2147483648
      %v3530 = vxor.u32 %v3402, 2147483648
      %v3531 = vxor.u32 %v3403, 2147483648
      %v3532 = vxor.u32 %v3404, 2147483648
      %v3533 = vxor.u32 %v3405, 2147483648
      %v3534 = vxor.u32 %v3406, 2147483648
      %v3535 = vxor.u32 %v3407, 2147483648
      %v3536 = vxor.u32 %v3408, 2147483648
      %v3537 = vxor.u32 %v3409, 2147483648
      %v3538 = vxor.u32 %v3410, 2147483648
      %v3539 = vxor.u32 %v3411, 2147483648
      %v3540 = vxor.u32 %v3412, 2147483648
      %v3541 = vxor.u32 %v3413, 2147483648
      %v3542 = vxor.u32 %v3414, 2147483648
      %v3543 = vxor.u32 %v3415, 2147483648
      %v3544 = vxor.u32 %v3416, 2147483648
      %v3545 = vxor.u32 %v3417, 2147483648
      %v3546 = vxor.u32 %v3418, 2147483648
      %v3547 = vxor.u32 %v3419, 2147483648
      %v3548 = vxor.u32 %v3420, 2147483648
      %v3549 = vxor.u32 %v3421, 2147483648
      %v3550 = vxor.u32 %v3422, 2147483648
      %v3551 = vxor.u32 %v3423, 2147483648
      %v3552 = vxor.u32 %v3424, 2147483648
      %v3553 = vxor.u32 %v3425, 2147483648
      %v3554 = vxor.u32 %v3426, 2147483648
      %v3555 = vxor.u32 %v3427, 2147483648
      %v3556 = vxor.u32 %v3428, 2147483648
      %v3557 = vxor.u32 %v3429, 2147483648
      %v3558 = vxor.u32 %v3430, 2147483648
      %v3559 = vxor.u32 %v3431, 2147483648
      %v3560 = vxor.u32 %v3432, 2147483648
      %v3561 = vxor.u32 %v3433, 2147483648
      %v3562 = vxor.u32 %v3434, 2147483648
      %v3563 = vxor.u32 %v3435, 2147483648
      %v3564 = vxor.u32 %v3436, 2147483648
      %v3565 = vxor.u32 %v3437, 2147483648
      %v3566 = vxor.u32 %v3438, 2147483648
      %v3567 = vxor.u32 %v3439, 2147483648
      %v3568 = vxor.u32 %v3440, 2147483648
      %v3569 = vxor.u32 %v3441, 2147483648
      %v3570 = vxor.u32 %v3442, 2147483648
      %v3571 = vxor.u32 %v3443, 2147483648
      %v3572 = vxor.u32 %v3444, 2147483648
      %v3573 = vxor.u32 %v3445, 2147483648
      %v3574 = vxor.u32 %v3446, 2147483648
      %v3575 = vxor.u32 %v3447, 2147483648
      %v3576 = vxor.u32 %v3448, 2147483648
      %v3577 = vxor.u32 %v3449, 2147483648
      %v3578 = vxor.u32 %v3450, 2147483648
      %v3579 = vxor.u32 %v3451, 2147483648
      %v3580 = vxor.u32 %v3452, 2147483648
      %v3581 = vxor.u32 %v3453, 2147483648
      %v3582 = vxor.u32 %v3454, 2147483648
      %v3583 = vxor.u32 %v3455, 2147483648
      %v3584 = vxor.u32 %v3456, 2147483648
      %v3585 = vxor.u32 %v3457, 2147483648
      %v3586 = vxor.u32 %v3458, 2147483648
      %v3587 = vxor.u32 %v3459, 2147483648
      %v3588 = vxor.u32 %v3460, 2147483648
      %v3589 = vxor.u32 %v3461, 2147483648
      %v3590 = vxor.u32 %v3462, 2147483648
      %v3591 = vxor.u32 %v3463, 2147483648
      %v3592 = vxor.u32 %v3464, 2147483648
      %v3593 = vxor.u32 %v3465, 2147483648
      %v3594 = vxor.u32 %v3466, 2147483648
      %v3595 = vxor.u32 %v3467, 2147483648
      %v3596 = vxor.u32 %v3468, 2147483648
      %v3597 = vxor.u32 %v3469, 2147483648
      %v3598 = vxor.u32 %v3470, 2147483648
      %v3599 = vxor.u32 %v3471, 2147483648
      %v3600 = vxor.u32 %v3472, 2147483648
      %v3601 = vxor.u32 %v3473, 2147483648
      %v3602 = vxor.u32 %v3474, 2147483648
      %v3603 = vxor.u32 %v3475, 2147483648
      %v3604 = vxor.u32 %v3476, 2147483648
      %v3605 = vxor.u32 %v3477, 2147483648
      %v3606 = vxor.u32 %v3478, 2147483648
      %v3607 = vxor.u32 %v3479, 2147483648
      %v3608 = vxor.u32 %v3480, 2147483648
      %v3609 = vxor.u32 %v3481, 2147483648
      %v3610 = vxor.u32 %v3482, 2147483648
      %v3611 = vxor.u32 %v3483, 2147483648
      %v3612 = vxor.u32 %v3484, 2147483648
      %v3613 = vxor.u32 %v3485, 2147483648
      %v3614 = vxor.u32 %v3486, 2147483648
      %v3615 = vxor.u32 %v3487, 2147483648
      %v3616 = vxor.u32 %v3488, 2147483648
      %v3617 = vxor.u32 %v3489, 2147483648
      %v3618 = vxor.u32 %v3490, 2147483648
      %v3619 = vxor.u32 %v3491, 2147483648
      %v3620 = vxor.u32 %v3492, 2147483648
      %v3621 = vxor.u32 %v3493, 2147483648
      %v3622 = vxor.u32 %v3494, 2147483648
      %v3623 = vxor.u32 %v3495, 2147483648
      %v3624 = vxor.u32 %v3496, 2147483648
      %v3625 = vxor.u32 %v3497, 2147483648
      %v3626 = vxor.u32 %v3498, 2147483648
      %v3627 = vxor.u32 %v3499, 2147483648
      %v3628 = vxor.u32 %v3500, 2147483648
      %v3629 = vxor.u32 %v3501, 2147483648
      %v3630 = vxor.u32 %v3502, 2147483648
      %v3631 = vxor.u32 %v3503, 2147483648
      %v3632 = vxor.u32 %v3504, 2147483648
      %v3633 = vxor.u32 %v3505, 2147483648
      %v3634 = vxor.u32 %v3506, 2147483648
      %v3635 = vmul.f32 %v3507, 1.442695
      %v3636 = vpow.pop %v3635
      %v3637 = vmul.f32 %v3508, 1.442695
      %v3638 = vpow.pop %v3637
      %v3639 = vmul.f32 %v3509, 1.442695
      %v3640 = vpow.pop %v3639
      %v3641 = vmul.f32 %v3510, 1.442695
      %v3642 = vpow.pop %v3641
      %v3643 = vmul.f32 %v3511, 1.442695
      %v3644 = vpow.pop %v3643
      %v3645 = vmul.f32 %v3512, 1.442695
      %v3646 = vpow.pop %v3645
      %v3647 = vmul.f32 %v3513, 1.442695
      %v3648 = vpow.pop %v3647
      %v3649 = vmul.f32 %v3514, 1.442695
      %v3650 = vpow.pop %v3649
      %v3651 = vmul.f32 %v3515, 1.442695
      %v3652 = vpow.pop %v3651
      %v3653 = vmul.f32 %v3516, 1.442695
      %v3654 = vpow.pop %v3653
      %v3655 = vmul.f32 %v3517, 1.442695
      %v3656 = vpow.pop %v3655
      %v3657 = vmul.f32 %v3518, 1.442695
      %v3658 = vpow.pop %v3657
      %v3659 = vmul.f32 %v3519, 1.442695
      %v3660 = vpow.pop %v3659
      %v3661 = vmul.f32 %v3520, 1.442695
      %v3662 = vpow.pop %v3661
      %v3663 = vmul.f32 %v3521, 1.442695
      %v3664 = vpow.pop %v3663
      %v3665 = vmul.f32 %v3522, 1.442695
      %v3666 = vpow.pop %v3665
      %v3667 = vmul.f32 %v3523, 1.442695
      %v3668 = vpow.pop %v3667
      %v3669 = vmul.f32 %v3524, 1.442695
      %v3670 = vpow.pop %v3669
      %v3671 = vmul.f32 %v3525, 1.442695
      %v3672 = vpow.pop %v3671
      %v3673 = vmul.f32 %v3526, 1.442695
      %v3674 = vpow.pop %v3673
      %v3675 = vmul.f32 %v3527, 1.442695
      %v3676 = vpow.pop %v3675
      %v3677 = vmul.f32 %v3528, 1.442695
      %v3678 = vpow.pop %v3677
      %v3679 = vmul.f32 %v3529, 1.442695
      %v3680 = vpow.pop %v3679
      %v3681 = vmul.f32 %v3530, 1.442695
      %v3682 = vpow.pop %v3681
      %v3683 = vmul.f32 %v3531, 1.442695
      %v3684 = vpow.pop %v3683
      %v3685 = vmul.f32 %v3532, 1.442695
      %v3686 = vpow.pop %v3685
      %v3687 = vmul.f32 %v3533, 1.442695
      %v3688 = vpow.pop %v3687
      %v3689 = vmul.f32 %v3534, 1.442695
      %v3690 = vpow.pop %v3689
      %v3691 = vmul.f32 %v3535, 1.442695
      %v3692 = vpow.pop %v3691
      %v3693 = vmul.f32 %v3536, 1.442695
      %v3694 = vpow.pop %v3693
      %v3695 = vmul.f32 %v3537, 1.442695
      %v3696 = vpow.pop %v3695
      %v3697 = vmul.f32 %v3538, 1.442695
      %v3698 = vpow.pop %v3697
      %v3699 = vmul.f32 %v3539, 1.442695
      %v3700 = vpow.pop %v3699
      %v3701 = vmul.f32 %v3540, 1.442695
      %v3702 = vpow.pop %v3701
      %v3703 = vmul.f32 %v3541, 1.442695
      %v3704 = vpow.pop %v3703
      %v3705 = vmul.f32 %v3542, 1.442695
      %v3706 = vpow.pop %v3705
      %v3707 = vmul.f32 %v3543, 1.442695
      %v3708 = vpow.pop %v3707
      %v3709 = vmul.f32 %v3544, 1.442695
      %v3710 = vpow.pop %v3709
      %v3711 = vmul.f32 %v3545, 1.442695
      %v3712 = vpow.pop %v3711
      %v3713 = vmul.f32 %v3546, 1.442695
      %v3714 = vpow.pop %v3713
      %v3715 = vmul.f32 %v3547, 1.442695
      %v3716 = vpow.pop %v3715
      %v3717 = vmul.f32 %v3548, 1.442695
      %v3718 = vpow.pop %v3717
      %v3719 = vmul.f32 %v3549, 1.442695
      %v3720 = vpow.pop %v3719
      %v3721 = vmul.f32 %v3550, 1.442695
      %v3722 = vpow.pop %v3721
      %v3723 = vmul.f32 %v3551, 1.442695
      %v3724 = vpow.pop %v3723
      %v3725 = vmul.f32 %v3552, 1.442695
      %v3726 = vpow.pop %v3725
      %v3727 = vmul.f32 %v3553, 1.442695
      %v3728 = vpow.pop %v3727
      %v3729 = vmul.f32 %v3554, 1.442695
      %v3730 = vpow.pop %v3729
      %v3731 = vmul.f32 %v3555, 1.442695
      %v3732 = vpow.pop %v3731
      %v3733 = vmul.f32 %v3556, 1.442695
      %v3734 = vpow.pop %v3733
      %v3735 = vmul.f32 %v3557, 1.442695
      %v3736 = vpow.pop %v3735
      %v3737 = vmul.f32 %v3558, 1.442695
      %v3738 = vpow.pop %v3737
      %v3739 = vmul.f32 %v3559, 1.442695
      %v3740 = vpow.pop %v3739
      %v3741 = vmul.f32 %v3560, 1.442695
      %v3742 = vpow.pop %v3741
      %v3743 = vmul.f32 %v3561, 1.442695
      %v3744 = vpow.pop %v3743
      %v3745 = vmul.f32 %v3562, 1.442695
      %v3746 = vpow.pop %v3745
      %v3747 = vmul.f32 %v3563, 1.442695
      %v3748 = vpow.pop %v3747
      %v3749 = vmul.f32 %v3564, 1.442695
      %v3750 = vpow.pop %v3749
      %v3751 = vmul.f32 %v3565, 1.442695
      %v3752 = vpow.pop %v3751
      %v3753 = vmul.f32 %v3566, 1.442695
      %v3754 = vpow.pop %v3753
      %v3755 = vmul.f32 %v3567, 1.442695
      %v3756 = vpow.pop %v3755
      %v3757 = vmul.f32 %v3568, 1.442695
      %v3758 = vpow.pop %v3757
      %v3759 = vmul.f32 %v3569, 1.442695
      %v3760 = vpow.pop %v3759
      %v3761 = vmul.f32 %v3570, 1.442695
      %v3762 = vpow.pop %v3761
      %v3763 = vmul.f32 %v3571, 1.442695
      %v3764 = vpow.pop %v3763
      %v3765 = vmul.f32 %v3572, 1.442695
      %v3766 = vpow.pop %v3765
      %v3767 = vmul.f32 %v3573, 1.442695
      %v3768 = vpow.pop %v3767
      %v3769 = vmul.f32 %v3574, 1.442695
      %v3770 = vpow.pop %v3769
      %v3771 = vmul.f32 %v3575, 1.442695
      %v3772 = vpow.pop %v3771
      %v3773 = vmul.f32 %v3576, 1.442695
      %v3774 = vpow.pop %v3773
      %v3775 = vmul.f32 %v3577, 1.442695
      %v3776 = vpow.pop %v3775
      %v3777 = vmul.f32 %v3578, 1.442695
      %v3778 = vpow.pop %v3777
      %v3779 = vmul.f32 %v3579, 1.442695
      %v3780 = vpow.pop %v3779
      %v3781 = vmul.f32 %v3580, 1.442695
      %v3782 = vpow.pop %v3781
      %v3783 = vmul.f32 %v3581, 1.442695
      %v3784 = vpow.pop %v3783
      %v3785 = vmul.f32 %v3582, 1.442695
      %v3786 = vpow.pop %v3785
      %v3787 = vmul.f32 %v3583, 1.442695
      %v3788 = vpow.pop %v3787
      %v3789 = vmul.f32 %v3584, 1.442695
      %v3790 = vpow.pop %v3789
      %v3791 = vmul.f32 %v3585, 1.442695
      %v3792 = vpow.pop %v3791
      %v3793 = vmul.f32 %v3586, 1.442695
      %v3794 = vpow.pop %v3793
      %v3795 = vmul.f32 %v3587, 1.442695
      %v3796 = vpow.pop %v3795
      %v3797 = vmul.f32 %v3588, 1.442695
      %v3798 = vpow.pop %v3797
      %v3799 = vmul.f32 %v3589, 1.442695
      %v3800 = vpow.pop %v3799
      %v3801 = vmul.f32 %v3590, 1.442695
      %v3802 = vpow.pop %v3801
      %v3803 = vmul.f32 %v3591, 1.442695
      %v3804 = vpow.pop %v3803
      %v3805 = vmul.f32 %v3592, 1.442695
      %v3806 = vpow.pop %v3805
      %v3807 = vmul.f32 %v3593, 1.442695
      %v3808 = vpow.pop %v3807
      %v3809 = vmul.f32 %v3594, 1.442695
      %v3810 = vpow.pop %v3809
      %v3811 = vmul.f32 %v3595, 1.442695
      %v3812 = vpow.pop %v3811
      %v3813 = vmul.f32 %v3596, 1.442695
      %v3814 = vpow.pop %v3813
      %v3815 = vmul.f32 %v3597, 1.442695
      %v3816 = vpow.pop %v3815
      %v3817 = vmul.f32 %v3598, 1.442695
      %v3818 = vpow.pop %v3817
      %v3819 = vmul.f32 %v3599, 1.442695
      %v3820 = vpow.pop %v3819
      %v3821 = vmul.f32 %v3600, 1.442695
      %v3822 = vpow.pop %v3821
      %v3823 = vmul.f32 %v3601, 1.442695
      %v3824 = vpow.pop %v3823
      %v3825 = vmul.f32 %v3602, 1.442695
      %v3826 = vpow.pop %v3825
      %v3827 = vmul.f32 %v3603, 1.442695
      %v3828 = vpow.pop %v3827
      %v3829 = vmul.f32 %v3604, 1.442695
      %v3830 = vpow.pop %v3829
      %v3831 = vmul.f32 %v3605, 1.442695
      %v3832 = vpow.pop %v3831
      %v3833 = vmul.f32 %v3606, 1.442695
      %v3834 = vpow.pop %v3833
      %v3835 = vmul.f32 %v3607, 1.442695
      %v3836 = vpow.pop %v3835
      %v3837 = vmul.f32 %v3608, 1.442695
      %v3838 = vpow.pop %v3837
      %v3839 = vmul.f32 %v3609, 1.442695
      %v3840 = vpow.pop %v3839
      %v3841 = vmul.f32 %v3610, 1.442695
      %v3842 = vpow.pop %v3841
      %v3843 = vmul.f32 %v3611, 1.442695
      %v3844 = vpow.pop %v3843
      %v3845 = vmul.f32 %v3612, 1.442695
      %v3846 = vpow.pop %v3845
      %v3847 = vmul.f32 %v3613, 1.442695
      %v3848 = vpow.pop %v3847
      %v3849 = vmul.f32 %v3614, 1.442695
      %v3850 = vpow.pop %v3849
      %v3851 = vmul.f32 %v3615, 1.442695
      %v3852 = vpow.pop %v3851
      %v3853 = vmul.f32 %v3616, 1.442695
      %v3854 = vpow.pop %v3853
      %v3855 = vmul.f32 %v3617, 1.442695
      %v3856 = vpow.pop %v3855
      %v3857 = vmul.f32 %v3618, 1.442695
      %v3858 = vpow.pop %v3857
      %v3859 = vmul.f32 %v3619, 1.442695
      %v3860 = vpow.pop %v3859
      %v3861 = vmul.f32 %v3620, 1.442695
      %v3862 = vpow.pop %v3861
      %v3863 = vmul.f32 %v3621, 1.442695
      %v3864 = vpow.pop %v3863
      %v3865 = vmul.f32 %v3622, 1.442695
      %v3866 = vpow.pop %v3865
      %v3867 = vmul.f32 %v3623, 1.442695
      %v3868 = vpow.pop %v3867
      %v3869 = vmul.f32 %v3624, 1.442695
      %v3870 = vpow.pop %v3869
      %v3871 = vmul.f32 %v3625, 1.442695
      %v3872 = vpow.pop %v3871
      %v3873 = vmul.f32 %v3626, 1.442695
      %v3874 = vpow.pop %v3873
      %v3875 = vmul.f32 %v3627, 1.442695
      %v3876 = vpow.pop %v3875
      %v3877 = vmul.f32 %v3628, 1.442695
      %v3878 = vpow.pop %v3877
      %v3879 = vmul.f32 %v3629, 1.442695
      %v3880 = vpow.pop %v3879
      %v3881 = vmul.f32 %v3630, 1.442695
      %v3882 = vpow.pop %v3881
      %v3883 = vmul.f32 %v3631, 1.442695
      %v3884 = vpow.pop %v3883
      %v3885 = vmul.f32 %v3632, 1.442695
      %v3886 = vpow.pop %v3885
      %v3887 = vmul.f32 %v3633, 1.442695
      %v3888 = vpow.pop %v3887
      %v3889 = vmul.f32 %v3634, 1.442695
      %v3890 = vpow.pop %v3889
      %v3891 = vadd.f32 %v3636, 1.0
      %v3892 = vadd.f32 %v3638, 1.0
      %v3893 = vadd.f32 %v3640, 1.0
      %v3894 = vadd.f32 %v3642, 1.0
      %v3895 = vadd.f32 %v3644, 1.0
      %v3896 = vadd.f32 %v3646, 1.0
      %v3897 = vadd.f32 %v3648, 1.0
      %v3898 = vadd.f32 %v3650, 1.0
      %v3899 = vadd.f32 %v3652, 1.0
      %v3900 = vadd.f32 %v3654, 1.0
      %v3901 = vadd.f32 %v3656, 1.0
      %v3902 = vadd.f32 %v3658, 1.0
      %v3903 = vadd.f32 %v3660, 1.0
      %v3904 = vadd.f32 %v3662, 1.0
      %v3905 = vadd.f32 %v3664, 1.0
      %v3906 = vadd.f32 %v3666, 1.0
      %v3907 = vadd.f32 %v3668, 1.0
      %v3908 = vadd.f32 %v3670, 1.0
      %v3909 = vadd.f32 %v3672, 1.0
      %v3910 = vadd.f32 %v3674, 1.0
      %v3911 = vadd.f32 %v3676, 1.0
      %v3912 = vadd.f32 %v3678, 1.0
      %v3913 = vadd.f32 %v3680, 1.0
      %v3914 = vadd.f32 %v3682, 1.0
      %v3915 = vadd.f32 %v3684, 1.0
      %v3916 = vadd.f32 %v3686, 1.0
      %v3917 = vadd.f32 %v3688, 1.0
      %v3918 = vadd.f32 %v3690, 1.0
      %v3919 = vadd.f32 %v3692, 1.0
      %v3920 = vadd.f32 %v3694, 1.0
      %v3921 = vadd.f32 %v3696, 1.0
      %v3922 = vadd.f32 %v3698, 1.0
      %v3923 = vadd.f32 %v3700, 1.0
      %v3924 = vadd.f32 %v3702, 1.0
      %v3925 = vadd.f32 %v3704, 1.0
      %v3926 = vadd.f32 %v3706, 1.0
      %v3927 = vadd.f32 %v3708, 1.0
      %v3928 = vadd.f32 %v3710, 1.0
      %v3929 = vadd.f32 %v3712, 1.0
      %v3930 = vadd.f32 %v3714, 1.0
      %v3931 = vadd.f32 %v3716, 1.0
      %v3932 = vadd.f32 %v3718, 1.0
      %v3933 = vadd.f32 %v3720, 1.0
      %v3934 = vadd.f32 %v3722, 1.0
      %v3935 = vadd.f32 %v3724, 1.0
      %v3936 = vadd.f32 %v3726, 1.0
      %v3937 = vadd.f32 %v3728, 1.0
      %v3938 = vadd.f32 %v3730, 1.0
      %v3939 = vadd.f32 %v3732, 1.0
      %v3940 = vadd.f32 %v3734, 1.0
      %v3941 = vadd.f32 %v3736, 1.0
      %v3942 = vadd.f32 %v3738, 1.0
      %v3943 = vadd.f32 %v3740, 1.0
      %v3944 = vadd.f32 %v3742, 1.0
      %v3945 = vadd.f32 %v3744, 1.0
      %v3946 = vadd.f32 %v3746, 1.0
      %v3947 = vadd.f32 %v3748, 1.0
      %v3948 = vadd.f32 %v3750, 1.0
      %v3949 = vadd.f32 %v3752, 1.0
      %v3950 = vadd.f32 %v3754, 1.0
      %v3951 = vadd.f32 %v3756, 1.0
      %v3952 = vadd.f32 %v3758, 1.0
      %v3953 = vadd.f32 %v3760, 1.0
      %v3954 = vadd.f32 %v3762, 1.0
      %v3955 = vadd.f32 %v3764, 1.0
      %v3956 = vadd.f32 %v3766, 1.0
      %v3957 = vadd.f32 %v3768, 1.0
      %v3958 = vadd.f32 %v3770, 1.0
      %v3959 = vadd.f32 %v3772, 1.0
      %v3960 = vadd.f32 %v3774, 1.0
      %v3961 = vadd.f32 %v3776, 1.0
      %v3962 = vadd.f32 %v3778, 1.0
      %v3963 = vadd.f32 %v3780, 1.0
      %v3964 = vadd.f32 %v3782, 1.0
      %v3965 = vadd.f32 %v3784, 1.0
      %v3966 = vadd.f32 %v3786, 1.0
      %v3967 = vadd.f32 %v3788, 1.0
      %v3968 = vadd.f32 %v3790, 1.0
      %v3969 = vadd.f32 %v3792, 1.0
      %v3970 = vadd.f32 %v3794, 1.0
      %v3971 = vadd.f32 %v3796, 1.0
      %v3972 = vadd.f32 %v3798, 1.0
      %v3973 = vadd.f32 %v3800, 1.0
      %v3974 = vadd.f32 %v3802, 1.0
      %v3975 = vadd.f32 %v3804, 1.0
      %v3976 = vadd.f32 %v3806, 1.0
      %v3977 = vadd.f32 %v3808, 1.0
      %v3978 = vadd.f32 %v3810, 1.0
      %v3979 = vadd.f32 %v3812, 1.0
      %v3980 = vadd.f32 %v3814, 1.0
      %v3981 = vadd.f32 %v3816, 1.0
      %v3982 = vadd.f32 %v3818, 1.0
      %v3983 = vadd.f32 %v3820, 1.0
      %v3984 = vadd.f32 %v3822, 1.0
      %v3985 = vadd.f32 %v3824, 1.0
      %v3986 = vadd.f32 %v3826, 1.0
      %v3987 = vadd.f32 %v3828, 1.0
      %v3988 = vadd.f32 %v3830, 1.0
      %v3989 = vadd.f32 %v3832, 1.0
      %v3990 = vadd.f32 %v3834, 1.0
      %v3991 = vadd.f32 %v3836, 1.0
      %v3992 = vadd.f32 %v3838, 1.0
      %v3993 = vadd.f32 %v3840, 1.0
      %v3994 = vadd.f32 %v3842, 1.0
      %v3995 = vadd.f32 %v3844, 1.0
      %v3996 = vadd.f32 %v3846, 1.0
      %v3997 = vadd.f32 %v3848, 1.0
      %v3998 = vadd.f32 %v3850, 1.0
      %v3999 = vadd.f32 %v3852, 1.0
      %v4000 = vadd.f32 %v3854, 1.0
      %v4001 = vadd.f32 %v3856, 1.0
      %v4002 = vadd.f32 %v3858, 1.0
      %v4003 = vadd.f32 %v3860, 1.0
      %v4004 = vadd.f32 %v3862, 1.0
      %v4005 = vadd.f32 %v3864, 1.0
      %v4006 = vadd.f32 %v3866, 1.0
      %v4007 = vadd.f32 %v3868, 1.0
      %v4008 = vadd.f32 %v3870, 1.0
      %v4009 = vadd.f32 %v3872, 1.0
      %v4010 = vadd.f32 %v3874, 1.0
      %v4011 = vadd.f32 %v3876, 1.0
      %v4012 = vadd.f32 %v3878, 1.0
      %v4013 = vadd.f32 %v3880, 1.0
      %v4014 = vadd.f32 %v3882, 1.0
      %v4015 = vadd.f32 %v3884, 1.0
      %v4016 = vadd.f32 %v3886, 1.0
      %v4017 = vadd.f32 %v3888, 1.0
      %v4018 = vadd.f32 %v3890, 1.0
      %v4019 = vrcp.pop %v3891
      %v4020 = vmul.f32 %v3891, %v4019
      %v4021 = vsub.f32 1.0, %v4020
      %v4022 = vmul.f32 %v4019, %v4021
      %v4023 = vadd.f32 %v4019, %v4022
      %vm4024 = vweird.f32 %v3891
      %vm4025 = vweird.f32 %v4019
      %vm4026 = vmor %vm4024, %vm4025
      %v4027 = vsel %vm4026, %v4019, %v4023
      %v4028 = vand.u32 2147483647, %v3891
      %vm4029 = vcmp.eq.f32.partialorder %v4028, 8.507059e+37
      %v4030 = vand.u32 %v3891, 2147483648
      %v4031 = vor.u32 1.1754944e-38, %v4030
      %v4032 = vsel %vm4029, %v4031, %v4027
      %v4033 = vmul.f32 1.0, %v4032
      %v4034 = vrcp.pop %v3892
      %v4035 = vmul.f32 %v3892, %v4034
      %v4036 = vsub.f32 1.0, %v4035
      %v4037 = vmul.f32 %v4034, %v4036
      %v4038 = vadd.f32 %v4034, %v4037
      %vm4039 = vweird.f32 %v3892
      %vm4040 = vweird.f32 %v4034
      %vm4041 = vmor %vm4039, %vm4040
      %v4042 = vsel %vm4041, %v4034, %v4038
      %v4043 = vand.u32 2147483647, %v3892
      %vm4044 = vcmp.eq.f32.partialorder %v4043, 8.507059e+37
      %v4045 = vand.u32 %v3892, 2147483648
      %v4046 = vor.u32 1.1754944e-38, %v4045
      %v4047 = vsel %vm4044, %v4046, %v4042
      %v4048 = vmul.f32 1.0, %v4047
      %v4049 = vrcp.pop %v3893
      %v4050 = vmul.f32 %v3893, %v4049
      %v4051 = vsub.f32 1.0, %v4050
      %v4052 = vmul.f32 %v4049, %v4051
      %v4053 = vadd.f32 %v4049, %v4052
      %vm4054 = vweird.f32 %v3893
      %vm4055 = vweird.f32 %v4049
      %vm4056 = vmor %vm4054, %vm4055
      %v4057 = vsel %vm4056, %v4049, %v4053
      %v4058 = vand.u32 2147483647, %v3893
      %vm4059 = vcmp.eq.f32.partialorder %v4058, 8.507059e+37
      %v4060 = vand.u32 %v3893, 2147483648
      %v4061 = vor.u32 1.1754944e-38, %v4060
      %v4062 = vsel %vm4059, %v4061, %v4057
      %v4063 = vmul.f32 1.0, %v4062
      %v4064 = vrcp.pop %v3894
      %v4065 = vmul.f32 %v3894, %v4064
      %v4066 = vsub.f32 1.0, %v4065
      %v4067 = vmul.f32 %v4064, %v4066
      %v4068 = vadd.f32 %v4064, %v4067
      %vm4069 = vweird.f32 %v3894
      %vm4070 = vweird.f32 %v4064
      %vm4071 = vmor %vm4069, %vm4070
      %v4072 = vsel %vm4071, %v4064, %v4068
      %v4073 = vand.u32 2147483647, %v3894
      %vm4074 = vcmp.eq.f32.partialorder %v4073, 8.507059e+37
      %v4075 = vand.u32 %v3894, 2147483648
      %v4076 = vor.u32 1.1754944e-38, %v4075
      %v4077 = vsel %vm4074, %v4076, %v4072
      %v4078 = vmul.f32 1.0, %v4077
      %v4079 = vrcp.pop %v3895
      %v4080 = vmul.f32 %v3895, %v4079
      %v4081 = vsub.f32 1.0, %v4080
      %v4082 = vmul.f32 %v4079, %v4081
      %v4083 = vadd.f32 %v4079, %v4082
      %vm4084 = vweird.f32 %v3895
      %vm4085 = vweird.f32 %v4079
      %vm4086 = vmor %vm4084, %vm4085
      %v4087 = vsel %vm4086, %v4079, %v4083
      %v4088 = vand.u32 2147483647, %v3895
      %vm4089 = vcmp.eq.f32.partialorder %v4088, 8.507059e+37
      %v4090 = vand.u32 %v3895, 2147483648
      %v4091 = vor.u32 1.1754944e-38, %v4090
      %v4092 = vsel %vm4089, %v4091, %v4087
      %v4093 = vmul.f32 1.0, %v4092
      %v4094 = vrcp.pop %v3896
      %v4095 = vmul.f32 %v3896, %v4094
      %v4096 = vsub.f32 1.0, %v4095
      %v4097 = vmul.f32 %v4094, %v4096
      %v4098 = vadd.f32 %v4094, %v4097
      %vm4099 = vweird.f32 %v3896
      %vm4100 = vweird.f32 %v4094
      %vm4101 = vmor %vm4099, %vm4100
      %v4102 = vsel %vm4101, %v4094, %v4098
      %v4103 = vand.u32 2147483647, %v3896
      %vm4104 = vcmp.eq.f32.partialorder %v4103, 8.507059e+37
      %v4105 = vand.u32 %v3896, 2147483648
      %v4106 = vor.u32 1.1754944e-38, %v4105
      %v4107 = vsel %vm4104, %v4106, %v4102
      %v4108 = vmul.f32 1.0, %v4107
      %v4109 = vrcp.pop %v3897
      %v4110 = vmul.f32 %v3897, %v4109
      %v4111 = vsub.f32 1.0, %v4110
      %v4112 = vmul.f32 %v4109, %v4111
      %v4113 = vadd.f32 %v4109, %v4112
      %vm4114 = vweird.f32 %v3897
      %vm4115 = vweird.f32 %v4109
      %vm4116 = vmor %vm4114, %vm4115
      %v4117 = vsel %vm4116, %v4109, %v4113
      %v4118 = vand.u32 2147483647, %v3897
      %vm4119 = vcmp.eq.f32.partialorder %v4118, 8.507059e+37
      %v4120 = vand.u32 %v3897, 2147483648
      %v4121 = vor.u32 1.1754944e-38, %v4120
      %v4122 = vsel %vm4119, %v4121, %v4117
      %v4123 = vmul.f32 1.0, %v4122
      %v4124 = vrcp.pop %v3898
      %v4125 = vmul.f32 %v3898, %v4124
      %v4126 = vsub.f32 1.0, %v4125
      %v4127 = vmul.f32 %v4124, %v4126
      %v4128 = vadd.f32 %v4124, %v4127
      %vm4129 = vweird.f32 %v3898
      %vm4130 = vweird.f32 %v4124
      %vm4131 = vmor %vm4129, %vm4130
      %v4132 = vsel %vm4131, %v4124, %v4128
      %v4133 = vand.u32 2147483647, %v3898
      %vm4134 = vcmp.eq.f32.partialorder %v4133, 8.507059e+37
      %v4135 = vand.u32 %v3898, 2147483648
      %v4136 = vor.u32 1.1754944e-38, %v4135
      %v4137 = vsel %vm4134, %v4136, %v4132
      %v4138 = vmul.f32 1.0, %v4137
      %v4139 = vrcp.pop %v3899
      %v4140 = vmul.f32 %v3899, %v4139
      %v4141 = vsub.f32 1.0, %v4140
      %v4142 = vmul.f32 %v4139, %v4141
      %v4143 = vadd.f32 %v4139, %v4142
      %vm4144 = vweird.f32 %v3899
      %vm4145 = vweird.f32 %v4139
      %vm4146 = vmor %vm4144, %vm4145
      %v4147 = vsel %vm4146, %v4139, %v4143
      %v4148 = vand.u32 2147483647, %v3899
      %vm4149 = vcmp.eq.f32.partialorder %v4148, 8.507059e+37
      %v4150 = vand.u32 %v3899, 2147483648
      %v4151 = vor.u32 1.1754944e-38, %v4150
      %v4152 = vsel %vm4149, %v4151, %v4147
      %v4153 = vmul.f32 1.0, %v4152
      %v4154 = vrcp.pop %v3900
      %v4155 = vmul.f32 %v3900, %v4154
      %v4156 = vsub.f32 1.0, %v4155
      %v4157 = vmul.f32 %v4154, %v4156
      %v4158 = vadd.f32 %v4154, %v4157
      %vm4159 = vweird.f32 %v3900
      %vm4160 = vweird.f32 %v4154
      %vm4161 = vmor %vm4159, %vm4160
      %v4162 = vsel %vm4161, %v4154, %v4158
      %v4163 = vand.u32 2147483647, %v3900
      %vm4164 = vcmp.eq.f32.partialorder %v4163, 8.507059e+37
      %v4165 = vand.u32 %v3900, 2147483648
      %v4166 = vor.u32 1.1754944e-38, %v4165
      %v4167 = vsel %vm4164, %v4166, %v4162
      %v4168 = vmul.f32 1.0, %v4167
      %v4169 = vrcp.pop %v3901
      %v4170 = vmul.f32 %v3901, %v4169
      %v4171 = vsub.f32 1.0, %v4170
      %v4172 = vmul.f32 %v4169, %v4171
      %v4173 = vadd.f32 %v4169, %v4172
      %vm4174 = vweird.f32 %v3901
      %vm4175 = vweird.f32 %v4169
      %vm4176 = vmor %vm4174, %vm4175
      %v4177 = vsel %vm4176, %v4169, %v4173
      %v4178 = vand.u32 2147483647, %v3901
      %vm4179 = vcmp.eq.f32.partialorder %v4178, 8.507059e+37
      %v4180 = vand.u32 %v3901, 2147483648
      %v4181 = vor.u32 1.1754944e-38, %v4180
      %v4182 = vsel %vm4179, %v4181, %v4177
      %v4183 = vmul.f32 1.0, %v4182
      %v4184 = vrcp.pop %v3902
      %v4185 = vmul.f32 %v3902, %v4184
      %v4186 = vsub.f32 1.0, %v4185
      %v4187 = vmul.f32 %v4184, %v4186
      %v4188 = vadd.f32 %v4184, %v4187
      %vm4189 = vweird.f32 %v3902
      %vm4190 = vweird.f32 %v4184
      %vm4191 = vmor %vm4189, %vm4190
      %v4192 = vsel %vm4191, %v4184, %v4188
      %v4193 = vand.u32 2147483647, %v3902
      %vm4194 = vcmp.eq.f32.partialorder %v4193, 8.507059e+37
      %v4195 = vand.u32 %v3902, 2147483648
      %v4196 = vor.u32 1.1754944e-38, %v4195
      %v4197 = vsel %vm4194, %v4196, %v4192
      %v4198 = vmul.f32 1.0, %v4197
      %v4199 = vrcp.pop %v3903
      %v4200 = vmul.f32 %v3903, %v4199
      %v4201 = vsub.f32 1.0, %v4200
      %v4202 = vmul.f32 %v4199, %v4201
      %v4203 = vadd.f32 %v4199, %v4202
      %vm4204 = vweird.f32 %v3903
      %vm4205 = vweird.f32 %v4199
      %vm4206 = vmor %vm4204, %vm4205
      %v4207 = vsel %vm4206, %v4199, %v4203
      %v4208 = vand.u32 2147483647, %v3903
      %vm4209 = vcmp.eq.f32.partialorder %v4208, 8.507059e+37
      %v4210 = vand.u32 %v3903, 2147483648
      %v4211 = vor.u32 1.1754944e-38, %v4210
      %v4212 = vsel %vm4209, %v4211, %v4207
      %v4213 = vmul.f32 1.0, %v4212
      %v4214 = vrcp.pop %v3904
      %v4215 = vmul.f32 %v3904, %v4214
      %v4216 = vsub.f32 1.0, %v4215
      %v4217 = vmul.f32 %v4214, %v4216
      %v4218 = vadd.f32 %v4214, %v4217
      %vm4219 = vweird.f32 %v3904
      %vm4220 = vweird.f32 %v4214
      %vm4221 = vmor %vm4219, %vm4220
      %v4222 = vsel %vm4221, %v4214, %v4218
      %v4223 = vand.u32 2147483647, %v3904
      %vm4224 = vcmp.eq.f32.partialorder %v4223, 8.507059e+37
      %v4225 = vand.u32 %v3904, 2147483648
      %v4226 = vor.u32 1.1754944e-38, %v4225
      %v4227 = vsel %vm4224, %v4226, %v4222
      %v4228 = vmul.f32 1.0, %v4227
      %v4229 = vrcp.pop %v3905
      %v4230 = vmul.f32 %v3905, %v4229
      %v4231 = vsub.f32 1.0, %v4230
      %v4232 = vmul.f32 %v4229, %v4231
      %v4233 = vadd.f32 %v4229, %v4232
      %vm4234 = vweird.f32 %v3905
      %vm4235 = vweird.f32 %v4229
      %vm4236 = vmor %vm4234, %vm4235
      %v4237 = vsel %vm4236, %v4229, %v4233
      %v4238 = vand.u32 2147483647, %v3905
      %vm4239 = vcmp.eq.f32.partialorder %v4238, 8.507059e+37
      %v4240 = vand.u32 %v3905, 2147483648
      %v4241 = vor.u32 1.1754944e-38, %v4240
      %v4242 = vsel %vm4239, %v4241, %v4237
      %v4243 = vmul.f32 1.0, %v4242
      %v4244 = vrcp.pop %v3906
      %v4245 = vmul.f32 %v3906, %v4244
      %v4246 = vsub.f32 1.0, %v4245
      %v4247 = vmul.f32 %v4244, %v4246
      %v4248 = vadd.f32 %v4244, %v4247
      %vm4249 = vweird.f32 %v3906
      %vm4250 = vweird.f32 %v4244
      %vm4251 = vmor %vm4249, %vm4250
      %v4252 = vsel %vm4251, %v4244, %v4248
      %v4253 = vand.u32 2147483647, %v3906
      %vm4254 = vcmp.eq.f32.partialorder %v4253, 8.507059e+37
      %v4255 = vand.u32 %v3906, 2147483648
      %v4256 = vor.u32 1.1754944e-38, %v4255
      %v4257 = vsel %vm4254, %v4256, %v4252
      %v4258 = vmul.f32 1.0, %v4257
      %v4259 = vrcp.pop %v3907
      %v4260 = vmul.f32 %v3907, %v4259
      %v4261 = vsub.f32 1.0, %v4260
      %v4262 = vmul.f32 %v4259, %v4261
      %v4263 = vadd.f32 %v4259, %v4262
      %vm4264 = vweird.f32 %v3907
      %vm4265 = vweird.f32 %v4259
      %vm4266 = vmor %vm4264, %vm4265
      %v4267 = vsel %vm4266, %v4259, %v4263
      %v4268 = vand.u32 2147483647, %v3907
      %vm4269 = vcmp.eq.f32.partialorder %v4268, 8.507059e+37
      %v4270 = vand.u32 %v3907, 2147483648
      %v4271 = vor.u32 1.1754944e-38, %v4270
      %v4272 = vsel %vm4269, %v4271, %v4267
      %v4273 = vmul.f32 1.0, %v4272
      %v4274 = vrcp.pop %v3908
      %v4275 = vmul.f32 %v3908, %v4274
      %v4276 = vsub.f32 1.0, %v4275
      %v4277 = vmul.f32 %v4274, %v4276
      %v4278 = vadd.f32 %v4274, %v4277
      %vm4279 = vweird.f32 %v3908
      %vm4280 = vweird.f32 %v4274
      %vm4281 = vmor %vm4279, %vm4280
      %v4282 = vsel %vm4281, %v4274, %v4278
      %v4283 = vand.u32 2147483647, %v3908
      %vm4284 = vcmp.eq.f32.partialorder %v4283, 8.507059e+37
      %v4285 = vand.u32 %v3908, 2147483648
      %v4286 = vor.u32 1.1754944e-38, %v4285
      %v4287 = vsel %vm4284, %v4286, %v4282
      %v4288 = vmul.f32 1.0, %v4287
      %v4289 = vrcp.pop %v3909
      %v4290 = vmul.f32 %v3909, %v4289
      %v4291 = vsub.f32 1.0, %v4290
      %v4292 = vmul.f32 %v4289, %v4291
      %v4293 = vadd.f32 %v4289, %v4292
      %vm4294 = vweird.f32 %v3909
      %vm4295 = vweird.f32 %v4289
      %vm4296 = vmor %vm4294, %vm4295
      %v4297 = vsel %vm4296, %v4289, %v4293
      %v4298 = vand.u32 2147483647, %v3909
      %vm4299 = vcmp.eq.f32.partialorder %v4298, 8.507059e+37
      %v4300 = vand.u32 %v3909, 2147483648
      %v4301 = vor.u32 1.1754944e-38, %v4300
      %v4302 = vsel %vm4299, %v4301, %v4297
      %v4303 = vmul.f32 1.0, %v4302
      %v4304 = vrcp.pop %v3910
      %v4305 = vmul.f32 %v3910, %v4304
      %v4306 = vsub.f32 1.0, %v4305
      %v4307 = vmul.f32 %v4304, %v4306
      %v4308 = vadd.f32 %v4304, %v4307
      %vm4309 = vweird.f32 %v3910
      %vm4310 = vweird.f32 %v4304
      %vm4311 = vmor %vm4309, %vm4310
      %v4312 = vsel %vm4311, %v4304, %v4308
      %v4313 = vand.u32 2147483647, %v3910
      %vm4314 = vcmp.eq.f32.partialorder %v4313, 8.507059e+37
      %v4315 = vand.u32 %v3910, 2147483648
      %v4316 = vor.u32 1.1754944e-38, %v4315
      %v4317 = vsel %vm4314, %v4316, %v4312
      %v4318 = vmul.f32 1.0, %v4317
      %v4319 = vrcp.pop %v3911
      %v4320 = vmul.f32 %v3911, %v4319
      %v4321 = vsub.f32 1.0, %v4320
      %v4322 = vmul.f32 %v4319, %v4321
      %v4323 = vadd.f32 %v4319, %v4322
      %vm4324 = vweird.f32 %v3911
      %vm4325 = vweird.f32 %v4319
      %vm4326 = vmor %vm4324, %vm4325
      %v4327 = vsel %vm4326, %v4319, %v4323
      %v4328 = vand.u32 2147483647, %v3911
      %vm4329 = vcmp.eq.f32.partialorder %v4328, 8.507059e+37
      %v4330 = vand.u32 %v3911, 2147483648
      %v4331 = vor.u32 1.1754944e-38, %v4330
      %v4332 = vsel %vm4329, %v4331, %v4327
      %v4333 = vmul.f32 1.0, %v4332
      %v4334 = vrcp.pop %v3912
      %v4335 = vmul.f32 %v3912, %v4334
      %v4336 = vsub.f32 1.0, %v4335
      %v4337 = vmul.f32 %v4334, %v4336
      %v4338 = vadd.f32 %v4334, %v4337
      %vm4339 = vweird.f32 %v3912
      %vm4340 = vweird.f32 %v4334
      %vm4341 = vmor %vm4339, %vm4340
      %v4342 = vsel %vm4341, %v4334, %v4338
      %v4343 = vand.u32 2147483647, %v3912
      %vm4344 = vcmp.eq.f32.partialorder %v4343, 8.507059e+37
      %v4345 = vand.u32 %v3912, 2147483648
      %v4346 = vor.u32 1.1754944e-38, %v4345
      %v4347 = vsel %vm4344, %v4346, %v4342
      %v4348 = vmul.f32 1.0, %v4347
      %v4349 = vrcp.pop %v3913
      %v4350 = vmul.f32 %v3913, %v4349
      %v4351 = vsub.f32 1.0, %v4350
      %v4352 = vmul.f32 %v4349, %v4351
      %v4353 = vadd.f32 %v4349, %v4352
      %vm4354 = vweird.f32 %v3913
      %vm4355 = vweird.f32 %v4349
      %vm4356 = vmor %vm4354, %vm4355
      %v4357 = vsel %vm4356, %v4349, %v4353
      %v4358 = vand.u32 2147483647, %v3913
      %vm4359 = vcmp.eq.f32.partialorder %v4358, 8.507059e+37
      %v4360 = vand.u32 %v3913, 2147483648
      %v4361 = vor.u32 1.1754944e-38, %v4360
      %v4362 = vsel %vm4359, %v4361, %v4357
      %v4363 = vmul.f32 1.0, %v4362
      %v4364 = vrcp.pop %v3914
      %v4365 = vmul.f32 %v3914, %v4364
      %v4366 = vsub.f32 1.0, %v4365
      %v4367 = vmul.f32 %v4364, %v4366
      %v4368 = vadd.f32 %v4364, %v4367
      %vm4369 = vweird.f32 %v3914
      %vm4370 = vweird.f32 %v4364
      %vm4371 = vmor %vm4369, %vm4370
      %v4372 = vsel %vm4371, %v4364, %v4368
      %v4373 = vand.u32 2147483647, %v3914
      %vm4374 = vcmp.eq.f32.partialorder %v4373, 8.507059e+37
      %v4375 = vand.u32 %v3914, 2147483648
      %v4376 = vor.u32 1.1754944e-38, %v4375
      %v4377 = vsel %vm4374, %v4376, %v4372
      %v4378 = vmul.f32 1.0, %v4377
      %v4379 = vrcp.pop %v3915
      %v4380 = vmul.f32 %v3915, %v4379
      %v4381 = vsub.f32 1.0, %v4380
      %v4382 = vmul.f32 %v4379, %v4381
      %v4383 = vadd.f32 %v4379, %v4382
      %vm4384 = vweird.f32 %v3915
      %vm4385 = vweird.f32 %v4379
      %vm4386 = vmor %vm4384, %vm4385
      %v4387 = vsel %vm4386, %v4379, %v4383
      %v4388 = vand.u32 2147483647, %v3915
      %vm4389 = vcmp.eq.f32.partialorder %v4388, 8.507059e+37
      %v4390 = vand.u32 %v3915, 2147483648
      %v4391 = vor.u32 1.1754944e-38, %v4390
      %v4392 = vsel %vm4389, %v4391, %v4387
      %v4393 = vmul.f32 1.0, %v4392
      %v4394 = vrcp.pop %v3916
      %v4395 = vmul.f32 %v3916, %v4394
      %v4396 = vsub.f32 1.0, %v4395
      %v4397 = vmul.f32 %v4394, %v4396
      %v4398 = vadd.f32 %v4394, %v4397
      %vm4399 = vweird.f32 %v3916
      %vm4400 = vweird.f32 %v4394
      %vm4401 = vmor %vm4399, %vm4400
      %v4402 = vsel %vm4401, %v4394, %v4398
      %v4403 = vand.u32 2147483647, %v3916
      %vm4404 = vcmp.eq.f32.partialorder %v4403, 8.507059e+37
      %v4405 = vand.u32 %v3916, 2147483648
      %v4406 = vor.u32 1.1754944e-38, %v4405
      %v4407 = vsel %vm4404, %v4406, %v4402
      %v4408 = vmul.f32 1.0, %v4407
      %v4409 = vrcp.pop %v3917
      %v4410 = vmul.f32 %v3917, %v4409
      %v4411 = vsub.f32 1.0, %v4410
      %v4412 = vmul.f32 %v4409, %v4411
      %v4413 = vadd.f32 %v4409, %v4412
      %vm4414 = vweird.f32 %v3917
      %vm4415 = vweird.f32 %v4409
      %vm4416 = vmor %vm4414, %vm4415
      %v4417 = vsel %vm4416, %v4409, %v4413
      %v4418 = vand.u32 2147483647, %v3917
      %vm4419 = vcmp.eq.f32.partialorder %v4418, 8.507059e+37
      %v4420 = vand.u32 %v3917, 2147483648
      %v4421 = vor.u32 1.1754944e-38, %v4420
      %v4422 = vsel %vm4419, %v4421, %v4417
      %v4423 = vmul.f32 1.0, %v4422
      %v4424 = vrcp.pop %v3918
      %v4425 = vmul.f32 %v3918, %v4424
      %v4426 = vsub.f32 1.0, %v4425
      %v4427 = vmul.f32 %v4424, %v4426
      %v4428 = vadd.f32 %v4424, %v4427
      %vm4429 = vweird.f32 %v3918
      %vm4430 = vweird.f32 %v4424
      %vm4431 = vmor %vm4429, %vm4430
      %v4432 = vsel %vm4431, %v4424, %v4428
      %v4433 = vand.u32 2147483647, %v3918
      %vm4434 = vcmp.eq.f32.partialorder %v4433, 8.507059e+37
      %v4435 = vand.u32 %v3918, 2147483648
      %v4436 = vor.u32 1.1754944e-38, %v4435
      %v4437 = vsel %vm4434, %v4436, %v4432
      %v4438 = vmul.f32 1.0, %v4437
      %v4439 = vrcp.pop %v3919
      %v4440 = vmul.f32 %v3919, %v4439
      %v4441 = vsub.f32 1.0, %v4440
      %v4442 = vmul.f32 %v4439, %v4441
      %v4443 = vadd.f32 %v4439, %v4442
      %vm4444 = vweird.f32 %v3919
      %vm4445 = vweird.f32 %v4439
      %vm4446 = vmor %vm4444, %vm4445
      %v4447 = vsel %vm4446, %v4439, %v4443
      %v4448 = vand.u32 2147483647, %v3919
      %vm4449 = vcmp.eq.f32.partialorder %v4448, 8.507059e+37
      %v4450 = vand.u32 %v3919, 2147483648
      %v4451 = vor.u32 1.1754944e-38, %v4450
      %v4452 = vsel %vm4449, %v4451, %v4447
      %v4453 = vmul.f32 1.0, %v4452
      %v4454 = vrcp.pop %v3920
      %v4455 = vmul.f32 %v3920, %v4454
      %v4456 = vsub.f32 1.0, %v4455
      %v4457 = vmul.f32 %v4454, %v4456
      %v4458 = vadd.f32 %v4454, %v4457
      %vm4459 = vweird.f32 %v3920
      %vm4460 = vweird.f32 %v4454
      %vm4461 = vmor %vm4459, %vm4460
      %v4462 = vsel %vm4461, %v4454, %v4458
      %v4463 = vand.u32 2147483647, %v3920
      %vm4464 = vcmp.eq.f32.partialorder %v4463, 8.507059e+37
      %v4465 = vand.u32 %v3920, 2147483648
      %v4466 = vor.u32 1.1754944e-38, %v4465
      %v4467 = vsel %vm4464, %v4466, %v4462
      %v4468 = vmul.f32 1.0, %v4467
      %v4469 = vrcp.pop %v3921
      %v4470 = vmul.f32 %v3921, %v4469
      %v4471 = vsub.f32 1.0, %v4470
      %v4472 = vmul.f32 %v4469, %v4471
      %v4473 = vadd.f32 %v4469, %v4472
      %vm4474 = vweird.f32 %v3921
      %vm4475 = vweird.f32 %v4469
      %vm4476 = vmor %vm4474, %vm4475
      %v4477 = vsel %vm4476, %v4469, %v4473
      %v4478 = vand.u32 2147483647, %v3921
      %vm4479 = vcmp.eq.f32.partialorder %v4478, 8.507059e+37
      %v4480 = vand.u32 %v3921, 2147483648
      %v4481 = vor.u32 1.1754944e-38, %v4480
      %v4482 = vsel %vm4479, %v4481, %v4477
      %v4483 = vmul.f32 1.0, %v4482
      %v4484 = vrcp.pop %v3922
      %v4485 = vmul.f32 %v3922, %v4484
      %v4486 = vsub.f32 1.0, %v4485
      %v4487 = vmul.f32 %v4484, %v4486
      %v4488 = vadd.f32 %v4484, %v4487
      %vm4489 = vweird.f32 %v3922
      %vm4490 = vweird.f32 %v4484
      %vm4491 = vmor %vm4489, %vm4490
      %v4492 = vsel %vm4491, %v4484, %v4488
      %v4493 = vand.u32 2147483647, %v3922
      %vm4494 = vcmp.eq.f32.partialorder %v4493, 8.507059e+37
      %v4495 = vand.u32 %v3922, 2147483648
      %v4496 = vor.u32 1.1754944e-38, %v4495
      %v4497 = vsel %vm4494, %v4496, %v4492
      %v4498 = vmul.f32 1.0, %v4497
      %v4499 = vrcp.pop %v3923
      %v4500 = vmul.f32 %v3923, %v4499
      %v4501 = vsub.f32 1.0, %v4500
      %v4502 = vmul.f32 %v4499, %v4501
      %v4503 = vadd.f32 %v4499, %v4502
      %vm4504 = vweird.f32 %v3923
      %vm4505 = vweird.f32 %v4499
      %vm4506 = vmor %vm4504, %vm4505
      %v4507 = vsel %vm4506, %v4499, %v4503
      %v4508 = vand.u32 2147483647, %v3923
      %vm4509 = vcmp.eq.f32.partialorder %v4508, 8.507059e+37
      %v4510 = vand.u32 %v3923, 2147483648
      %v4511 = vor.u32 1.1754944e-38, %v4510
      %v4512 = vsel %vm4509, %v4511, %v4507
      %v4513 = vmul.f32 1.0, %v4512
      %v4514 = vrcp.pop %v3924
      %v4515 = vmul.f32 %v3924, %v4514
      %v4516 = vsub.f32 1.0, %v4515
      %v4517 = vmul.f32 %v4514, %v4516
      %v4518 = vadd.f32 %v4514, %v4517
      %vm4519 = vweird.f32 %v3924
      %vm4520 = vweird.f32 %v4514
      %vm4521 = vmor %vm4519, %vm4520
      %v4522 = vsel %vm4521, %v4514, %v4518
      %v4523 = vand.u32 2147483647, %v3924
      %vm4524 = vcmp.eq.f32.partialorder %v4523, 8.507059e+37
      %v4525 = vand.u32 %v3924, 2147483648
      %v4526 = vor.u32 1.1754944e-38, %v4525
      %v4527 = vsel %vm4524, %v4526, %v4522
      %v4528 = vmul.f32 1.0, %v4527
      %v4529 = vrcp.pop %v3925
      %v4530 = vmul.f32 %v3925, %v4529
      %v4531 = vsub.f32 1.0, %v4530
      %v4532 = vmul.f32 %v4529, %v4531
      %v4533 = vadd.f32 %v4529, %v4532
      %vm4534 = vweird.f32 %v3925
      %vm4535 = vweird.f32 %v4529
      %vm4536 = vmor %vm4534, %vm4535
      %v4537 = vsel %vm4536, %v4529, %v4533
      %v4538 = vand.u32 2147483647, %v3925
      %vm4539 = vcmp.eq.f32.partialorder %v4538, 8.507059e+37
      %v4540 = vand.u32 %v3925, 2147483648
      %v4541 = vor.u32 1.1754944e-38, %v4540
      %v4542 = vsel %vm4539, %v4541, %v4537
      %v4543 = vmul.f32 1.0, %v4542
      %v4544 = vrcp.pop %v3926
      %v4545 = vmul.f32 %v3926, %v4544
      %v4546 = vsub.f32 1.0, %v4545
      %v4547 = vmul.f32 %v4544, %v4546
      %v4548 = vadd.f32 %v4544, %v4547
      %vm4549 = vweird.f32 %v3926
      %vm4550 = vweird.f32 %v4544
      %vm4551 = vmor %vm4549, %vm4550
      %v4552 = vsel %vm4551, %v4544, %v4548
      %v4553 = vand.u32 2147483647, %v3926
      %vm4554 = vcmp.eq.f32.partialorder %v4553, 8.507059e+37
      %v4555 = vand.u32 %v3926, 2147483648
      %v4556 = vor.u32 1.1754944e-38, %v4555
      %v4557 = vsel %vm4554, %v4556, %v4552
      %v4558 = vmul.f32 1.0, %v4557
      %v4559 = vrcp.pop %v3927
      %v4560 = vmul.f32 %v3927, %v4559
      %v4561 = vsub.f32 1.0, %v4560
      %v4562 = vmul.f32 %v4559, %v4561
      %v4563 = vadd.f32 %v4559, %v4562
      %vm4564 = vweird.f32 %v3927
      %vm4565 = vweird.f32 %v4559
      %vm4566 = vmor %vm4564, %vm4565
      %v4567 = vsel %vm4566, %v4559, %v4563
      %v4568 = vand.u32 2147483647, %v3927
      %vm4569 = vcmp.eq.f32.partialorder %v4568, 8.507059e+37
      %v4570 = vand.u32 %v3927, 2147483648
      %v4571 = vor.u32 1.1754944e-38, %v4570
      %v4572 = vsel %vm4569, %v4571, %v4567
      %v4573 = vmul.f32 1.0, %v4572
      %v4574 = vrcp.pop %v3928
      %v4575 = vmul.f32 %v3928, %v4574
      %v4576 = vsub.f32 1.0, %v4575
      %v4577 = vmul.f32 %v4574, %v4576
      %v4578 = vadd.f32 %v4574, %v4577
      %vm4579 = vweird.f32 %v3928
      %vm4580 = vweird.f32 %v4574
      %vm4581 = vmor %vm4579, %vm4580
      %v4582 = vsel %vm4581, %v4574, %v4578
      %v4583 = vand.u32 2147483647, %v3928
      %vm4584 = vcmp.eq.f32.partialorder %v4583, 8.507059e+37
      %v4585 = vand.u32 %v3928, 2147483648
      %v4586 = vor.u32 1.1754944e-38, %v4585
      %v4587 = vsel %vm4584, %v4586, %v4582
      %v4588 = vmul.f32 1.0, %v4587
      %v4589 = vrcp.pop %v3929
      %v4590 = vmul.f32 %v3929, %v4589
      %v4591 = vsub.f32 1.0, %v4590
      %v4592 = vmul.f32 %v4589, %v4591
      %v4593 = vadd.f32 %v4589, %v4592
      %vm4594 = vweird.f32 %v3929
      %vm4595 = vweird.f32 %v4589
      %vm4596 = vmor %vm4594, %vm4595
      %v4597 = vsel %vm4596, %v4589, %v4593
      %v4598 = vand.u32 2147483647, %v3929
      %vm4599 = vcmp.eq.f32.partialorder %v4598, 8.507059e+37
      %v4600 = vand.u32 %v3929, 2147483648
      %v4601 = vor.u32 1.1754944e-38, %v4600
      %v4602 = vsel %vm4599, %v4601, %v4597
      %v4603 = vmul.f32 1.0, %v4602
      %v4604 = vrcp.pop %v3930
      %v4605 = vmul.f32 %v3930, %v4604
      %v4606 = vsub.f32 1.0, %v4605
      %v4607 = vmul.f32 %v4604, %v4606
      %v4608 = vadd.f32 %v4604, %v4607
      %vm4609 = vweird.f32 %v3930
      %vm4610 = vweird.f32 %v4604
      %vm4611 = vmor %vm4609, %vm4610
      %v4612 = vsel %vm4611, %v4604, %v4608
      %v4613 = vand.u32 2147483647, %v3930
      %vm4614 = vcmp.eq.f32.partialorder %v4613, 8.507059e+37
      %v4615 = vand.u32 %v3930, 2147483648
      %v4616 = vor.u32 1.1754944e-38, %v4615
      %v4617 = vsel %vm4614, %v4616, %v4612
      %v4618 = vmul.f32 1.0, %v4617
      %v4619 = vrcp.pop %v3931
      %v4620 = vmul.f32 %v3931, %v4619
      %v4621 = vsub.f32 1.0, %v4620
      %v4622 = vmul.f32 %v4619, %v4621
      %v4623 = vadd.f32 %v4619, %v4622
      %vm4624 = vweird.f32 %v3931
      %vm4625 = vweird.f32 %v4619
      %vm4626 = vmor %vm4624, %vm4625
      %v4627 = vsel %vm4626, %v4619, %v4623
      %v4628 = vand.u32 2147483647, %v3931
      %vm4629 = vcmp.eq.f32.partialorder %v4628, 8.507059e+37
      %v4630 = vand.u32 %v3931, 2147483648
      %v4631 = vor.u32 1.1754944e-38, %v4630
      %v4632 = vsel %vm4629, %v4631, %v4627
      %v4633 = vmul.f32 1.0, %v4632
      %v4634 = vrcp.pop %v3932
      %v4635 = vmul.f32 %v3932, %v4634
      %v4636 = vsub.f32 1.0, %v4635
      %v4637 = vmul.f32 %v4634, %v4636
      %v4638 = vadd.f32 %v4634, %v4637
      %vm4639 = vweird.f32 %v3932
      %vm4640 = vweird.f32 %v4634
      %vm4641 = vmor %vm4639, %vm4640
      %v4642 = vsel %vm4641, %v4634, %v4638
      %v4643 = vand.u32 2147483647, %v3932
      %vm4644 = vcmp.eq.f32.partialorder %v4643, 8.507059e+37
      %v4645 = vand.u32 %v3932, 2147483648
      %v4646 = vor.u32 1.1754944e-38, %v4645
      %v4647 = vsel %vm4644, %v4646, %v4642
      %v4648 = vmul.f32 1.0, %v4647
      %v4649 = vrcp.pop %v3933
      %v4650 = vmul.f32 %v3933, %v4649
      %v4651 = vsub.f32 1.0, %v4650
      %v4652 = vmul.f32 %v4649, %v4651
      %v4653 = vadd.f32 %v4649, %v4652
      %vm4654 = vweird.f32 %v3933
      %vm4655 = vweird.f32 %v4649
      %vm4656 = vmor %vm4654, %vm4655
      %v4657 = vsel %vm4656, %v4649, %v4653
      %v4658 = vand.u32 2147483647, %v3933
      %vm4659 = vcmp.eq.f32.partialorder %v4658, 8.507059e+37
      %v4660 = vand.u32 %v3933, 2147483648
      %v4661 = vor.u32 1.1754944e-38, %v4660
      %v4662 = vsel %vm4659, %v4661, %v4657
      %v4663 = vmul.f32 1.0, %v4662
      %v4664 = vrcp.pop %v3934
      %v4665 = vmul.f32 %v3934, %v4664
      %v4666 = vsub.f32 1.0, %v4665
      %v4667 = vmul.f32 %v4664, %v4666
      %v4668 = vadd.f32 %v4664, %v4667
      %vm4669 = vweird.f32 %v3934
      %vm4670 = vweird.f32 %v4664
      %vm4671 = vmor %vm4669, %vm4670
      %v4672 = vsel %vm4671, %v4664, %v4668
      %v4673 = vand.u32 2147483647, %v3934
      %vm4674 = vcmp.eq.f32.partialorder %v4673, 8.507059e+37
      %v4675 = vand.u32 %v3934, 2147483648
      %v4676 = vor.u32 1.1754944e-38, %v4675
      %v4677 = vsel %vm4674, %v4676, %v4672
      %v4678 = vmul.f32 1.0, %v4677
      %v4679 = vrcp.pop %v3935
      %v4680 = vmul.f32 %v3935, %v4679
      %v4681 = vsub.f32 1.0, %v4680
      %v4682 = vmul.f32 %v4679, %v4681
      %v4683 = vadd.f32 %v4679, %v4682
      %vm4684 = vweird.f32 %v3935
      %vm4685 = vweird.f32 %v4679
      %vm4686 = vmor %vm4684, %vm4685
      %v4687 = vsel %vm4686, %v4679, %v4683
      %v4688 = vand.u32 2147483647, %v3935
      %vm4689 = vcmp.eq.f32.partialorder %v4688, 8.507059e+37
      %v4690 = vand.u32 %v3935, 2147483648
      %v4691 = vor.u32 1.1754944e-38, %v4690
      %v4692 = vsel %vm4689, %v4691, %v4687
      %v4693 = vmul.f32 1.0, %v4692
      %v4694 = vrcp.pop %v3936
      %v4695 = vmul.f32 %v3936, %v4694
      %v4696 = vsub.f32 1.0, %v4695
      %v4697 = vmul.f32 %v4694, %v4696
      %v4698 = vadd.f32 %v4694, %v4697
      %vm4699 = vweird.f32 %v3936
      %vm4700 = vweird.f32 %v4694
      %vm4701 = vmor %vm4699, %vm4700
      %v4702 = vsel %vm4701, %v4694, %v4698
      %v4703 = vand.u32 2147483647, %v3936
      %vm4704 = vcmp.eq.f32.partialorder %v4703, 8.507059e+37
      %v4705 = vand.u32 %v3936, 2147483648
      %v4706 = vor.u32 1.1754944e-38, %v4705
      %v4707 = vsel %vm4704, %v4706, %v4702
      %v4708 = vmul.f32 1.0, %v4707
      %v4709 = vrcp.pop %v3937
      %v4710 = vmul.f32 %v3937, %v4709
      %v4711 = vsub.f32 1.0, %v4710
      %v4712 = vmul.f32 %v4709, %v4711
      %v4713 = vadd.f32 %v4709, %v4712
      %vm4714 = vweird.f32 %v3937
      %vm4715 = vweird.f32 %v4709
      %vm4716 = vmor %vm4714, %vm4715
      %v4717 = vsel %vm4716, %v4709, %v4713
      %v4718 = vand.u32 2147483647, %v3937
      %vm4719 = vcmp.eq.f32.partialorder %v4718, 8.507059e+37
      %v4720 = vand.u32 %v3937, 2147483648
      %v4721 = vor.u32 1.1754944e-38, %v4720
      %v4722 = vsel %vm4719, %v4721, %v4717
      %v4723 = vmul.f32 1.0, %v4722
      %v4724 = vrcp.pop %v3938
      %v4725 = vmul.f32 %v3938, %v4724
      %v4726 = vsub.f32 1.0, %v4725
      %v4727 = vmul.f32 %v4724, %v4726
      %v4728 = vadd.f32 %v4724, %v4727
      %vm4729 = vweird.f32 %v3938
      %vm4730 = vweird.f32 %v4724
      %vm4731 = vmor %vm4729, %vm4730
      %v4732 = vsel %vm4731, %v4724, %v4728
      %v4733 = vand.u32 2147483647, %v3938
      %vm4734 = vcmp.eq.f32.partialorder %v4733, 8.507059e+37
      %v4735 = vand.u32 %v3938, 2147483648
      %v4736 = vor.u32 1.1754944e-38, %v4735
      %v4737 = vsel %vm4734, %v4736, %v4732
      %v4738 = vmul.f32 1.0, %v4737
      %v4739 = vrcp.pop %v3939
      %v4740 = vmul.f32 %v3939, %v4739
      %v4741 = vsub.f32 1.0, %v4740
      %v4742 = vmul.f32 %v4739, %v4741
      %v4743 = vadd.f32 %v4739, %v4742
      %vm4744 = vweird.f32 %v3939
      %vm4745 = vweird.f32 %v4739
      %vm4746 = vmor %vm4744, %vm4745
      %v4747 = vsel %vm4746, %v4739, %v4743
      %v4748 = vand.u32 2147483647, %v3939
      %vm4749 = vcmp.eq.f32.partialorder %v4748, 8.507059e+37
      %v4750 = vand.u32 %v3939, 2147483648
      %v4751 = vor.u32 1.1754944e-38, %v4750
      %v4752 = vsel %vm4749, %v4751, %v4747
      %v4753 = vmul.f32 1.0, %v4752
      %v4754 = vrcp.pop %v3940
      %v4755 = vmul.f32 %v3940, %v4754
      %v4756 = vsub.f32 1.0, %v4755
      %v4757 = vmul.f32 %v4754, %v4756
      %v4758 = vadd.f32 %v4754, %v4757
      %vm4759 = vweird.f32 %v3940
      %vm4760 = vweird.f32 %v4754
      %vm4761 = vmor %vm4759, %vm4760
      %v4762 = vsel %vm4761, %v4754, %v4758
      %v4763 = vand.u32 2147483647, %v3940
      %vm4764 = vcmp.eq.f32.partialorder %v4763, 8.507059e+37
      %v4765 = vand.u32 %v3940, 2147483648
      %v4766 = vor.u32 1.1754944e-38, %v4765
      %v4767 = vsel %vm4764, %v4766, %v4762
      %v4768 = vmul.f32 1.0, %v4767
      %v4769 = vrcp.pop %v3941
      %v4770 = vmul.f32 %v3941, %v4769
      %v4771 = vsub.f32 1.0, %v4770
      %v4772 = vmul.f32 %v4769, %v4771
      %v4773 = vadd.f32 %v4769, %v4772
      %vm4774 = vweird.f32 %v3941
      %vm4775 = vweird.f32 %v4769
      %vm4776 = vmor %vm4774, %vm4775
      %v4777 = vsel %vm4776, %v4769, %v4773
      %v4778 = vand.u32 2147483647, %v3941
      %vm4779 = vcmp.eq.f32.partialorder %v4778, 8.507059e+37
      %v4780 = vand.u32 %v3941, 2147483648
      %v4781 = vor.u32 1.1754944e-38, %v4780
      %v4782 = vsel %vm4779, %v4781, %v4777
      %v4783 = vmul.f32 1.0, %v4782
      %v4784 = vrcp.pop %v3942
      %v4785 = vmul.f32 %v3942, %v4784
      %v4786 = vsub.f32 1.0, %v4785
      %v4787 = vmul.f32 %v4784, %v4786
      %v4788 = vadd.f32 %v4784, %v4787
      %vm4789 = vweird.f32 %v3942
      %vm4790 = vweird.f32 %v4784
      %vm4791 = vmor %vm4789, %vm4790
      %v4792 = vsel %vm4791, %v4784, %v4788
      %v4793 = vand.u32 2147483647, %v3942
      %vm4794 = vcmp.eq.f32.partialorder %v4793, 8.507059e+37
      %v4795 = vand.u32 %v3942, 2147483648
      %v4796 = vor.u32 1.1754944e-38, %v4795
      %v4797 = vsel %vm4794, %v4796, %v4792
      %v4798 = vmul.f32 1.0, %v4797
      %v4799 = vrcp.pop %v3943
      %v4800 = vmul.f32 %v3943, %v4799
      %v4801 = vsub.f32 1.0, %v4800
      %v4802 = vmul.f32 %v4799, %v4801
      %v4803 = vadd.f32 %v4799, %v4802
      %vm4804 = vweird.f32 %v3943
      %vm4805 = vweird.f32 %v4799
      %vm4806 = vmor %vm4804, %vm4805
      %v4807 = vsel %vm4806, %v4799, %v4803
      %v4808 = vand.u32 2147483647, %v3943
      %vm4809 = vcmp.eq.f32.partialorder %v4808, 8.507059e+37
      %v4810 = vand.u32 %v3943, 2147483648
      %v4811 = vor.u32 1.1754944e-38, %v4810
      %v4812 = vsel %vm4809, %v4811, %v4807
      %v4813 = vmul.f32 1.0, %v4812
      %v4814 = vrcp.pop %v3944
      %v4815 = vmul.f32 %v3944, %v4814
      %v4816 = vsub.f32 1.0, %v4815
      %v4817 = vmul.f32 %v4814, %v4816
      %v4818 = vadd.f32 %v4814, %v4817
      %vm4819 = vweird.f32 %v3944
      %vm4820 = vweird.f32 %v4814
      %vm4821 = vmor %vm4819, %vm4820
      %v4822 = vsel %vm4821, %v4814, %v4818
      %v4823 = vand.u32 2147483647, %v3944
      %vm4824 = vcmp.eq.f32.partialorder %v4823, 8.507059e+37
      %v4825 = vand.u32 %v3944, 2147483648
      %v4826 = vor.u32 1.1754944e-38, %v4825
      %v4827 = vsel %vm4824, %v4826, %v4822
      %v4828 = vmul.f32 1.0, %v4827
      %v4829 = vrcp.pop %v3945
      %v4830 = vmul.f32 %v3945, %v4829
      %v4831 = vsub.f32 1.0, %v4830
      %v4832 = vmul.f32 %v4829, %v4831
      %v4833 = vadd.f32 %v4829, %v4832
      %vm4834 = vweird.f32 %v3945
      %vm4835 = vweird.f32 %v4829
      %vm4836 = vmor %vm4834, %vm4835
      %v4837 = vsel %vm4836, %v4829, %v4833
      %v4838 = vand.u32 2147483647, %v3945
      %vm4839 = vcmp.eq.f32.partialorder %v4838, 8.507059e+37
      %v4840 = vand.u32 %v3945, 2147483648
      %v4841 = vor.u32 1.1754944e-38, %v4840
      %v4842 = vsel %vm4839, %v4841, %v4837
      %v4843 = vmul.f32 1.0, %v4842
      %v4844 = vrcp.pop %v3946
      %v4845 = vmul.f32 %v3946, %v4844
      %v4846 = vsub.f32 1.0, %v4845
      %v4847 = vmul.f32 %v4844, %v4846
      %v4848 = vadd.f32 %v4844, %v4847
      %vm4849 = vweird.f32 %v3946
      %vm4850 = vweird.f32 %v4844
      %vm4851 = vmor %vm4849, %vm4850
      %v4852 = vsel %vm4851, %v4844, %v4848
      %v4853 = vand.u32 2147483647, %v3946
      %vm4854 = vcmp.eq.f32.partialorder %v4853, 8.507059e+37
      %v4855 = vand.u32 %v3946, 2147483648
      %v4856 = vor.u32 1.1754944e-38, %v4855
      %v4857 = vsel %vm4854, %v4856, %v4852
      %v4858 = vmul.f32 1.0, %v4857
      %v4859 = vrcp.pop %v3947
      %v4860 = vmul.f32 %v3947, %v4859
      %v4861 = vsub.f32 1.0, %v4860
      %v4862 = vmul.f32 %v4859, %v4861
      %v4863 = vadd.f32 %v4859, %v4862
      %vm4864 = vweird.f32 %v3947
      %vm4865 = vweird.f32 %v4859
      %vm4866 = vmor %vm4864, %vm4865
      %v4867 = vsel %vm4866, %v4859, %v4863
      %v4868 = vand.u32 2147483647, %v3947
      %vm4869 = vcmp.eq.f32.partialorder %v4868, 8.507059e+37
      %v4870 = vand.u32 %v3947, 2147483648
      %v4871 = vor.u32 1.1754944e-38, %v4870
      %v4872 = vsel %vm4869, %v4871, %v4867
      %v4873 = vmul.f32 1.0, %v4872
      %v4874 = vrcp.pop %v3948
      %v4875 = vmul.f32 %v3948, %v4874
      %v4876 = vsub.f32 1.0, %v4875
      %v4877 = vmul.f32 %v4874, %v4876
      %v4878 = vadd.f32 %v4874, %v4877
      %vm4879 = vweird.f32 %v3948
      %vm4880 = vweird.f32 %v4874
      %vm4881 = vmor %vm4879, %vm4880
      %v4882 = vsel %vm4881, %v4874, %v4878
      %v4883 = vand.u32 2147483647, %v3948
      %vm4884 = vcmp.eq.f32.partialorder %v4883, 8.507059e+37
      %v4885 = vand.u32 %v3948, 2147483648
      %v4886 = vor.u32 1.1754944e-38, %v4885
      %v4887 = vsel %vm4884, %v4886, %v4882
      %v4888 = vmul.f32 1.0, %v4887
      %v4889 = vrcp.pop %v3949
      %v4890 = vmul.f32 %v3949, %v4889
      %v4891 = vsub.f32 1.0, %v4890
      %v4892 = vmul.f32 %v4889, %v4891
      %v4893 = vadd.f32 %v4889, %v4892
      %vm4894 = vweird.f32 %v3949
      %vm4895 = vweird.f32 %v4889
      %vm4896 = vmor %vm4894, %vm4895
      %v4897 = vsel %vm4896, %v4889, %v4893
      %v4898 = vand.u32 2147483647, %v3949
      %vm4899 = vcmp.eq.f32.partialorder %v4898, 8.507059e+37
      %v4900 = vand.u32 %v3949, 2147483648
      %v4901 = vor.u32 1.1754944e-38, %v4900
      %v4902 = vsel %vm4899, %v4901, %v4897
      %v4903 = vmul.f32 1.0, %v4902
      %v4904 = vrcp.pop %v3950
      %v4905 = vmul.f32 %v3950, %v4904
      %v4906 = vsub.f32 1.0, %v4905
      %v4907 = vmul.f32 %v4904, %v4906
      %v4908 = vadd.f32 %v4904, %v4907
      %vm4909 = vweird.f32 %v3950
      %vm4910 = vweird.f32 %v4904
      %vm4911 = vmor %vm4909, %vm4910
      %v4912 = vsel %vm4911, %v4904, %v4908
      %v4913 = vand.u32 2147483647, %v3950
      %vm4914 = vcmp.eq.f32.partialorder %v4913, 8.507059e+37
      %v4915 = vand.u32 %v3950, 2147483648
      %v4916 = vor.u32 1.1754944e-38, %v4915
      %v4917 = vsel %vm4914, %v4916, %v4912
      %v4918 = vmul.f32 1.0, %v4917
      %v4919 = vrcp.pop %v3951
      %v4920 = vmul.f32 %v3951, %v4919
      %v4921 = vsub.f32 1.0, %v4920
      %v4922 = vmul.f32 %v4919, %v4921
      %v4923 = vadd.f32 %v4919, %v4922
      %vm4924 = vweird.f32 %v3951
      %vm4925 = vweird.f32 %v4919
      %vm4926 = vmor %vm4924, %vm4925
      %v4927 = vsel %vm4926, %v4919, %v4923
      %v4928 = vand.u32 2147483647, %v3951
      %vm4929 = vcmp.eq.f32.partialorder %v4928, 8.507059e+37
      %v4930 = vand.u32 %v3951, 2147483648
      %v4931 = vor.u32 1.1754944e-38, %v4930
      %v4932 = vsel %vm4929, %v4931, %v4927
      %v4933 = vmul.f32 1.0, %v4932
      %v4934 = vrcp.pop %v3952
      %v4935 = vmul.f32 %v3952, %v4934
      %v4936 = vsub.f32 1.0, %v4935
      %v4937 = vmul.f32 %v4934, %v4936
      %v4938 = vadd.f32 %v4934, %v4937
      %vm4939 = vweird.f32 %v3952
      %vm4940 = vweird.f32 %v4934
      %vm4941 = vmor %vm4939, %vm4940
      %v4942 = vsel %vm4941, %v4934, %v4938
      %v4943 = vand.u32 2147483647, %v3952
      %vm4944 = vcmp.eq.f32.partialorder %v4943, 8.507059e+37
      %v4945 = vand.u32 %v3952, 2147483648
      %v4946 = vor.u32 1.1754944e-38, %v4945
      %v4947 = vsel %vm4944, %v4946, %v4942
      %v4948 = vmul.f32 1.0, %v4947
      %v4949 = vrcp.pop %v3953
      %v4950 = vmul.f32 %v3953, %v4949
      %v4951 = vsub.f32 1.0, %v4950
      %v4952 = vmul.f32 %v4949, %v4951
      %v4953 = vadd.f32 %v4949, %v4952
      %vm4954 = vweird.f32 %v3953
      %vm4955 = vweird.f32 %v4949
      %vm4956 = vmor %vm4954, %vm4955
      %v4957 = vsel %vm4956, %v4949, %v4953
      %v4958 = vand.u32 2147483647, %v3953
      %vm4959 = vcmp.eq.f32.partialorder %v4958, 8.507059e+37
      %v4960 = vand.u32 %v3953, 2147483648
      %v4961 = vor.u32 1.1754944e-38, %v4960
      %v4962 = vsel %vm4959, %v4961, %v4957
      %v4963 = vmul.f32 1.0, %v4962
      %v4964 = vrcp.pop %v3954
      %v4965 = vmul.f32 %v3954, %v4964
      %v4966 = vsub.f32 1.0, %v4965
      %v4967 = vmul.f32 %v4964, %v4966
      %v4968 = vadd.f32 %v4964, %v4967
      %vm4969 = vweird.f32 %v3954
      %vm4970 = vweird.f32 %v4964
      %vm4971 = vmor %vm4969, %vm4970
      %v4972 = vsel %vm4971, %v4964, %v4968
      %v4973 = vand.u32 2147483647, %v3954
      %vm4974 = vcmp.eq.f32.partialorder %v4973, 8.507059e+37
      %v4975 = vand.u32 %v3954, 2147483648
      %v4976 = vor.u32 1.1754944e-38, %v4975
      %v4977 = vsel %vm4974, %v4976, %v4972
      %v4978 = vmul.f32 1.0, %v4977
      %v4979 = vrcp.pop %v3955
      %v4980 = vmul.f32 %v3955, %v4979
      %v4981 = vsub.f32 1.0, %v4980
      %v4982 = vmul.f32 %v4979, %v4981
      %v4983 = vadd.f32 %v4979, %v4982
      %vm4984 = vweird.f32 %v3955
      %vm4985 = vweird.f32 %v4979
      %vm4986 = vmor %vm4984, %vm4985
      %v4987 = vsel %vm4986, %v4979, %v4983
      %v4988 = vand.u32 2147483647, %v3955
      %vm4989 = vcmp.eq.f32.partialorder %v4988, 8.507059e+37
      %v4990 = vand.u32 %v3955, 2147483648
      %v4991 = vor.u32 1.1754944e-38, %v4990
      %v4992 = vsel %vm4989, %v4991, %v4987
      %v4993 = vmul.f32 1.0, %v4992
      %v4994 = vrcp.pop %v3956
      %v4995 = vmul.f32 %v3956, %v4994
      %v4996 = vsub.f32 1.0, %v4995
      %v4997 = vmul.f32 %v4994, %v4996
      %v4998 = vadd.f32 %v4994, %v4997
      %vm4999 = vweird.f32 %v3956
      %vm5000 = vweird.f32 %v4994
      %vm5001 = vmor %vm4999, %vm5000
      %v5002 = vsel %vm5001, %v4994, %v4998
      %v5003 = vand.u32 2147483647, %v3956
      %vm5004 = vcmp.eq.f32.partialorder %v5003, 8.507059e+37
      %v5005 = vand.u32 %v3956, 2147483648
      %v5006 = vor.u32 1.1754944e-38, %v5005
      %v5007 = vsel %vm5004, %v5006, %v5002
      %v5008 = vmul.f32 1.0, %v5007
      %v5009 = vrcp.pop %v3957
      %v5010 = vmul.f32 %v3957, %v5009
      %v5011 = vsub.f32 1.0, %v5010
      %v5012 = vmul.f32 %v5009, %v5011
      %v5013 = vadd.f32 %v5009, %v5012
      %vm5014 = vweird.f32 %v3957
      %vm5015 = vweird.f32 %v5009
      %vm5016 = vmor %vm5014, %vm5015
      %v5017 = vsel %vm5016, %v5009, %v5013
      %v5018 = vand.u32 2147483647, %v3957
      %vm5019 = vcmp.eq.f32.partialorder %v5018, 8.507059e+37
      %v5020 = vand.u32 %v3957, 2147483648
      %v5021 = vor.u32 1.1754944e-38, %v5020
      %v5022 = vsel %vm5019, %v5021, %v5017
      %v5023 = vmul.f32 1.0, %v5022
      %v5024 = vrcp.pop %v3958
      %v5025 = vmul.f32 %v3958, %v5024
      %v5026 = vsub.f32 1.0, %v5025
      %v5027 = vmul.f32 %v5024, %v5026
      %v5028 = vadd.f32 %v5024, %v5027
      %vm5029 = vweird.f32 %v3958
      %vm5030 = vweird.f32 %v5024
      %vm5031 = vmor %vm5029, %vm5030
      %v5032 = vsel %vm5031, %v5024, %v5028
      %v5033 = vand.u32 2147483647, %v3958
      %vm5034 = vcmp.eq.f32.partialorder %v5033, 8.507059e+37
      %v5035 = vand.u32 %v3958, 2147483648
      %v5036 = vor.u32 1.1754944e-38, %v5035
      %v5037 = vsel %vm5034, %v5036, %v5032
      %v5038 = vmul.f32 1.0, %v5037
      %v5039 = vrcp.pop %v3959
      %v5040 = vmul.f32 %v3959, %v5039
      %v5041 = vsub.f32 1.0, %v5040
      %v5042 = vmul.f32 %v5039, %v5041
      %v5043 = vadd.f32 %v5039, %v5042
      %vm5044 = vweird.f32 %v3959
      %vm5045 = vweird.f32 %v5039
      %vm5046 = vmor %vm5044, %vm5045
      %v5047 = vsel %vm5046, %v5039, %v5043
      %v5048 = vand.u32 2147483647, %v3959
      %vm5049 = vcmp.eq.f32.partialorder %v5048, 8.507059e+37
      %v5050 = vand.u32 %v3959, 2147483648
      %v5051 = vor.u32 1.1754944e-38, %v5050
      %v5052 = vsel %vm5049, %v5051, %v5047
      %v5053 = vmul.f32 1.0, %v5052
      %v5054 = vrcp.pop %v3960
      %v5055 = vmul.f32 %v3960, %v5054
      %v5056 = vsub.f32 1.0, %v5055
      %v5057 = vmul.f32 %v5054, %v5056
      %v5058 = vadd.f32 %v5054, %v5057
      %vm5059 = vweird.f32 %v3960
      %vm5060 = vweird.f32 %v5054
      %vm5061 = vmor %vm5059, %vm5060
      %v5062 = vsel %vm5061, %v5054, %v5058
      %v5063 = vand.u32 2147483647, %v3960
      %vm5064 = vcmp.eq.f32.partialorder %v5063, 8.507059e+37
      %v5065 = vand.u32 %v3960, 2147483648
      %v5066 = vor.u32 1.1754944e-38, %v5065
      %v5067 = vsel %vm5064, %v5066, %v5062
      %v5068 = vmul.f32 1.0, %v5067
      %v5069 = vrcp.pop %v3961
      %v5070 = vmul.f32 %v3961, %v5069
      %v5071 = vsub.f32 1.0, %v5070
      %v5072 = vmul.f32 %v5069, %v5071
      %v5073 = vadd.f32 %v5069, %v5072
      %vm5074 = vweird.f32 %v3961
      %vm5075 = vweird.f32 %v5069
      %vm5076 = vmor %vm5074, %vm5075
      %v5077 = vsel %vm5076, %v5069, %v5073
      %v5078 = vand.u32 2147483647, %v3961
      %vm5079 = vcmp.eq.f32.partialorder %v5078, 8.507059e+37
      %v5080 = vand.u32 %v3961, 2147483648
      %v5081 = vor.u32 1.1754944e-38, %v5080
      %v5082 = vsel %vm5079, %v5081, %v5077
      %v5083 = vmul.f32 1.0, %v5082
      %v5084 = vrcp.pop %v3962
      %v5085 = vmul.f32 %v3962, %v5084
      %v5086 = vsub.f32 1.0, %v5085
      %v5087 = vmul.f32 %v5084, %v5086
      %v5088 = vadd.f32 %v5084, %v5087
      %vm5089 = vweird.f32 %v3962
      %vm5090 = vweird.f32 %v5084
      %vm5091 = vmor %vm5089, %vm5090
      %v5092 = vsel %vm5091, %v5084, %v5088
      %v5093 = vand.u32 2147483647, %v3962
      %vm5094 = vcmp.eq.f32.partialorder %v5093, 8.507059e+37
      %v5095 = vand.u32 %v3962, 2147483648
      %v5096 = vor.u32 1.1754944e-38, %v5095
      %v5097 = vsel %vm5094, %v5096, %v5092
      %v5098 = vmul.f32 1.0, %v5097
      %v5099 = vrcp.pop %v3963
      %v5100 = vmul.f32 %v3963, %v5099
      %v5101 = vsub.f32 1.0, %v5100
      %v5102 = vmul.f32 %v5099, %v5101
      %v5103 = vadd.f32 %v5099, %v5102
      %vm5104 = vweird.f32 %v3963
      %vm5105 = vweird.f32 %v5099
      %vm5106 = vmor %vm5104, %vm5105
      %v5107 = vsel %vm5106, %v5099, %v5103
      %v5108 = vand.u32 2147483647, %v3963
      %vm5109 = vcmp.eq.f32.partialorder %v5108, 8.507059e+37
      %v5110 = vand.u32 %v3963, 2147483648
      %v5111 = vor.u32 1.1754944e-38, %v5110
      %v5112 = vsel %vm5109, %v5111, %v5107
      %v5113 = vmul.f32 1.0, %v5112
      %v5114 = vrcp.pop %v3964
      %v5115 = vmul.f32 %v3964, %v5114
      %v5116 = vsub.f32 1.0, %v5115
      %v5117 = vmul.f32 %v5114, %v5116
      %v5118 = vadd.f32 %v5114, %v5117
      %vm5119 = vweird.f32 %v3964
      %vm5120 = vweird.f32 %v5114
      %vm5121 = vmor %vm5119, %vm5120
      %v5122 = vsel %vm5121, %v5114, %v5118
      %v5123 = vand.u32 2147483647, %v3964
      %vm5124 = vcmp.eq.f32.partialorder %v5123, 8.507059e+37
      %v5125 = vand.u32 %v3964, 2147483648
      %v5126 = vor.u32 1.1754944e-38, %v5125
      %v5127 = vsel %vm5124, %v5126, %v5122
      %v5128 = vmul.f32 1.0, %v5127
      %v5129 = vrcp.pop %v3965
      %v5130 = vmul.f32 %v3965, %v5129
      %v5131 = vsub.f32 1.0, %v5130
      %v5132 = vmul.f32 %v5129, %v5131
      %v5133 = vadd.f32 %v5129, %v5132
      %vm5134 = vweird.f32 %v3965
      %vm5135 = vweird.f32 %v5129
      %vm5136 = vmor %vm5134, %vm5135
      %v5137 = vsel %vm5136, %v5129, %v5133
      %v5138 = vand.u32 2147483647, %v3965
      %vm5139 = vcmp.eq.f32.partialorder %v5138, 8.507059e+37
      %v5140 = vand.u32 %v3965, 2147483648
      %v5141 = vor.u32 1.1754944e-38, %v5140
      %v5142 = vsel %vm5139, %v5141, %v5137
      %v5143 = vmul.f32 1.0, %v5142
      %v5144 = vrcp.pop %v3966
      %v5145 = vmul.f32 %v3966, %v5144
      %v5146 = vsub.f32 1.0, %v5145
      %v5147 = vmul.f32 %v5144, %v5146
      %v5148 = vadd.f32 %v5144, %v5147
      %vm5149 = vweird.f32 %v3966
      %vm5150 = vweird.f32 %v5144
      %vm5151 = vmor %vm5149, %vm5150
      %v5152 = vsel %vm5151, %v5144, %v5148
      %v5153 = vand.u32 2147483647, %v3966
      %vm5154 = vcmp.eq.f32.partialorder %v5153, 8.507059e+37
      %v5155 = vand.u32 %v3966, 2147483648
      %v5156 = vor.u32 1.1754944e-38, %v5155
      %v5157 = vsel %vm5154, %v5156, %v5152
      %v5158 = vmul.f32 1.0, %v5157
      %v5159 = vrcp.pop %v3967
      %v5160 = vmul.f32 %v3967, %v5159
      %v5161 = vsub.f32 1.0, %v5160
      %v5162 = vmul.f32 %v5159, %v5161
      %v5163 = vadd.f32 %v5159, %v5162
      %vm5164 = vweird.f32 %v3967
      %vm5165 = vweird.f32 %v5159
      %vm5166 = vmor %vm5164, %vm5165
      %v5167 = vsel %vm5166, %v5159, %v5163
      %v5168 = vand.u32 2147483647, %v3967
      %vm5169 = vcmp.eq.f32.partialorder %v5168, 8.507059e+37
      %v5170 = vand.u32 %v3967, 2147483648
      %v5171 = vor.u32 1.1754944e-38, %v5170
      %v5172 = vsel %vm5169, %v5171, %v5167
      %v5173 = vmul.f32 1.0, %v5172
      %v5174 = vrcp.pop %v3968
      %v5175 = vmul.f32 %v3968, %v5174
      %v5176 = vsub.f32 1.0, %v5175
      %v5177 = vmul.f32 %v5174, %v5176
      %v5178 = vadd.f32 %v5174, %v5177
      %vm5179 = vweird.f32 %v3968
      %vm5180 = vweird.f32 %v5174
      %vm5181 = vmor %vm5179, %vm5180
      %v5182 = vsel %vm5181, %v5174, %v5178
      %v5183 = vand.u32 2147483647, %v3968
      %vm5184 = vcmp.eq.f32.partialorder %v5183, 8.507059e+37
      %v5185 = vand.u32 %v3968, 2147483648
      %v5186 = vor.u32 1.1754944e-38, %v5185
      %v5187 = vsel %vm5184, %v5186, %v5182
      %v5188 = vmul.f32 1.0, %v5187
      %v5189 = vrcp.pop %v3969
      %v5190 = vmul.f32 %v3969, %v5189
      %v5191 = vsub.f32 1.0, %v5190
      %v5192 = vmul.f32 %v5189, %v5191
      %v5193 = vadd.f32 %v5189, %v5192
      %vm5194 = vweird.f32 %v3969
      %vm5195 = vweird.f32 %v5189
      %vm5196 = vmor %vm5194, %vm5195
      %v5197 = vsel %vm5196, %v5189, %v5193
      %v5198 = vand.u32 2147483647, %v3969
      %vm5199 = vcmp.eq.f32.partialorder %v5198, 8.507059e+37
      %v5200 = vand.u32 %v3969, 2147483648
      %v5201 = vor.u32 1.1754944e-38, %v5200
      %v5202 = vsel %vm5199, %v5201, %v5197
      %v5203 = vmul.f32 1.0, %v5202
      %v5204 = vrcp.pop %v3970
      %v5205 = vmul.f32 %v3970, %v5204
      %v5206 = vsub.f32 1.0, %v5205
      %v5207 = vmul.f32 %v5204, %v5206
      %v5208 = vadd.f32 %v5204, %v5207
      %vm5209 = vweird.f32 %v3970
      %vm5210 = vweird.f32 %v5204
      %vm5211 = vmor %vm5209, %vm5210
      %v5212 = vsel %vm5211, %v5204, %v5208
      %v5213 = vand.u32 2147483647, %v3970
      %vm5214 = vcmp.eq.f32.partialorder %v5213, 8.507059e+37
      %v5215 = vand.u32 %v3970, 2147483648
      %v5216 = vor.u32 1.1754944e-38, %v5215
      %v5217 = vsel %vm5214, %v5216, %v5212
      %v5218 = vmul.f32 1.0, %v5217
      %v5219 = vrcp.pop %v3971
      %v5220 = vmul.f32 %v3971, %v5219
      %v5221 = vsub.f32 1.0, %v5220
      %v5222 = vmul.f32 %v5219, %v5221
      %v5223 = vadd.f32 %v5219, %v5222
      %vm5224 = vweird.f32 %v3971
      %vm5225 = vweird.f32 %v5219
      %vm5226 = vmor %vm5224, %vm5225
      %v5227 = vsel %vm5226, %v5219, %v5223
      %v5228 = vand.u32 2147483647, %v3971
      %vm5229 = vcmp.eq.f32.partialorder %v5228, 8.507059e+37
      %v5230 = vand.u32 %v3971, 2147483648
      %v5231 = vor.u32 1.1754944e-38, %v5230
      %v5232 = vsel %vm5229, %v5231, %v5227
      %v5233 = vmul.f32 1.0, %v5232
      %v5234 = vrcp.pop %v3972
      %v5235 = vmul.f32 %v3972, %v5234
      %v5236 = vsub.f32 1.0, %v5235
      %v5237 = vmul.f32 %v5234, %v5236
      %v5238 = vadd.f32 %v5234, %v5237
      %vm5239 = vweird.f32 %v3972
      %vm5240 = vweird.f32 %v5234
      %vm5241 = vmor %vm5239, %vm5240
      %v5242 = vsel %vm5241, %v5234, %v5238
      %v5243 = vand.u32 2147483647, %v3972
      %vm5244 = vcmp.eq.f32.partialorder %v5243, 8.507059e+37
      %v5245 = vand.u32 %v3972, 2147483648
      %v5246 = vor.u32 1.1754944e-38, %v5245
      %v5247 = vsel %vm5244, %v5246, %v5242
      %v5248 = vmul.f32 1.0, %v5247
      %v5249 = vrcp.pop %v3973
      %v5250 = vmul.f32 %v3973, %v5249
      %v5251 = vsub.f32 1.0, %v5250
      %v5252 = vmul.f32 %v5249, %v5251
      %v5253 = vadd.f32 %v5249, %v5252
      %vm5254 = vweird.f32 %v3973
      %vm5255 = vweird.f32 %v5249
      %vm5256 = vmor %vm5254, %vm5255
      %v5257 = vsel %vm5256, %v5249, %v5253
      %v5258 = vand.u32 2147483647, %v3973
      %vm5259 = vcmp.eq.f32.partialorder %v5258, 8.507059e+37
      %v5260 = vand.u32 %v3973, 2147483648
      %v5261 = vor.u32 1.1754944e-38, %v5260
      %v5262 = vsel %vm5259, %v5261, %v5257
      %v5263 = vmul.f32 1.0, %v5262
      %v5264 = vrcp.pop %v3974
      %v5265 = vmul.f32 %v3974, %v5264
      %v5266 = vsub.f32 1.0, %v5265
      %v5267 = vmul.f32 %v5264, %v5266
      %v5268 = vadd.f32 %v5264, %v5267
      %vm5269 = vweird.f32 %v3974
      %vm5270 = vweird.f32 %v5264
      %vm5271 = vmor %vm5269, %vm5270
      %v5272 = vsel %vm5271, %v5264, %v5268
      %v5273 = vand.u32 2147483647, %v3974
      %vm5274 = vcmp.eq.f32.partialorder %v5273, 8.507059e+37
      %v5275 = vand.u32 %v3974, 2147483648
      %v5276 = vor.u32 1.1754944e-38, %v5275
      %v5277 = vsel %vm5274, %v5276, %v5272
      %v5278 = vmul.f32 1.0, %v5277
      %v5279 = vrcp.pop %v3975
      %v5280 = vmul.f32 %v3975, %v5279
      %v5281 = vsub.f32 1.0, %v5280
      %v5282 = vmul.f32 %v5279, %v5281
      %v5283 = vadd.f32 %v5279, %v5282
      %vm5284 = vweird.f32 %v3975
      %vm5285 = vweird.f32 %v5279
      %vm5286 = vmor %vm5284, %vm5285
      %v5287 = vsel %vm5286, %v5279, %v5283
      %v5288 = vand.u32 2147483647, %v3975
      %vm5289 = vcmp.eq.f32.partialorder %v5288, 8.507059e+37
      %v5290 = vand.u32 %v3975, 2147483648
      %v5291 = vor.u32 1.1754944e-38, %v5290
      %v5292 = vsel %vm5289, %v5291, %v5287
      %v5293 = vmul.f32 1.0, %v5292
      %v5294 = vrcp.pop %v3976
      %v5295 = vmul.f32 %v3976, %v5294
      %v5296 = vsub.f32 1.0, %v5295
      %v5297 = vmul.f32 %v5294, %v5296
      %v5298 = vadd.f32 %v5294, %v5297
      %vm5299 = vweird.f32 %v3976
      %vm5300 = vweird.f32 %v5294
      %vm5301 = vmor %vm5299, %vm5300
      %v5302 = vsel %vm5301, %v5294, %v5298
      %v5303 = vand.u32 2147483647, %v3976
      %vm5304 = vcmp.eq.f32.partialorder %v5303, 8.507059e+37
      %v5305 = vand.u32 %v3976, 2147483648
      %v5306 = vor.u32 1.1754944e-38, %v5305
      %v5307 = vsel %vm5304, %v5306, %v5302
      %v5308 = vmul.f32 1.0, %v5307
      %v5309 = vrcp.pop %v3977
      %v5310 = vmul.f32 %v3977, %v5309
      %v5311 = vsub.f32 1.0, %v5310
      %v5312 = vmul.f32 %v5309, %v5311
      %v5313 = vadd.f32 %v5309, %v5312
      %vm5314 = vweird.f32 %v3977
      %vm5315 = vweird.f32 %v5309
      %vm5316 = vmor %vm5314, %vm5315
      %v5317 = vsel %vm5316, %v5309, %v5313
      %v5318 = vand.u32 2147483647, %v3977
      %vm5319 = vcmp.eq.f32.partialorder %v5318, 8.507059e+37
      %v5320 = vand.u32 %v3977, 2147483648
      %v5321 = vor.u32 1.1754944e-38, %v5320
      %v5322 = vsel %vm5319, %v5321, %v5317
      %v5323 = vmul.f32 1.0, %v5322
      %v5324 = vrcp.pop %v3978
      %v5325 = vmul.f32 %v3978, %v5324
      %v5326 = vsub.f32 1.0, %v5325
      %v5327 = vmul.f32 %v5324, %v5326
      %v5328 = vadd.f32 %v5324, %v5327
      %vm5329 = vweird.f32 %v3978
      %vm5330 = vweird.f32 %v5324
      %vm5331 = vmor %vm5329, %vm5330
      %v5332 = vsel %vm5331, %v5324, %v5328
      %v5333 = vand.u32 2147483647, %v3978
      %vm5334 = vcmp.eq.f32.partialorder %v5333, 8.507059e+37
      %v5335 = vand.u32 %v3978, 2147483648
      %v5336 = vor.u32 1.1754944e-38, %v5335
      %v5337 = vsel %vm5334, %v5336, %v5332
      %v5338 = vmul.f32 1.0, %v5337
      %v5339 = vrcp.pop %v3979
      %v5340 = vmul.f32 %v3979, %v5339
      %v5341 = vsub.f32 1.0, %v5340
      %v5342 = vmul.f32 %v5339, %v5341
      %v5343 = vadd.f32 %v5339, %v5342
      %vm5344 = vweird.f32 %v3979
      %vm5345 = vweird.f32 %v5339
      %vm5346 = vmor %vm5344, %vm5345
      %v5347 = vsel %vm5346, %v5339, %v5343
      %v5348 = vand.u32 2147483647, %v3979
      %vm5349 = vcmp.eq.f32.partialorder %v5348, 8.507059e+37
      %v5350 = vand.u32 %v3979, 2147483648
      %v5351 = vor.u32 1.1754944e-38, %v5350
      %v5352 = vsel %vm5349, %v5351, %v5347
      %v5353 = vmul.f32 1.0, %v5352
      %v5354 = vrcp.pop %v3980
      %v5355 = vmul.f32 %v3980, %v5354
      %v5356 = vsub.f32 1.0, %v5355
      %v5357 = vmul.f32 %v5354, %v5356
      %v5358 = vadd.f32 %v5354, %v5357
      %vm5359 = vweird.f32 %v3980
      %vm5360 = vweird.f32 %v5354
      %vm5361 = vmor %vm5359, %vm5360
      %v5362 = vsel %vm5361, %v5354, %v5358
      %v5363 = vand.u32 2147483647, %v3980
      %vm5364 = vcmp.eq.f32.partialorder %v5363, 8.507059e+37
      %v5365 = vand.u32 %v3980, 2147483648
      %v5366 = vor.u32 1.1754944e-38, %v5365
      %v5367 = vsel %vm5364, %v5366, %v5362
      %v5368 = vmul.f32 1.0, %v5367
      %v5369 = vrcp.pop %v3981
      %v5370 = vmul.f32 %v3981, %v5369
      %v5371 = vsub.f32 1.0, %v5370
      %v5372 = vmul.f32 %v5369, %v5371
      %v5373 = vadd.f32 %v5369, %v5372
      %vm5374 = vweird.f32 %v3981
      %vm5375 = vweird.f32 %v5369
      %vm5376 = vmor %vm5374, %vm5375
      %v5377 = vsel %vm5376, %v5369, %v5373
      %v5378 = vand.u32 2147483647, %v3981
      %vm5379 = vcmp.eq.f32.partialorder %v5378, 8.507059e+37
      %v5380 = vand.u32 %v3981, 2147483648
      %v5381 = vor.u32 1.1754944e-38, %v5380
      %v5382 = vsel %vm5379, %v5381, %v5377
      %v5383 = vmul.f32 1.0, %v5382
      %v5384 = vrcp.pop %v3982
      %v5385 = vmul.f32 %v3982, %v5384
      %v5386 = vsub.f32 1.0, %v5385
      %v5387 = vmul.f32 %v5384, %v5386
      %v5388 = vadd.f32 %v5384, %v5387
      %vm5389 = vweird.f32 %v3982
      %vm5390 = vweird.f32 %v5384
      %vm5391 = vmor %vm5389, %vm5390
      %v5392 = vsel %vm5391, %v5384, %v5388
      %v5393 = vand.u32 2147483647, %v3982
      %vm5394 = vcmp.eq.f32.partialorder %v5393, 8.507059e+37
      %v5395 = vand.u32 %v3982, 2147483648
      %v5396 = vor.u32 1.1754944e-38, %v5395
      %v5397 = vsel %vm5394, %v5396, %v5392
      %v5398 = vmul.f32 1.0, %v5397
      %v5399 = vrcp.pop %v3983
      %v5400 = vmul.f32 %v3983, %v5399
      %v5401 = vsub.f32 1.0, %v5400
      %v5402 = vmul.f32 %v5399, %v5401
      %v5403 = vadd.f32 %v5399, %v5402
      %vm5404 = vweird.f32 %v3983
      %vm5405 = vweird.f32 %v5399
      %vm5406 = vmor %vm5404, %vm5405
      %v5407 = vsel %vm5406, %v5399, %v5403
      %v5408 = vand.u32 2147483647, %v3983
      %vm5409 = vcmp.eq.f32.partialorder %v5408, 8.507059e+37
      %v5410 = vand.u32 %v3983, 2147483648
      %v5411 = vor.u32 1.1754944e-38, %v5410
      %v5412 = vsel %vm5409, %v5411, %v5407
      %v5413 = vmul.f32 1.0, %v5412
      %v5414 = vrcp.pop %v3984
      %v5415 = vmul.f32 %v3984, %v5414
      %v5416 = vsub.f32 1.0, %v5415
      %v5417 = vmul.f32 %v5414, %v5416
      %v5418 = vadd.f32 %v5414, %v5417
      %vm5419 = vweird.f32 %v3984
      %vm5420 = vweird.f32 %v5414
      %vm5421 = vmor %vm5419, %vm5420
      %v5422 = vsel %vm5421, %v5414, %v5418
      %v5423 = vand.u32 2147483647, %v3984
      %vm5424 = vcmp.eq.f32.partialorder %v5423, 8.507059e+37
      %v5425 = vand.u32 %v3984, 2147483648
      %v5426 = vor.u32 1.1754944e-38, %v5425
      %v5427 = vsel %vm5424, %v5426, %v5422
      %v5428 = vmul.f32 1.0, %v5427
      %v5429 = vrcp.pop %v3985
      %v5430 = vmul.f32 %v3985, %v5429
      %v5431 = vsub.f32 1.0, %v5430
      %v5432 = vmul.f32 %v5429, %v5431
      %v5433 = vadd.f32 %v5429, %v5432
      %vm5434 = vweird.f32 %v3985
      %vm5435 = vweird.f32 %v5429
      %vm5436 = vmor %vm5434, %vm5435
      %v5437 = vsel %vm5436, %v5429, %v5433
      %v5438 = vand.u32 2147483647, %v3985
      %vm5439 = vcmp.eq.f32.partialorder %v5438, 8.507059e+37
      %v5440 = vand.u32 %v3985, 2147483648
      %v5441 = vor.u32 1.1754944e-38, %v5440
      %v5442 = vsel %vm5439, %v5441, %v5437
      %v5443 = vmul.f32 1.0, %v5442
      %v5444 = vrcp.pop %v3986
      %v5445 = vmul.f32 %v3986, %v5444
      %v5446 = vsub.f32 1.0, %v5445
      %v5447 = vmul.f32 %v5444, %v5446
      %v5448 = vadd.f32 %v5444, %v5447
      %vm5449 = vweird.f32 %v3986
      %vm5450 = vweird.f32 %v5444
      %vm5451 = vmor %vm5449, %vm5450
      %v5452 = vsel %vm5451, %v5444, %v5448
      %v5453 = vand.u32 2147483647, %v3986
      %vm5454 = vcmp.eq.f32.partialorder %v5453, 8.507059e+37
      %v5455 = vand.u32 %v3986, 2147483648
      %v5456 = vor.u32 1.1754944e-38, %v5455
      %v5457 = vsel %vm5454, %v5456, %v5452
      %v5458 = vmul.f32 1.0, %v5457
      %v5459 = vrcp.pop %v3987
      %v5460 = vmul.f32 %v3987, %v5459
      %v5461 = vsub.f32 1.0, %v5460
      %v5462 = vmul.f32 %v5459, %v5461
      %v5463 = vadd.f32 %v5459, %v5462
      %vm5464 = vweird.f32 %v3987
      %vm5465 = vweird.f32 %v5459
      %vm5466 = vmor %vm5464, %vm5465
      %v5467 = vsel %vm5466, %v5459, %v5463
      %v5468 = vand.u32 2147483647, %v3987
      %vm5469 = vcmp.eq.f32.partialorder %v5468, 8.507059e+37
      %v5470 = vand.u32 %v3987, 2147483648
      %v5471 = vor.u32 1.1754944e-38, %v5470
      %v5472 = vsel %vm5469, %v5471, %v5467
      %v5473 = vmul.f32 1.0, %v5472
      %v5474 = vrcp.pop %v3988
      %v5475 = vmul.f32 %v3988, %v5474
      %v5476 = vsub.f32 1.0, %v5475
      %v5477 = vmul.f32 %v5474, %v5476
      %v5478 = vadd.f32 %v5474, %v5477
      %vm5479 = vweird.f32 %v3988
      %vm5480 = vweird.f32 %v5474
      %vm5481 = vmor %vm5479, %vm5480
      %v5482 = vsel %vm5481, %v5474, %v5478
      %v5483 = vand.u32 2147483647, %v3988
      %vm5484 = vcmp.eq.f32.partialorder %v5483, 8.507059e+37
      %v5485 = vand.u32 %v3988, 2147483648
      %v5486 = vor.u32 1.1754944e-38, %v5485
      %v5487 = vsel %vm5484, %v5486, %v5482
      %v5488 = vmul.f32 1.0, %v5487
      %v5489 = vrcp.pop %v3989
      %v5490 = vmul.f32 %v3989, %v5489
      %v5491 = vsub.f32 1.0, %v5490
      %v5492 = vmul.f32 %v5489, %v5491
      %v5493 = vadd.f32 %v5489, %v5492
      %vm5494 = vweird.f32 %v3989
      %vm5495 = vweird.f32 %v5489
      %vm5496 = vmor %vm5494, %vm5495
      %v5497 = vsel %vm5496, %v5489, %v5493
      %v5498 = vand.u32 2147483647, %v3989
      %vm5499 = vcmp.eq.f32.partialorder %v5498, 8.507059e+37
      %v5500 = vand.u32 %v3989, 2147483648
      %v5501 = vor.u32 1.1754944e-38, %v5500
      %v5502 = vsel %vm5499, %v5501, %v5497
      %v5503 = vmul.f32 1.0, %v5502
      %v5504 = vrcp.pop %v3990
      %v5505 = vmul.f32 %v3990, %v5504
      %v5506 = vsub.f32 1.0, %v5505
      %v5507 = vmul.f32 %v5504, %v5506
      %v5508 = vadd.f32 %v5504, %v5507
      %vm5509 = vweird.f32 %v3990
      %vm5510 = vweird.f32 %v5504
      %vm5511 = vmor %vm5509, %vm5510
      %v5512 = vsel %vm5511, %v5504, %v5508
      %v5513 = vand.u32 2147483647, %v3990
      %vm5514 = vcmp.eq.f32.partialorder %v5513, 8.507059e+37
      %v5515 = vand.u32 %v3990, 2147483648
      %v5516 = vor.u32 1.1754944e-38, %v5515
      %v5517 = vsel %vm5514, %v5516, %v5512
      %v5518 = vmul.f32 1.0, %v5517
      %v5519 = vrcp.pop %v3991
      %v5520 = vmul.f32 %v3991, %v5519
      %v5521 = vsub.f32 1.0, %v5520
      %v5522 = vmul.f32 %v5519, %v5521
      %v5523 = vadd.f32 %v5519, %v5522
      %vm5524 = vweird.f32 %v3991
      %vm5525 = vweird.f32 %v5519
      %vm5526 = vmor %vm5524, %vm5525
      %v5527 = vsel %vm5526, %v5519, %v5523
      %v5528 = vand.u32 2147483647, %v3991
      %vm5529 = vcmp.eq.f32.partialorder %v5528, 8.507059e+37
      %v5530 = vand.u32 %v3991, 2147483648
      %v5531 = vor.u32 1.1754944e-38, %v5530
      %v5532 = vsel %vm5529, %v5531, %v5527
      %v5533 = vmul.f32 1.0, %v5532
      %v5534 = vrcp.pop %v3992
      %v5535 = vmul.f32 %v3992, %v5534
      %v5536 = vsub.f32 1.0, %v5535
      %v5537 = vmul.f32 %v5534, %v5536
      %v5538 = vadd.f32 %v5534, %v5537
      %vm5539 = vweird.f32 %v3992
      %vm5540 = vweird.f32 %v5534
      %vm5541 = vmor %vm5539, %vm5540
      %v5542 = vsel %vm5541, %v5534, %v5538
      %v5543 = vand.u32 2147483647, %v3992
      %vm5544 = vcmp.eq.f32.partialorder %v5543, 8.507059e+37
      %v5545 = vand.u32 %v3992, 2147483648
      %v5546 = vor.u32 1.1754944e-38, %v5545
      %v5547 = vsel %vm5544, %v5546, %v5542
      %v5548 = vmul.f32 1.0, %v5547
      %v5549 = vrcp.pop %v3993
      %v5550 = vmul.f32 %v3993, %v5549
      %v5551 = vsub.f32 1.0, %v5550
      %v5552 = vmul.f32 %v5549, %v5551
      %v5553 = vadd.f32 %v5549, %v5552
      %vm5554 = vweird.f32 %v3993
      %vm5555 = vweird.f32 %v5549
      %vm5556 = vmor %vm5554, %vm5555
      %v5557 = vsel %vm5556, %v5549, %v5553
      %v5558 = vand.u32 2147483647, %v3993
      %vm5559 = vcmp.eq.f32.partialorder %v5558, 8.507059e+37
      %v5560 = vand.u32 %v3993, 2147483648
      %v5561 = vor.u32 1.1754944e-38, %v5560
      %v5562 = vsel %vm5559, %v5561, %v5557
      %v5563 = vmul.f32 1.0, %v5562
      %v5564 = vrcp.pop %v3994
      %v5565 = vmul.f32 %v3994, %v5564
      %v5566 = vsub.f32 1.0, %v5565
      %v5567 = vmul.f32 %v5564, %v5566
      %v5568 = vadd.f32 %v5564, %v5567
      %vm5569 = vweird.f32 %v3994
      %vm5570 = vweird.f32 %v5564
      %vm5571 = vmor %vm5569, %vm5570
      %v5572 = vsel %vm5571, %v5564, %v5568
      %v5573 = vand.u32 2147483647, %v3994
      %vm5574 = vcmp.eq.f32.partialorder %v5573, 8.507059e+37
      %v5575 = vand.u32 %v3994, 2147483648
      %v5576 = vor.u32 1.1754944e-38, %v5575
      %v5577 = vsel %vm5574, %v5576, %v5572
      %v5578 = vmul.f32 1.0, %v5577
      %v5579 = vrcp.pop %v3995
      %v5580 = vmul.f32 %v3995, %v5579
      %v5581 = vsub.f32 1.0, %v5580
      %v5582 = vmul.f32 %v5579, %v5581
      %v5583 = vadd.f32 %v5579, %v5582
      %vm5584 = vweird.f32 %v3995
      %vm5585 = vweird.f32 %v5579
      %vm5586 = vmor %vm5584, %vm5585
      %v5587 = vsel %vm5586, %v5579, %v5583
      %v5588 = vand.u32 2147483647, %v3995
      %vm5589 = vcmp.eq.f32.partialorder %v5588, 8.507059e+37
      %v5590 = vand.u32 %v3995, 2147483648
      %v5591 = vor.u32 1.1754944e-38, %v5590
      %v5592 = vsel %vm5589, %v5591, %v5587
      %v5593 = vmul.f32 1.0, %v5592
      %v5594 = vrcp.pop %v3996
      %v5595 = vmul.f32 %v3996, %v5594
      %v5596 = vsub.f32 1.0, %v5595
      %v5597 = vmul.f32 %v5594, %v5596
      %v5598 = vadd.f32 %v5594, %v5597
      %vm5599 = vweird.f32 %v3996
      %vm5600 = vweird.f32 %v5594
      %vm5601 = vmor %vm5599, %vm5600
      %v5602 = vsel %vm5601, %v5594, %v5598
      %v5603 = vand.u32 2147483647, %v3996
      %vm5604 = vcmp.eq.f32.partialorder %v5603, 8.507059e+37
      %v5605 = vand.u32 %v3996, 2147483648
      %v5606 = vor.u32 1.1754944e-38, %v5605
      %v5607 = vsel %vm5604, %v5606, %v5602
      %v5608 = vmul.f32 1.0, %v5607
      %v5609 = vrcp.pop %v3997
      %v5610 = vmul.f32 %v3997, %v5609
      %v5611 = vsub.f32 1.0, %v5610
      %v5612 = vmul.f32 %v5609, %v5611
      %v5613 = vadd.f32 %v5609, %v5612
      %vm5614 = vweird.f32 %v3997
      %vm5615 = vweird.f32 %v5609
      %vm5616 = vmor %vm5614, %vm5615
      %v5617 = vsel %vm5616, %v5609, %v5613
      %v5618 = vand.u32 2147483647, %v3997
      %vm5619 = vcmp.eq.f32.partialorder %v5618, 8.507059e+37
      %v5620 = vand.u32 %v3997, 2147483648
      %v5621 = vor.u32 1.1754944e-38, %v5620
      %v5622 = vsel %vm5619, %v5621, %v5617
      %v5623 = vmul.f32 1.0, %v5622
      %v5624 = vrcp.pop %v3998
      %v5625 = vmul.f32 %v3998, %v5624
      %v5626 = vsub.f32 1.0, %v5625
      %v5627 = vmul.f32 %v5624, %v5626
      %v5628 = vadd.f32 %v5624, %v5627
      %vm5629 = vweird.f32 %v3998
      %vm5630 = vweird.f32 %v5624
      %vm5631 = vmor %vm5629, %vm5630
      %v5632 = vsel %vm5631, %v5624, %v5628
      %v5633 = vand.u32 2147483647, %v3998
      %vm5634 = vcmp.eq.f32.partialorder %v5633, 8.507059e+37
      %v5635 = vand.u32 %v3998, 2147483648
      %v5636 = vor.u32 1.1754944e-38, %v5635
      %v5637 = vsel %vm5634, %v5636, %v5632
      %v5638 = vmul.f32 1.0, %v5637
      %v5639 = vrcp.pop %v3999
      %v5640 = vmul.f32 %v3999, %v5639
      %v5641 = vsub.f32 1.0, %v5640
      %v5642 = vmul.f32 %v5639, %v5641
      %v5643 = vadd.f32 %v5639, %v5642
      %vm5644 = vweird.f32 %v3999
      %vm5645 = vweird.f32 %v5639
      %vm5646 = vmor %vm5644, %vm5645
      %v5647 = vsel %vm5646, %v5639, %v5643
      %v5648 = vand.u32 2147483647, %v3999
      %vm5649 = vcmp.eq.f32.partialorder %v5648, 8.507059e+37
      %v5650 = vand.u32 %v3999, 2147483648
      %v5651 = vor.u32 1.1754944e-38, %v5650
      %v5652 = vsel %vm5649, %v5651, %v5647
      %v5653 = vmul.f32 1.0, %v5652
      %v5654 = vrcp.pop %v4000
      %v5655 = vmul.f32 %v4000, %v5654
      %v5656 = vsub.f32 1.0, %v5655
      %v5657 = vmul.f32 %v5654, %v5656
      %v5658 = vadd.f32 %v5654, %v5657
      %vm5659 = vweird.f32 %v4000
      %vm5660 = vweird.f32 %v5654
      %vm5661 = vmor %vm5659, %vm5660
      %v5662 = vsel %vm5661, %v5654, %v5658
      %v5663 = vand.u32 2147483647, %v4000
      %vm5664 = vcmp.eq.f32.partialorder %v5663, 8.507059e+37
      %v5665 = vand.u32 %v4000, 2147483648
      %v5666 = vor.u32 1.1754944e-38, %v5665
      %v5667 = vsel %vm5664, %v5666, %v5662
      %v5668 = vmul.f32 1.0, %v5667
      %v5669 = vrcp.pop %v4001
      %v5670 = vmul.f32 %v4001, %v5669
      %v5671 = vsub.f32 1.0, %v5670
      %v5672 = vmul.f32 %v5669, %v5671
      %v5673 = vadd.f32 %v5669, %v5672
      %vm5674 = vweird.f32 %v4001
      %vm5675 = vweird.f32 %v5669
      %vm5676 = vmor %vm5674, %vm5675
      %v5677 = vsel %vm5676, %v5669, %v5673
      %v5678 = vand.u32 2147483647, %v4001
      %vm5679 = vcmp.eq.f32.partialorder %v5678, 8.507059e+37
      %v5680 = vand.u32 %v4001, 2147483648
      %v5681 = vor.u32 1.1754944e-38, %v5680
      %v5682 = vsel %vm5679, %v5681, %v5677
      %v5683 = vmul.f32 1.0, %v5682
      %v5684 = vrcp.pop %v4002
      %v5685 = vmul.f32 %v4002, %v5684
      %v5686 = vsub.f32 1.0, %v5685
      %v5687 = vmul.f32 %v5684, %v5686
      %v5688 = vadd.f32 %v5684, %v5687
      %vm5689 = vweird.f32 %v4002
      %vm5690 = vweird.f32 %v5684
      %vm5691 = vmor %vm5689, %vm5690
      %v5692 = vsel %vm5691, %v5684, %v5688
      %v5693 = vand.u32 2147483647, %v4002
      %vm5694 = vcmp.eq.f32.partialorder %v5693, 8.507059e+37
      %v5695 = vand.u32 %v4002, 2147483648
      %v5696 = vor.u32 1.1754944e-38, %v5695
      %v5697 = vsel %vm5694, %v5696, %v5692
      %v5698 = vmul.f32 1.0, %v5697
      %v5699 = vrcp.pop %v4003
      %v5700 = vmul.f32 %v4003, %v5699
      %v5701 = vsub.f32 1.0, %v5700
      %v5702 = vmul.f32 %v5699, %v5701
      %v5703 = vadd.f32 %v5699, %v5702
      %vm5704 = vweird.f32 %v4003
      %vm5705 = vweird.f32 %v5699
      %vm5706 = vmor %vm5704, %vm5705
      %v5707 = vsel %vm5706, %v5699, %v5703
      %v5708 = vand.u32 2147483647, %v4003
      %vm5709 = vcmp.eq.f32.partialorder %v5708, 8.507059e+37
      %v5710 = vand.u32 %v4003, 2147483648
      %v5711 = vor.u32 1.1754944e-38, %v5710
      %v5712 = vsel %vm5709, %v5711, %v5707
      %v5713 = vmul.f32 1.0, %v5712
      %v5714 = vrcp.pop %v4004
      %v5715 = vmul.f32 %v4004, %v5714
      %v5716 = vsub.f32 1.0, %v5715
      %v5717 = vmul.f32 %v5714, %v5716
      %v5718 = vadd.f32 %v5714, %v5717
      %vm5719 = vweird.f32 %v4004
      %vm5720 = vweird.f32 %v5714
      %vm5721 = vmor %vm5719, %vm5720
      %v5722 = vsel %vm5721, %v5714, %v5718
      %v5723 = vand.u32 2147483647, %v4004
      %vm5724 = vcmp.eq.f32.partialorder %v5723, 8.507059e+37
      %v5725 = vand.u32 %v4004, 2147483648
      %v5726 = vor.u32 1.1754944e-38, %v5725
      %v5727 = vsel %vm5724, %v5726, %v5722
      %v5728 = vmul.f32 1.0, %v5727
      %v5729 = vrcp.pop %v4005
      %v5730 = vmul.f32 %v4005, %v5729
      %v5731 = vsub.f32 1.0, %v5730
      %v5732 = vmul.f32 %v5729, %v5731
      %v5733 = vadd.f32 %v5729, %v5732
      %vm5734 = vweird.f32 %v4005
      %vm5735 = vweird.f32 %v5729
      %vm5736 = vmor %vm5734, %vm5735
      %v5737 = vsel %vm5736, %v5729, %v5733
      %v5738 = vand.u32 2147483647, %v4005
      %vm5739 = vcmp.eq.f32.partialorder %v5738, 8.507059e+37
      %v5740 = vand.u32 %v4005, 2147483648
      %v5741 = vor.u32 1.1754944e-38, %v5740
      %v5742 = vsel %vm5739, %v5741, %v5737
      %v5743 = vmul.f32 1.0, %v5742
      %v5744 = vrcp.pop %v4006
      %v5745 = vmul.f32 %v4006, %v5744
      %v5746 = vsub.f32 1.0, %v5745
      %v5747 = vmul.f32 %v5744, %v5746
      %v5748 = vadd.f32 %v5744, %v5747
      %vm5749 = vweird.f32 %v4006
      %vm5750 = vweird.f32 %v5744
      %vm5751 = vmor %vm5749, %vm5750
      %v5752 = vsel %vm5751, %v5744, %v5748
      %v5753 = vand.u32 2147483647, %v4006
      %vm5754 = vcmp.eq.f32.partialorder %v5753, 8.507059e+37
      %v5755 = vand.u32 %v4006, 2147483648
      %v5756 = vor.u32 1.1754944e-38, %v5755
      %v5757 = vsel %vm5754, %v5756, %v5752
      %v5758 = vmul.f32 1.0, %v5757
      %v5759 = vrcp.pop %v4007
      %v5760 = vmul.f32 %v4007, %v5759
      %v5761 = vsub.f32 1.0, %v5760
      %v5762 = vmul.f32 %v5759, %v5761
      %v5763 = vadd.f32 %v5759, %v5762
      %vm5764 = vweird.f32 %v4007
      %vm5765 = vweird.f32 %v5759
      %vm5766 = vmor %vm5764, %vm5765
      %v5767 = vsel %vm5766, %v5759, %v5763
      %v5768 = vand.u32 2147483647, %v4007
      %vm5769 = vcmp.eq.f32.partialorder %v5768, 8.507059e+37
      %v5770 = vand.u32 %v4007, 2147483648
      %v5771 = vor.u32 1.1754944e-38, %v5770
      %v5772 = vsel %vm5769, %v5771, %v5767
      %v5773 = vmul.f32 1.0, %v5772
      %v5774 = vrcp.pop %v4008
      %v5775 = vmul.f32 %v4008, %v5774
      %v5776 = vsub.f32 1.0, %v5775
      %v5777 = vmul.f32 %v5774, %v5776
      %v5778 = vadd.f32 %v5774, %v5777
      %vm5779 = vweird.f32 %v4008
      %vm5780 = vweird.f32 %v5774
      %vm5781 = vmor %vm5779, %vm5780
      %v5782 = vsel %vm5781, %v5774, %v5778
      %v5783 = vand.u32 2147483647, %v4008
      %vm5784 = vcmp.eq.f32.partialorder %v5783, 8.507059e+37
      %v5785 = vand.u32 %v4008, 2147483648
      %v5786 = vor.u32 1.1754944e-38, %v5785
      %v5787 = vsel %vm5784, %v5786, %v5782
      %v5788 = vmul.f32 1.0, %v5787
      %v5789 = vrcp.pop %v4009
      %v5790 = vmul.f32 %v4009, %v5789
      %v5791 = vsub.f32 1.0, %v5790
      %v5792 = vmul.f32 %v5789, %v5791
      %v5793 = vadd.f32 %v5789, %v5792
      %vm5794 = vweird.f32 %v4009
      %vm5795 = vweird.f32 %v5789
      %vm5796 = vmor %vm5794, %vm5795
      %v5797 = vsel %vm5796, %v5789, %v5793
      %v5798 = vand.u32 2147483647, %v4009
      %vm5799 = vcmp.eq.f32.partialorder %v5798, 8.507059e+37
      %v5800 = vand.u32 %v4009, 2147483648
      %v5801 = vor.u32 1.1754944e-38, %v5800
      %v5802 = vsel %vm5799, %v5801, %v5797
      %v5803 = vmul.f32 1.0, %v5802
      %v5804 = vrcp.pop %v4010
      %v5805 = vmul.f32 %v4010, %v5804
      %v5806 = vsub.f32 1.0, %v5805
      %v5807 = vmul.f32 %v5804, %v5806
      %v5808 = vadd.f32 %v5804, %v5807
      %vm5809 = vweird.f32 %v4010
      %vm5810 = vweird.f32 %v5804
      %vm5811 = vmor %vm5809, %vm5810
      %v5812 = vsel %vm5811, %v5804, %v5808
      %v5813 = vand.u32 2147483647, %v4010
      %vm5814 = vcmp.eq.f32.partialorder %v5813, 8.507059e+37
      %v5815 = vand.u32 %v4010, 2147483648
      %v5816 = vor.u32 1.1754944e-38, %v5815
      %v5817 = vsel %vm5814, %v5816, %v5812
      %v5818 = vmul.f32 1.0, %v5817
      %v5819 = vrcp.pop %v4011
      %v5820 = vmul.f32 %v4011, %v5819
      %v5821 = vsub.f32 1.0, %v5820
      %v5822 = vmul.f32 %v5819, %v5821
      %v5823 = vadd.f32 %v5819, %v5822
      %vm5824 = vweird.f32 %v4011
      %vm5825 = vweird.f32 %v5819
      %vm5826 = vmor %vm5824, %vm5825
      %v5827 = vsel %vm5826, %v5819, %v5823
      %v5828 = vand.u32 2147483647, %v4011
      %vm5829 = vcmp.eq.f32.partialorder %v5828, 8.507059e+37
      %v5830 = vand.u32 %v4011, 2147483648
      %v5831 = vor.u32 1.1754944e-38, %v5830
      %v5832 = vsel %vm5829, %v5831, %v5827
      %v5833 = vmul.f32 1.0, %v5832
      %v5834 = vrcp.pop %v4012
      %v5835 = vmul.f32 %v4012, %v5834
      %v5836 = vsub.f32 1.0, %v5835
      %v5837 = vmul.f32 %v5834, %v5836
      %v5838 = vadd.f32 %v5834, %v5837
      %vm5839 = vweird.f32 %v4012
      %vm5840 = vweird.f32 %v5834
      %vm5841 = vmor %vm5839, %vm5840
      %v5842 = vsel %vm5841, %v5834, %v5838
      %v5843 = vand.u32 2147483647, %v4012
      %vm5844 = vcmp.eq.f32.partialorder %v5843, 8.507059e+37
      %v5845 = vand.u32 %v4012, 2147483648
      %v5846 = vor.u32 1.1754944e-38, %v5845
      %v5847 = vsel %vm5844, %v5846, %v5842
      %v5848 = vmul.f32 1.0, %v5847
      %v5849 = vrcp.pop %v4013
      %v5850 = vmul.f32 %v4013, %v5849
      %v5851 = vsub.f32 1.0, %v5850
      %v5852 = vmul.f32 %v5849, %v5851
      %v5853 = vadd.f32 %v5849, %v5852
      %vm5854 = vweird.f32 %v4013
      %vm5855 = vweird.f32 %v5849
      %vm5856 = vmor %vm5854, %vm5855
      %v5857 = vsel %vm5856, %v5849, %v5853
      %v5858 = vand.u32 2147483647, %v4013
      %vm5859 = vcmp.eq.f32.partialorder %v5858, 8.507059e+37
      %v5860 = vand.u32 %v4013, 2147483648
      %v5861 = vor.u32 1.1754944e-38, %v5860
      %v5862 = vsel %vm5859, %v5861, %v5857
      %v5863 = vmul.f32 1.0, %v5862
      %v5864 = vrcp.pop %v4014
      %v5865 = vmul.f32 %v4014, %v5864
      %v5866 = vsub.f32 1.0, %v5865
      %v5867 = vmul.f32 %v5864, %v5866
      %v5868 = vadd.f32 %v5864, %v5867
      %vm5869 = vweird.f32 %v4014
      %vm5870 = vweird.f32 %v5864
      %vm5871 = vmor %vm5869, %vm5870
      %v5872 = vsel %vm5871, %v5864, %v5868
      %v5873 = vand.u32 2147483647, %v4014
      %vm5874 = vcmp.eq.f32.partialorder %v5873, 8.507059e+37
      %v5875 = vand.u32 %v4014, 2147483648
      %v5876 = vor.u32 1.1754944e-38, %v5875
      %v5877 = vsel %vm5874, %v5876, %v5872
      %v5878 = vmul.f32 1.0, %v5877
      %v5879 = vrcp.pop %v4015
      %v5880 = vmul.f32 %v4015, %v5879
      %v5881 = vsub.f32 1.0, %v5880
      %v5882 = vmul.f32 %v5879, %v5881
      %v5883 = vadd.f32 %v5879, %v5882
      %vm5884 = vweird.f32 %v4015
      %vm5885 = vweird.f32 %v5879
      %vm5886 = vmor %vm5884, %vm5885
      %v5887 = vsel %vm5886, %v5879, %v5883
      %v5888 = vand.u32 2147483647, %v4015
      %vm5889 = vcmp.eq.f32.partialorder %v5888, 8.507059e+37
      %v5890 = vand.u32 %v4015, 2147483648
      %v5891 = vor.u32 1.1754944e-38, %v5890
      %v5892 = vsel %vm5889, %v5891, %v5887
      %v5893 = vmul.f32 1.0, %v5892
      %v5894 = vrcp.pop %v4016
      %v5895 = vmul.f32 %v4016, %v5894
      %v5896 = vsub.f32 1.0, %v5895
      %v5897 = vmul.f32 %v5894, %v5896
      %v5898 = vadd.f32 %v5894, %v5897
      %vm5899 = vweird.f32 %v4016
      %vm5900 = vweird.f32 %v5894
      %vm5901 = vmor %vm5899, %vm5900
      %v5902 = vsel %vm5901, %v5894, %v5898
      %v5903 = vand.u32 2147483647, %v4016
      %vm5904 = vcmp.eq.f32.partialorder %v5903, 8.507059e+37
      %v5905 = vand.u32 %v4016, 2147483648
      %v5906 = vor.u32 1.1754944e-38, %v5905
      %v5907 = vsel %vm5904, %v5906, %v5902
      %v5908 = vmul.f32 1.0, %v5907
      %v5909 = vrcp.pop %v4017
      %v5910 = vmul.f32 %v4017, %v5909
      %v5911 = vsub.f32 1.0, %v5910
      %v5912 = vmul.f32 %v5909, %v5911
      %v5913 = vadd.f32 %v5909, %v5912
      %vm5914 = vweird.f32 %v4017
      %vm5915 = vweird.f32 %v5909
      %vm5916 = vmor %vm5914, %vm5915
      %v5917 = vsel %vm5916, %v5909, %v5913
      %v5918 = vand.u32 2147483647, %v4017
      %vm5919 = vcmp.eq.f32.partialorder %v5918, 8.507059e+37
      %v5920 = vand.u32 %v4017, 2147483648
      %v5921 = vor.u32 1.1754944e-38, %v5920
      %v5922 = vsel %vm5919, %v5921, %v5917
      %v5923 = vmul.f32 1.0, %v5922
      %v5924 = vrcp.pop %v4018
      %v5925 = vmul.f32 %v4018, %v5924
      %v5926 = vsub.f32 1.0, %v5925
      %v5927 = vmul.f32 %v5924, %v5926
      %v5928 = vadd.f32 %v5924, %v5927
      %vm5929 = vweird.f32 %v4018
      %vm5930 = vweird.f32 %v5924
      %vm5931 = vmor %vm5929, %vm5930
      %v5932 = vsel %vm5931, %v5924, %v5928
      %v5933 = vand.u32 2147483647, %v4018
      %vm5934 = vcmp.eq.f32.partialorder %v5933, 8.507059e+37
      %v5935 = vand.u32 %v4018, 2147483648
      %v5936 = vor.u32 1.1754944e-38, %v5935
      %v5937 = vsel %vm5934, %v5936, %v5932
      %v5938 = vmul.f32 1.0, %v5937
      %vm5939 = vcmask 7168
      %5940 = vst.msk [vmem:[%s282] sm:$0xff] %vm5939, %v4033
      %5941 = vst.msk [vmem:[%s282 + $0x8] sm:$0xff] %vm5939, %v4048
      %5942 = vst.msk [vmem:[%s282 + $0x10] sm:$0xff] %vm5939, %v4063
      %5943 = vst.msk [vmem:[%s282 + $0x18] sm:$0xff] %vm5939, %v4078
      %5944 = vst.msk [vmem:[%s282 + $0x20] sm:$0xff] %vm5939, %v4093
      %5945 = vst.msk [vmem:[%s282 + $0x28] sm:$0xff] %vm5939, %v4108
      %5946 = vst.msk [vmem:[%s282 + $0x30] sm:$0xff] %vm5939, %v4123
      %5947 = vst.msk [vmem:[%s282 + $0x38] sm:$0xff] %vm5939, %v4138
      %5948 = vst.msk [vmem:[%s282 + $0x40] sm:$0xff] %vm5939, %v4153
      %5949 = vst.msk [vmem:[%s282 + $0x48] sm:$0xff] %vm5939, %v4168
      %5950 = vst.msk [vmem:[%s282 + $0x50] sm:$0xff] %vm5939, %v4183
      %5951 = vst.msk [vmem:[%s282 + $0x58] sm:$0xff] %vm5939, %v4198
      %5952 = vst.msk [vmem:[%s282 + $0x60] sm:$0xff] %vm5939, %v4213
      %5953 = vst.msk [vmem:[%s282 + $0x68] sm:$0xff] %vm5939, %v4228
      %5954 = vst.msk [vmem:[%s282 + $0x70] sm:$0xff] %vm5939, %v4243
      %5955 = vst.msk [vmem:[%s282 + $0x78] sm:$0xff] %vm5939, %v4258
      %5956 = vst.msk [vmem:[%s282 + $0x80] sm:$0xff] %vm5939, %v4273
      %5957 = vst.msk [vmem:[%s282 + $0x88] sm:$0xff] %vm5939, %v4288
      %5958 = vst.msk [vmem:[%s282 + $0x90] sm:$0xff] %vm5939, %v4303
      %5959 = vst.msk [vmem:[%s282 + $0x98] sm:$0xff] %vm5939, %v4318
      %5960 = vst.msk [vmem:[%s282 + $0xa0] sm:$0xff] %vm5939, %v4333
      %5961 = vst.msk [vmem:[%s282 + $0xa8] sm:$0xff] %vm5939, %v4348
      %5962 = vst.msk [vmem:[%s282 + $0xb0] sm:$0xff] %vm5939, %v4363
      %5963 = vst.msk [vmem:[%s282 + $0xb8] sm:$0xff] %vm5939, %v4378
      %5964 = vst.msk [vmem:[%s282 + $0xc0] sm:$0xff] %vm5939, %v4393
      %5965 = vst.msk [vmem:[%s282 + $0xc8] sm:$0xff] %vm5939, %v4408
      %5966 = vst.msk [vmem:[%s282 + $0xd0] sm:$0xff] %vm5939, %v4423
      %5967 = vst.msk [vmem:[%s282 + $0xd8] sm:$0xff] %vm5939, %v4438
      %5968 = vst.msk [vmem:[%s282 + $0xe0] sm:$0xff] %vm5939, %v4453
      %5969 = vst.msk [vmem:[%s282 + $0xe8] sm:$0xff] %vm5939, %v4468
      %5970 = vst.msk [vmem:[%s282 + $0xf0] sm:$0xff] %vm5939, %v4483
      %5971 = vst.msk [vmem:[%s282 + $0xf8] sm:$0xff] %vm5939, %v4498
      %5972 = vst.msk [vmem:[%s282 + $0x100] sm:$0xff] %vm5939, %v4513
      %5973 = vst.msk [vmem:[%s282 + $0x108] sm:$0xff] %vm5939, %v4528
      %5974 = vst.msk [vmem:[%s282 + $0x110] sm:$0xff] %vm5939, %v4543
      %5975 = vst.msk [vmem:[%s282 + $0x118] sm:$0xff] %vm5939, %v4558
      %5976 = vst.msk [vmem:[%s282 + $0x120] sm:$0xff] %vm5939, %v4573
      %5977 = vst.msk [vmem:[%s282 + $0x128] sm:$0xff] %vm5939, %v4588
      %5978 = vst.msk [vmem:[%s282 + $0x130] sm:$0xff] %vm5939, %v4603
      %5979 = vst.msk [vmem:[%s282 + $0x138] sm:$0xff] %vm5939, %v4618
      %5980 = vst.msk [vmem:[%s282 + $0x140] sm:$0xff] %vm5939, %v4633
      %5981 = vst.msk [vmem:[%s282 + $0x148] sm:$0xff] %vm5939, %v4648
      %5982 = vst.msk [vmem:[%s282 + $0x150] sm:$0xff] %vm5939, %v4663
      %5983 = vst.msk [vmem:[%s282 + $0x158] sm:$0xff] %vm5939, %v4678
      %5984 = vst.msk [vmem:[%s282 + $0x160] sm:$0xff] %vm5939, %v4693
      %5985 = vst.msk [vmem:[%s282 + $0x168] sm:$0xff] %vm5939, %v4708
      %5986 = vst.msk [vmem:[%s282 + $0x170] sm:$0xff] %vm5939, %v4723
      %5987 = vst.msk [vmem:[%s282 + $0x178] sm:$0xff] %vm5939, %v4738
      %5988 = vst.msk [vmem:[%s282 + $0x180] sm:$0xff] %vm5939, %v4753
      %5989 = vst.msk [vmem:[%s282 + $0x188] sm:$0xff] %vm5939, %v4768
      %5990 = vst.msk [vmem:[%s282 + $0x190] sm:$0xff] %vm5939, %v4783
      %5991 = vst.msk [vmem:[%s282 + $0x198] sm:$0xff] %vm5939, %v4798
      %5992 = vst.msk [vmem:[%s282 + $0x1a0] sm:$0xff] %vm5939, %v4813
      %5993 = vst.msk [vmem:[%s282 + $0x1a8] sm:$0xff] %vm5939, %v4828
      %5994 = vst.msk [vmem:[%s282 + $0x1b0] sm:$0xff] %vm5939, %v4843
      %5995 = vst.msk [vmem:[%s282 + $0x1b8] sm:$0xff] %vm5939, %v4858
      %5996 = vst.msk [vmem:[%s282 + $0x1c0] sm:$0xff] %vm5939, %v4873
      %5997 = vst.msk [vmem:[%s282 + $0x1c8] sm:$0xff] %vm5939, %v4888
      %5998 = vst.msk [vmem:[%s282 + $0x1d0] sm:$0xff] %vm5939, %v4903
      %5999 = vst.msk [vmem:[%s282 + $0x1d8] sm:$0xff] %vm5939, %v4918
      %6000 = vst.msk [vmem:[%s282 + $0x1e0] sm:$0xff] %vm5939, %v4933
      %6001 = vst.msk [vmem:[%s282 + $0x1e8] sm:$0xff] %vm5939, %v4948
      %6002 = vst.msk [vmem:[%s282 + $0x1f0] sm:$0xff] %vm5939, %v4963
      %6003 = vst.msk [vmem:[%s282 + $0x1f8] sm:$0xff] %vm5939, %v4978
      %6004 = vst.msk [vmem:[%s282 + $0x200] sm:$0xff] %vm5939, %v4993
      %6005 = vst.msk [vmem:[%s282 + $0x208] sm:$0xff] %vm5939, %v5008
      %6006 = vst.msk [vmem:[%s282 + $0x210] sm:$0xff] %vm5939, %v5023
      %6007 = vst.msk [vmem:[%s282 + $0x218] sm:$0xff] %vm5939, %v5038
      %6008 = vst.msk [vmem:[%s282 + $0x220] sm:$0xff] %vm5939, %v5053
      %6009 = vst.msk [vmem:[%s282 + $0x228] sm:$0xff] %vm5939, %v5068
      %6010 = vst.msk [vmem:[%s282 + $0x230] sm:$0xff] %vm5939, %v5083
      %6011 = vst.msk [vmem:[%s282 + $0x238] sm:$0xff] %vm5939, %v5098
      %6012 = vst.msk [vmem:[%s282 + $0x240] sm:$0xff] %vm5939, %v5113
      %6013 = vst.msk [vmem:[%s282 + $0x248] sm:$0xff] %vm5939, %v5128
      %6014 = vst.msk [vmem:[%s282 + $0x250] sm:$0xff] %vm5939, %v5143
      %6015 = vst.msk [vmem:[%s282 + $0x258] sm:$0xff] %vm5939, %v5158
      %6016 = vst.msk [vmem:[%s282 + $0x260] sm:$0xff] %vm5939, %v5173
      %6017 = vst.msk [vmem:[%s282 + $0x268] sm:$0xff] %vm5939, %v5188
      %6018 = vst.msk [vmem:[%s282 + $0x270] sm:$0xff] %vm5939, %v5203
      %6019 = vst.msk [vmem:[%s282 + $0x278] sm:$0xff] %vm5939, %v5218
      %6020 = vst.msk [vmem:[%s282 + $0x280] sm:$0xff] %vm5939, %v5233
      %6021 = vst.msk [vmem:[%s282 + $0x288] sm:$0xff] %vm5939, %v5248
      %6022 = vst.msk [vmem:[%s282 + $0x290] sm:$0xff] %vm5939, %v5263
      %6023 = vst.msk [vmem:[%s282 + $0x298] sm:$0xff] %vm5939, %v5278
      %6024 = vst.msk [vmem:[%s282 + $0x2a0] sm:$0xff] %vm5939, %v5293
      %6025 = vst.msk [vmem:[%s282 + $0x2a8] sm:$0xff] %vm5939, %v5308
      %6026 = vst.msk [vmem:[%s282 + $0x2b0] sm:$0xff] %vm5939, %v5323
      %6027 = vst.msk [vmem:[%s282 + $0x2b8] sm:$0xff] %vm5939, %v5338
      %6028 = vst.msk [vmem:[%s282 + $0x2c0] sm:$0xff] %vm5939, %v5353
      %6029 = vst.msk [vmem:[%s282 + $0x2c8] sm:$0xff] %vm5939, %v5368
      %6030 = vst.msk [vmem:[%s282 + $0x2d0] sm:$0xff] %vm5939, %v5383
      %6031 = vst.msk [vmem:[%s282 + $0x2d8] sm:$0xff] %vm5939, %v5398
      %6032 = vst.msk [vmem:[%s282 + $0x2e0] sm:$0xff] %vm5939, %v5413
      %6033 = vst.msk [vmem:[%s282 + $0x2e8] sm:$0xff] %vm5939, %v5428
      %6034 = vst.msk [vmem:[%s282 + $0x2f0] sm:$0xff] %vm5939, %v5443
      %6035 = vst.msk [vmem:[%s282 + $0x2f8] sm:$0xff] %vm5939, %v5458
      %6036 = vst.msk [vmem:[%s282 + $0x300] sm:$0xff] %vm5939, %v5473
      %6037 = vst.msk [vmem:[%s282 + $0x308] sm:$0xff] %vm5939, %v5488
      %6038 = vst.msk [vmem:[%s282 + $0x310] sm:$0xff] %vm5939, %v5503
      %6039 = vst.msk [vmem:[%s282 + $0x318] sm:$0xff] %vm5939, %v5518
      %6040 = vst.msk [vmem:[%s282 + $0x320] sm:$0xff] %vm5939, %v5533
      %6041 = vst.msk [vmem:[%s282 + $0x328] sm:$0xff] %vm5939, %v5548
      %6042 = vst.msk [vmem:[%s282 + $0x330] sm:$0xff] %vm5939, %v5563
      %6043 = vst.msk [vmem:[%s282 + $0x338] sm:$0xff] %vm5939, %v5578
      %6044 = vst.msk [vmem:[%s282 + $0x340] sm:$0xff] %vm5939, %v5593
      %6045 = vst.msk [vmem:[%s282 + $0x348] sm:$0xff] %vm5939, %v5608
      %6046 = vst.msk [vmem:[%s282 + $0x350] sm:$0xff] %vm5939, %v5623
      %6047 = vst.msk [vmem:[%s282 + $0x358] sm:$0xff] %vm5939, %v5638
      %6048 = vst.msk [vmem:[%s282 + $0x360] sm:$0xff] %vm5939, %v5653
      %6049 = vst.msk [vmem:[%s282 + $0x368] sm:$0xff] %vm5939, %v5668
      %6050 = vst.msk [vmem:[%s282 + $0x370] sm:$0xff] %vm5939, %v5683
      %6051 = vst.msk [vmem:[%s282 + $0x378] sm:$0xff] %vm5939, %v5698
      %6052 = vst.msk [vmem:[%s282 + $0x380] sm:$0xff] %vm5939, %v5713
      %6053 = vst.msk [vmem:[%s282 + $0x388] sm:$0xff] %vm5939, %v5728
      %6054 = vst.msk [vmem:[%s282 + $0x390] sm:$0xff] %vm5939, %v5743
      %6055 = vst.msk [vmem:[%s282 + $0x398] sm:$0xff] %vm5939, %v5758
      %6056 = vst.msk [vmem:[%s282 + $0x3a0] sm:$0xff] %vm5939, %v5773
      %6057 = vst.msk [vmem:[%s282 + $0x3a8] sm:$0xff] %vm5939, %v5788
      %6058 = vst.msk [vmem:[%s282 + $0x3b0] sm:$0xff] %vm5939, %v5803
      %6059 = vst.msk [vmem:[%s282 + $0x3b8] sm:$0xff] %vm5939, %v5818
      %6060 = vst.msk [vmem:[%s282 + $0x3c0] sm:$0xff] %vm5939, %v5833
      %6061 = vst.msk [vmem:[%s282 + $0x3c8] sm:$0xff] %vm5939, %v5848
      %6062 = vst.msk [vmem:[%s282 + $0x3d0] sm:$0xff] %vm5939, %v5863
      %6063 = vst.msk [vmem:[%s282 + $0x3d8] sm:$0xff] %vm5939, %v5878
      %6064 = vst.msk [vmem:[%s282 + $0x3e0] sm:$0xff] %vm5939, %v5893
      %6065 = vst.msk [vmem:[%s282 + $0x3e8] sm:$0xff] %vm5939, %v5908
      %6066 = vst.msk [vmem:[%s282 + $0x3f0] sm:$0xff] %vm5939, %v5923
      %6067 = vst.msk [vmem:[%s282 + $0x3f8] sm:$0xff] %vm5939, %v5938
      %s6068 = smul.u32 128, %s20
      %p6069 = scmp.lt.s32.totalorder %s6068, 255
      %s6070 = scalar_select %p6069, %s6068, 255
      %s6071 = smul.addr %s6070, 8
      %s6072 = scalar_lea.vmem %s7, %s6071
      // Predicated region
      $region49: #{affinity_mlp.1} parent=47 // pred_check
        %p6073 = pneg %p190
      $region50: #{affinity_mlp.1} parent=47 // pred_check_branch
        %6075 = sbr.rel (%p6073) target = $region52
      $region51: #{affinity_mlp.1} parent=47 // pred_region
        %s6076 = smul.u32 128, %s20
      $region52: #{affinity_mlp.1} parent=47 // pred_fallthru
        _
    $region48: #{affinity_mlp.1} parent=5 // pred_fallthru
      _
    %p6077 = scmp.le.s32.totalorder 2, %s15
    // Predicated region
    $region53: #{affinity_mlp.1} parent=5 // pred_check
      %p6078 = pneg %p6077
    $region54: #{affinity_mlp.1} parent=5 // pred_check_branch
      %6080 = sbr.rel (%p6078) target = $region56
    $region55: #{affinity_mlp.1} parent=5 // pred_region
      %s6081 = ssub.s32 %s15, 2
      // Predicated region
      $region57: #{affinity_mlp.1} parent=55 // pred_check
        %p6082 = pneg %p196
      $region58: #{affinity_mlp.1} parent=55 // pred_check_branch
        %6084 = sbr.rel (%p6082) target = $region60
      $region59: #{affinity_mlp.1} parent=55 // pred_region
        %s6085 = smul.u32 128, %s21
        %p6086 = scmp.lt.s32.totalorder %s6085, 255
        %s6087 = scalar_select %p6086, %s6085, 255
        %s6088 = smul.addr %s6087, 8
        %s6089 = scalar_lea.vmem %s7, %s6088
      $region60: #{affinity_mlp.1} parent=55 // pred_fallthru
        _
    $region56: #{affinity_mlp.1} parent=5 // pred_fallthru
      _
  $region6: #{affinity_mlp.1} parent=0 // loop_footer
    %s19 = sadd.s32 1, %s15
  $region7: #{affinity_mlp.1} parent=0 // loop_footer_branch
    %14 = sbr.rel target = $region3
  $region8: #{affinity_mlp.1} parent=0 // loop_exit
    _

</llo_original>
